<compile_context>
chip_gen: v7x
topology: tpu7x:2x2x1
jax: 0.10.0
libtpu: 0.0.40
codegen_flags: <defaults>
</compile_context>

<pallas_src>
import functools

import jax
import jax.numpy as jnp
from jax.experimental import pallas as pl
from jax.experimental.pallas import tpu as pltpu


# ----------------------------------------------------------------------------
# tile-size helpers
# ----------------------------------------------------------------------------
def _pick_tile(dim, preferred, step):
    """Largest multiple-of-`step` divisor of `dim` that is <= `preferred`.
    Falls back to the full extent (full-extent blocks are always legal)."""
    if dim <= preferred:
        return dim
    t = (preferred // step) * step
    while t >= step:
        if dim % t == 0:
            return t
        t -= step
    return dim


def _row_tile(m, preferred=256):    # sublane axis: multiples of 8
    return _pick_tile(m, preferred, 8)


def _lane_tile(n, preferred=512):   # lane axis: multiples of 128
    return _pick_tile(n, preferred, 128)


def _attn_bt_tile(bt_total, s_pad, d, budget=8 * 1024 * 1024):
    """Batch elements per attention grid step: sized from a VMEM budget
    (qkv + residual + out, bf16, double-buffered), while keeping >= 2 grid
    steps so the pipeline has something to overlap and v7x megacore can split
    the parallel axis."""
    per_b = s_pad * (3 * d + 2 * d) * 2 * 2
    cap = max(1, budget // max(per_b, 1))
    cap = min(cap, max(1, bt_total // 2))
    cap = min(cap, bt_total)
    t = int(cap)
    while t > 1 and bt_total % t != 0:
        t -= 1
    return max(t, 1)


# ----------------------------------------------------------------------------
# Pallas kernels: tiled linear (+ optional fused residual)
# ----------------------------------------------------------------------------
def _linear_kernel(x_ref, w_ref, b_ref, o_ref, acc_ref, *, nk):
    k = pl.program_id(2)

    @pl.when(k == 0)
    def _():
        acc_ref[...] = jnp.zeros_like(acc_ref)

    acc_ref[...] += jnp.dot(x_ref[...].astype(jnp.bfloat16), w_ref[...],
                            preferred_element_type=jnp.float32)

    @pl.when(k == nk - 1)
    def _():
        o_ref[...] = (acc_ref[...] + b_ref[...].astype(jnp.float32)).astype(o_ref.dtype)


def _linear_residual_kernel(x_ref, w_ref, b_ref, r_ref, o_ref, acc_ref, *, nk):
    k = pl.program_id(2)

    @pl.when(k == 0)
    def _():
        acc_ref[...] = jnp.zeros_like(acc_ref)

    acc_ref[...] += jnp.dot(x_ref[...].astype(jnp.bfloat16), w_ref[...],
                            preferred_element_type=jnp.float32)

    @pl.when(k == nk - 1)
    def _():
        out = (acc_ref[...] + b_ref[...].astype(jnp.float32)
               + r_ref[...].astype(jnp.float32))
        o_ref[...] = out.astype(o_ref.dtype)


def pallas_linear(x, w, b, residual=None, out_dtype=jnp.bfloat16,
                  tm_pref=256, tn_pref=512, tk_pref=512):
    """(..., K) @ (K, N) + b [+ residual].  bf16 MXU matmul, fp32 accumulation."""
    *lead, K = x.shape
    N = w.shape[1]
    x2 = x.reshape(-1, K)
    M = x2.shape[0]
    tm = _row_tile(M, tm_pref)
    tn = _lane_tile(N, tn_pref)
    tk = _lane_tile(K, tk_pref)
    nk = K // tk

    w_b = w.astype(jnp.bfloat16)
    b2 = b.reshape(1, N).astype(jnp.float32)
    grid = (M // tm, N // tn, nk)
    cp = pltpu.CompilerParams(
        dimension_semantics=("parallel", "parallel", "arbitrary"))

    if residual is None:
        kern = functools.partial(_linear_kernel, nk=nk)
        in_specs = [
            pl.BlockSpec((tm, tk), lambda i, j, k: (i, k)),
            pl.BlockSpec((tk, tn), lambda i, j, k: (k, j)),
            pl.BlockSpec((1, tn), lambda i, j, k: (0, j)),
        ]
        operands = (x2, w_b, b2)
    else:
        r2 = residual.reshape(-1, N)
        kern = functools.partial(_linear_residual_kernel, nk=nk)
        in_specs = [
            pl.BlockSpec((tm, tk), lambda i, j, k: (i, k)),
            pl.BlockSpec((tk, tn), lambda i, j, k: (k, j)),
            pl.BlockSpec((1, tn), lambda i, j, k: (0, j)),
            pl.BlockSpec((tm, tn), lambda i, j, k: (i, j)),
        ]
        operands = (x2, w_b, b2, r2)

    out = pl.pallas_call(
        kern,
        out_shape=jax.ShapeDtypeStruct((M, N), out_dtype),
        grid=grid,
        in_specs=in_specs,
        out_specs=pl.BlockSpec((tm, tn), lambda i, j, k: (i, j)),
        scratch_shapes=[pltpu.VMEM((tm, tn), jnp.float32)],
        compiler_params=cp,
    )(*operands)
    return out.reshape(*lead, N)


# ----------------------------------------------------------------------------
# Pallas kernels: fused LayerNorm -> matmul (+ optional GELU)
# ----------------------------------------------------------------------------
def _ln_linear_kernel(x_ref, g_ref, b_ref, w_ref, bias_ref, o_ref, y_ref,
                      *, eps, gelu):
    # Normalize (and downcast) the row tile once, reuse across all j tiles.
    @pl.when(pl.program_id(1) == 0)
    def _():
        x = x_ref[...].astype(jnp.float32)
        mu = jnp.mean(x, axis=-1, keepdims=True)
        var = jnp.mean(jnp.square(x - mu), axis=-1, keepdims=True)
        y = (x - mu) * jax.lax.rsqrt(var + eps)
        y = y * g_ref[...].astype(jnp.float32) + b_ref[...].astype(jnp.float32)
        y_ref[...] = y.astype(y_ref.dtype)

    acc = jnp.dot(y_ref[...], w_ref[...], preferred_element_type=jnp.float32)
    acc = acc + bias_ref[...].astype(jnp.float32)
    if gelu:
        # TODO(synk): timm nn.GELU is exact-erf GELU; tanh approximation used for
        #             Mosaic-safe lowering (~1e-3 relative difference).
        acc = jax.nn.gelu(acc, approximate=True)
    o_ref[...] = acc.astype(o_ref.dtype)


def pallas_ln_linear(x, g, b, w, bias, gelu=False, eps=1e-6,
                     out_dtype=jnp.bfloat16, tm_pref=256, tn_pref=512):
    """Fused LayerNorm (full-D per row) + matmul (+ optional GELU)."""
    *lead, D = x.shape
    N = w.shape[1]
    x2 = x.reshape(-1, D)
    M = x2.shape[0]
    tm = _row_tile(M, tm_pref)
    tn = _lane_tile(N, tn_pref)
    kern = functools.partial(_ln_linear_kernel, eps=eps, gelu=gelu)
    out = pl.pallas_call(
        kern,
        out_shape=jax.ShapeDtypeStruct((M, N), out_dtype),
        grid=(M // tm, N // tn),
        in_specs=[
            pl.BlockSpec((tm, D), lambda i, j: (i, 0)),
            pl.BlockSpec((1, D), lambda i, j: (0, 0)),
            pl.BlockSpec((1, D), lambda i, j: (0, 0)),
            pl.BlockSpec((D, tn), lambda i, j: (0, j)),
            pl.BlockSpec((1, tn), lambda i, j: (0, j)),
        ],
        out_specs=pl.BlockSpec((tm, tn), lambda i, j: (i, j)),
        scratch_shapes=[pltpu.VMEM((tm, D), jnp.bfloat16)],
        compiler_params=pltpu.CompilerParams(
            dimension_semantics=("parallel", "arbitrary")),
    )(x2, g.reshape(1, D).astype(jnp.float32), b.reshape(1, D).astype(jnp.float32),
      w.astype(jnp.bfloat16), bias.reshape(1, N).astype(jnp.float32))
    return out.reshape(*lead, N)


# ----------------------------------------------------------------------------
# Pallas kernels: plain LayerNorm
# ----------------------------------------------------------------------------
def _layernorm_kernel(x_ref, g_ref, b_ref, o_ref, *, eps):
    x = x_ref[...].astype(jnp.float32)
    mu = jnp.mean(x, axis=-1, keepdims=True)
    var = jnp.mean(jnp.square(x - mu), axis=-1, keepdims=True)
    y = (x - mu) * jax.lax.rsqrt(var + eps)
    o_ref[...] = (y * g_ref[...] + b_ref[...]).astype(o_ref.dtype)


def pallas_layernorm(x, g, b, eps=1e-6, out_dtype=jnp.bfloat16, tm_pref=512):
    *lead, D = x.shape
    x2 = x.reshape(-1, D)
    M = x2.shape[0]
    tm = _row_tile(M, tm_pref)
    out = pl.pallas_call(
        functools.partial(_layernorm_kernel, eps=eps),
        out_shape=jax.ShapeDtypeStruct((M, D), out_dtype),
        grid=(M // tm,),
        in_specs=[
            pl.BlockSpec((tm, D), lambda i: (i, 0)),
            pl.BlockSpec((1, D), lambda i: (0, 0)),
            pl.BlockSpec((1, D), lambda i: (0, 0)),
        ],
        out_specs=pl.BlockSpec((tm, D), lambda i: (i, 0)),
        compiler_params=pltpu.CompilerParams(dimension_semantics=("parallel",)),
    )(x2, g.reshape(1, D).astype(jnp.float32), b.reshape(1, D).astype(jnp.float32))
    return out.reshape(*lead, D)


# ----------------------------------------------------------------------------
# Pallas kernels: fused multi-head attention + output projection + residual
# ----------------------------------------------------------------------------
def _attn_proj_kernel(qkv_ref, res_ref, w_ref, pb_ref, o_ref, attn_ref,
                      *, heads, dh, s_valid, scale, bt):
    # qkv_ref: (bt, S_pad, 3D) bf16; res_ref: (bt, S_pad, D) bf16
    # w_ref: (D, D) bf16 proj weight; pb_ref: (1, D) fp32 proj bias
    # attn_ref: (S_pad, D) bf16 VMEM scratch (per-head outputs, no concat).
    D = heads * dh
    S_pad = qkv_ref.shape[1]
    if s_valid < S_pad:
        key_pos = jax.lax.broadcasted_iota(jnp.int32, (1, S_pad), 1)
        key_mask = key_pos < s_valid
    else:
        key_mask = None
    w = w_ref[...]
    pb = pb_ref[...].astype(jnp.float32)
    # TODO(synk): for large S convert to a flash-style online softmax with a KV
    #             grid axis instead of materializing the full S x S score matrix.
    for b in range(bt):
        qkv = qkv_ref[b]                                   # (S_pad, 3D)
        for h in range(heads):
            # Softmax scale folded into q: S*dh muls instead of S*S.
            q = qkv[:, h * dh:(h + 1) * dh] * scale
            k = qkv[:, D + h * dh:D + (h + 1) * dh]
            v = qkv[:, 2 * D + h * dh:2 * D + (h + 1) * dh]
            s = jax.lax.dot_general(q, k, (((1,), (1,)), ((), ())),
                                    preferred_element_type=jnp.float32)
            if key_mask is not None:
                s = jnp.where(key_mask, s, -1e30)
            m = jnp.max(s, axis=-1, keepdims=True)
            p = jnp.exp(s - m)
            l = jnp.sum(p, axis=-1, keepdims=True)
            o_h = jnp.dot(p.astype(jnp.bfloat16), v,
                          preferred_element_type=jnp.float32)
            # Normalize the (S, dh) head output (EUP reciprocal), not the
            # (S, S) probability matrix.
            o_h = o_h * pl.reciprocal(l, approx=True)
            attn_ref[:, h * dh:(h + 1) * dh] = o_h.astype(attn_ref.dtype)
        # Dense projection (full K=D MXU fill) + proj bias + residual, fused.
        out = jnp.dot(attn_ref[...], w, preferred_element_type=jnp.float32)
        out = out + pb + res_ref[b].astype(jnp.float32)
        o_ref[b] = out.astype(o_ref.dtype)


def pallas_attention_proj(qkv, x_res, proj_w, proj_b, heads, dh, s_valid, scale,
                          out_dtype=jnp.bfloat16):
    """qkv: (BT, S_pad, 3*D) packed slab, x_res: (BT, S_pad, D) residual stream.
    Returns attention + output-projection + residual, shape (BT, S_pad, D)."""
    BT, S_pad, threeD = qkv.shape
    D = heads * dh
    bt = _attn_bt_tile(BT, S_pad, D)
    kern = functools.partial(_attn_proj_kernel, heads=heads, dh=dh,
                             s_valid=s_valid, scale=scale, bt=bt)
    return pl.pallas_call(
        kern,
        out_shape=jax.ShapeDtypeStruct((BT, S_pad, D), out_dtype),
        grid=(BT // bt,),
        in_specs=[
            pl.BlockSpec((bt, S_pad, threeD), lambda g: (g, 0, 0)),
            pl.BlockSpec((bt, S_pad, D), lambda g: (g, 0, 0)),
            pl.BlockSpec((D, D), lambda g: (0, 0)),
            pl.BlockSpec((1, D), lambda g: (0, 0)),
        ],
        out_specs=pl.BlockSpec((bt, S_pad, D), lambda g: (g, 0, 0)),
        scratch_shapes=[pltpu.VMEM((S_pad, D), jnp.bfloat16)],
        compiler_params=pltpu.CompilerParams(dimension_semantics=("parallel",)),
    )(qkv, x_res, proj_w.astype(jnp.bfloat16),
      proj_b.reshape(1, D).astype(jnp.float32))


# ----------------------------------------------------------------------------
# Plain-JAX glue (data movement only)
# ----------------------------------------------------------------------------
def bilinear_resize_nchw(x, out_size):
    """Matches F.interpolate(mode='bilinear', align_corners=False, antialias=False)."""
    _, _, H, W = x.shape
    Ho, Wo = out_size
    if (H, W) == (Ho, Wo):
        return x

    def src_coords(out_len, in_len):
        scale = in_len / out_len
        s = (jnp.arange(out_len, dtype=jnp.float32) + 0.5) * scale - 0.5
        s = jnp.maximum(s, 0.0)
        i0 = jnp.minimum(jnp.floor(s).astype(jnp.int32), in_len - 1)
        i1 = jnp.minimum(i0 + 1, in_len - 1)
        w1 = s - i0.astype(jnp.float32)
        return i0, i1, 1.0 - w1, w1

    y0, y1, wy0, wy1 = src_coords(Ho, H)
    x0, x1, wx0, wx1 = src_coords(Wo, W)
    top = (x[:, :, y0, :] * wy0[None, None, :, None]
           + x[:, :, y1, :] * wy1[None, None, :, None])
    out = (top[:, :, :, x0] * wx0[None, None, None, :]
           + top[:, :, :, x1] * wx1[None, None, None, :])
    return out


def sample_points(tokens, queries, size):
    """tokens: (B, T, D, fh, fw); queries: (B, N, 3) = (t, x, y) in `size` coords.
    Replicates F.grid_sample(mode='bilinear', padding_mode='border', align_corners=False)."""
    B, T, D, fh, fw = tokens.shape
    N = queries.shape[1]
    qr = queries.reshape(-1, 3)
    t = qr[:, 0].astype(jnp.int32)
    x = qr[:, 1]
    y = qr[:, 2]
    bidx = jnp.repeat(jnp.arange(B), N)
    src = tokens[bidx, t]  # (B*N, D, fh, fw)

    gx = x / size[1] * 2.0 - 1.0
    gy = y / size[0] * 2.0 - 1.0
    ix = jnp.clip(((gx + 1.0) * fw - 1.0) / 2.0, 0.0, fw - 1)
    iy = jnp.clip(((gy + 1.0) * fh - 1.0) / 2.0, 0.0, fh - 1)
    x0 = jnp.floor(ix)
    y0 = jnp.floor(iy)
    wx1 = ix - x0
    wy1 = iy - y0
    wx0 = 1.0 - wx1
    wy0 = 1.0 - wy1
    x0i = jnp.clip(x0, 0, fw - 1).astype(jnp.int32)
    x1i = jnp.clip(x0 + 1, 0, fw - 1).astype(jnp.int32)
    y0i = jnp.clip(y0, 0, fh - 1).astype(jnp.int32)
    y1i = jnp.clip(y0 + 1, 0, fh - 1).astype(jnp.int32)

    g = jnp.arange(B * N)
    v00 = src[g, :, y0i, x0i]
    v01 = src[g, :, y0i, x1i]
    v10 = src[g, :, y1i, x0i]
    v11 = src[g, :, y1i, x1i]
    out = (v00 * (wy0 * wx0)[:, None] + v01 * (wy0 * wx1)[:, None]
           + v10 * (wy1 * wx0)[:, None] + v11 * (wy1 * wx1)[:, None])
    return out.reshape(B, N, D)


# ----------------------------------------------------------------------------
# ViT forward (mirrors the PyTorch module, standard "[:, 1:]" branch)
# ----------------------------------------------------------------------------
def transformer_block(x, w, cfg, s_valid):
    D = x.shape[-1]
    H = cfg["heads"]
    dh = D // H
    # fused LN + QKV matmul -> packed (BT, S_pad, 3D) slab
    qkv = pallas_ln_linear(x, w["ln1_g"], w["ln1_b"], w["qkv_w"], w["qkv_b"])
    # fused multi-head attention + output projection + residual
    x = pallas_attention_proj(qkv, x, w["proj_w"], w["proj_b"],
                              heads=H, dh=dh, s_valid=s_valid, scale=dh ** -0.5)
    # fused LN + fc1 + GELU, then fc2 with fused residual add
    h = pallas_ln_linear(x, w["ln2_g"], w["ln2_b"], w["fc1_w"], w["fc1_b"], gelu=True)
    x = pallas_linear(h, w["fc2_w"], w["fc2_b"], residual=x)
    return x


def vit_forward(video, queries, params, cfg):
    B, T, C, H_in, W_in = video.shape
    size = cfg["size"]
    p = cfg["patch"]
    fh, fw = size[0] // p, size[1] // p
    D = cfg["dim"]
    P = fh * fw
    S = 1 + P
    S_pad = ((S + 7) // 8) * 8  # pad token axis once -> (8,128)-aligned tiles everywhere

    # video preprocessing (glue)
    vf = video.reshape(B * T, C, H_in, W_in).astype(jnp.float32) / 255.0
    vf = bilinear_resize_nchw(vf, size)
    mean = jnp.array([0.485, 0.456, 0.406], jnp.float32).reshape(1, 3, 1, 1)
    std = jnp.array([0.229, 0.224, 0.225], jnp.float32).reshape(1, 3, 1, 1)
    vf = (vf - mean) / std

    # query rescale (in-place in PyTorch; functional here)
    q = queries.astype(jnp.float32)
    q = q.at[:, :, 2].set(q[:, :, 2] / H_in * size[0])
    q = q.at[:, :, 1].set(q[:, :, 1] / W_in * size[1])

    # patch embed: im2col (glue) + Pallas matmul (== Conv2d k=p, stride=p)
    patches = vf.reshape(B * T, C, fh, p, fw, p).transpose(0, 2, 4, 1, 3, 5)
    patches = patches.reshape(B * T, fh * fw, C * p * p).astype(jnp.bfloat16)
    tok = pallas_linear(patches, params["patch_w"], params["patch_b"],
                        out_dtype=jnp.float32)  # (BT, P, D)

    # cls token + positional embedding (fp32), pad S, then bf16 for the stack
    cls = jnp.broadcast_to(params["cls"].astype(jnp.float32), (B * T, 1, D))
    tok = jnp.concatenate([cls, tok], axis=1) + params["pos"].astype(jnp.float32)
    if S_pad != S:
        tok = jnp.pad(tok, ((0, 0), (0, S_pad - S), (0, 0)))
    tok = tok.astype(jnp.bfloat16)

    for blk in params["blocks"]:
        tok = transformer_block(tok, blk, cfg, s_valid=S)

    tok = pallas_layernorm(tok, params["norm_g"], params["norm_b"],
                           out_dtype=jnp.bfloat16)
    tok = tok[:, 1:S]  # drop CLS token and padding ("else" branch of PyTorch forward)

    # (B, T, D, fh, fw); fp32 cast fused with the transpose for output parity
    tokens = tok.reshape(B, T, fh, fw, D).transpose(0, 1, 4, 2, 3).astype(jnp.float32)
    qfeat = sample_points(tokens, q, size)
    return tokens, qfeat


# ----------------------------------------------------------------------------
# Deterministic synthetic parameters (weights stored bf16, LN/bias fp32)
# ----------------------------------------------------------------------------
def init_params(key, cfg):
    C, p, D, depth = cfg["chans"], cfg["patch"], cfg["dim"], cfg["depth"]
    P = (cfg["size"][0] // p) * (cfg["size"][1] // p)
    hidden = D * cfg["mlp_ratio"]
    keys = jax.random.split(key, 4 + depth)

    def nrm(k, shape, scale=0.02):
        return (scale * jax.random.normal(k, shape, dtype=jnp.float32)).astype(jnp.bfloat16)

    params = {
        "patch_w": nrm(keys[0], (C * p * p, D)),
        "patch_b": jnp.zeros((D,), jnp.float32),
        "cls": (0.02 * jax.random.normal(keys[1], (1, 1, D), jnp.float32)),
        "pos": (0.02 * jax.random.normal(keys[2], (1, 1 + P, D), jnp.float32)),
        "norm_g": jnp.ones((D,), jnp.float32),
        "norm_b": jnp.zeros((D,), jnp.float32),
        "blocks": [],
    }
    for i in range(depth):
        bk = jax.random.split(keys[4 + i], 4)
        params["blocks"].append({
            "ln1_g": jnp.ones((D,), jnp.float32), "ln1_b": jnp.zeros((D,), jnp.float32),
            "qkv_w": nrm(bk[0], (D, 3 * D)), "qkv_b": jnp.zeros((3 * D,), jnp.float32),
            "proj_w": nrm(bk[1], (D, D)), "proj_b": jnp.zeros((D,), jnp.float32),
            "ln2_g": jnp.ones((D,), jnp.float32), "ln2_b": jnp.zeros((D,), jnp.float32),
            "fc1_w": nrm(bk[2], (D, hidden)), "fc1_b": jnp.zeros((hidden,), jnp.float32),
            "fc2_w": nrm(bk[3], (hidden, D)), "fc2_b": jnp.zeros((D,), jnp.float32),
        })
    return params


if __name__ == "__main__":
    # tiny synthetic ViT backbone config (structure mirrors timm ViT)
    # TODO(synk): production configs should have D, dh as multiples of 128 (or be
    #             padded to 128) to avoid sub-128 lane blocks; toy config is toy.
    cfg = dict(size=(16, 16), patch=8, dim=32, heads=4, depth=2, mlp_ratio=4, chans=3)

    key = jax.random.PRNGKey(0)
    kp, kv, kt, kx, ky = jax.random.split(key, 5)
    params = init_params(kp, cfg)

    B, T, C, H_in, W_in, N = 2, 2, 3, 32, 32, 4
    video = jax.random.uniform(kv, (B, T, C, H_in, W_in), jnp.float32, 0.0, 255.0)
    qt = jax.random.randint(kt, (B, N), 0, T).astype(jnp.float32)
    qx = jax.random.uniform(kx, (B, N), jnp.float32, 0.0, float(W_in))
    qy = jax.random.uniform(ky, (B, N), jnp.float32, 0.0, float(H_in))
    queries = jnp.stack([qt, qx, qy], axis=-1)  # (B, N, 3) = (t, x, y)

    fwd = jax.jit(functools.partial(vit_forward, cfg=cfg))
    tokens, qfeat = fwd(video, queries, params)
    tokens, qfeat = jax.block_until_ready((tokens, qfeat))

    fh, fw = cfg["size"][0] // cfg["patch"], cfg["size"][1] // cfg["patch"]
    assert tokens.shape == (B, T, cfg["dim"], fh, fw), tokens.shape
    assert qfeat.shape == (B, N, cfg["dim"]), qfeat.shape
    assert jnp.all(jnp.isfinite(tokens)) and jnp.all(jnp.isfinite(qfeat))
    print("KERNEL_OK")
</pallas_src>

<mosaic_0001>
module attributes {stable_mosaic.version = 11 : i64} {
  func.func @_linear_kernel(%arg0: i32, %arg1: i32, %arg2: i32, %arg3: memref<16x192xbf16, #tpu.memory_space<vmem>>, %arg4: memref<192x32xbf16, #tpu.memory_space<vmem>>, %arg5: memref<1x32xf32, #tpu.memory_space<vmem>>, %arg6: memref<16x32xf32, #tpu.memory_space<vmem>>, %arg7: memref<16x32xf32, #tpu.memory_space<vmem>>) attributes {dimension_semantics = [#tpu.dimension_semantics<parallel>, #tpu.dimension_semantics<parallel>, #tpu.dimension_semantics<arbitrary>], iteration_bounds = array<i64: 1, 1, 1>, scalar_prefetch = 0 : i64, scratch_operands = 1 : i64, tpu.core_type = #tpu.core_type<tc>, window_params = [{transform_indices = @transform_0, window_bounds = array<i64: 16, 192>}, {transform_indices = @transform_1, window_bounds = array<i64: 192, 32>}, {transform_indices = @transform_2, window_bounds = array<i64: 1, 32>}, {transform_indices = @transform_3, window_bounds = array<i64: 16, 32>}]} {
    %c0_i32 = arith.constant 0 : i32
    %0 = arith.cmpi eq, %arg2, %c0_i32 : i32
    %1 = arith.extui %0 : i1 to i32
    %c0_i32_0 = arith.constant 0 : i32
    %2 = arith.cmpi ne, %1, %c0_i32_0 : i32
    scf.if %2 {
      %cst_10 = arith.constant 0.000000e+00 : f32
      %12 = vector.broadcast %cst_10 : f32 to vector<16x32xf32>
      %c0_11 = arith.constant 0 : index
      %c0_12 = arith.constant 0 : index
      %13 = vector.load %arg7[%c0_11, %c0_12] : memref<16x32xf32, #tpu.memory_space<vmem>>, vector<16x32xf32>
      tpu.vector_store %arg7[%c0_11, %c0_12], %12 {strides = array<i32>} : memref<16x32xf32, #tpu.memory_space<vmem>>, vector<16x32xf32>,
    } else {
    }
    %c0 = arith.constant 0 : index
    %c0_1 = arith.constant 0 : index
    %3 = vector.load %arg7[%c0, %c0_1] : memref<16x32xf32, #tpu.memory_space<vmem>>, vector<16x32xf32>
    %c0_2 = arith.constant 0 : index
    %c0_3 = arith.constant 0 : index
    %4 = vector.load %arg3[%c0_2, %c0_3] : memref<16x192xbf16, #tpu.memory_space<vmem>>, vector<16x192xbf16>
    %c0_4 = arith.constant 0 : index
    %c0_5 = arith.constant 0 : index
    %5 = vector.load %arg4[%c0_4, %c0_5] : memref<192x32xbf16, #tpu.memory_space<vmem>>, vector<192x32xbf16>
    %cst = arith.constant dense<0.000000e+00> : vector<16x32xf32>
    %6 = tpu.matmul %4, %5, %cst {dimension_numbers = #tpu.dot_dimension_numbers<[1], [0], [0], [1], [0, 0, 1, 1], [], []>} : vector<16x192xbf16>, vector<192x32xbf16>, vector<16x32xf32> -> vector<16x32xf32>
    %7 = arith.addf %3, %6 : vector<16x32xf32>
    %c0_6 = arith.constant 0 : index
    %c0_7 = arith.constant 0 : index
    %8 = vector.load %arg7[%c0_6, %c0_7] : memref<16x32xf32, #tpu.memory_space<vmem>>, vector<16x32xf32>
    tpu.vector_store %arg7[%c0_6, %c0_7], %7 {strides = array<i32>} : memref<16x32xf32, #tpu.memory_space<vmem>>, vector<16x32xf32>,
    %c0_i32_8 = arith.constant 0 : i32
    %9 = arith.cmpi eq, %arg2, %c0_i32_8 : i32
    %10 = arith.extui %9 : i1 to i32
    %c0_i32_9 = arith.constant 0 : i32
    %11 = arith.cmpi ne, %10, %c0_i32_9 : i32
    scf.if %11 {
      %c0_10 = arith.constant 0 : index
      %c0_11 = arith.constant 0 : index
      %12 = vector.load %arg7[%c0_10, %c0_11] : memref<16x32xf32, #tpu.memory_space<vmem>>, vector<16x32xf32>
      %c0_12 = arith.constant 0 : index
      %c0_13 = arith.constant 0 : index
      %13 = vector.load %arg5[%c0_12, %c0_13] : memref<1x32xf32, #tpu.memory_space<vmem>>, vector<1x32xf32>
      %14 = vector.broadcast %13 : vector<1x32xf32> to vector<16x32xf32>
      %15 = arith.addf %12, %14 : vector<16x32xf32>
      %c0_14 = arith.constant 0 : index
      %c0_15 = arith.constant 0 : index
      %16 = vector.load %arg6[%c0_14, %c0_15] : memref<16x32xf32, #tpu.memory_space<vmem>>, vector<16x32xf32>
      tpu.vector_store %arg6[%c0_14, %c0_15], %15 {strides = array<i32>} : memref<16x32xf32, #tpu.memory_space<vmem>>, vector<16x32xf32>,
    } else {
    }
    return
  }
  func.func @transform_0(%arg0: i32, %arg1: i32, %arg2: i32) -> (i32, i32) {
    %c0_i32 = arith.constant 0 : i32
    return %arg0, %arg2 : i32, i32
  }
  func.func @transform_1(%arg0: i32, %arg1: i32, %arg2: i32) -> (i32, i32) {
    %c0_i32 = arith.constant 0 : i32
    return %arg2, %arg1 : i32, i32
  }
  func.func @transform_2(%arg0: i32, %arg1: i32, %arg2: i32) -> (i32, i32) {
    %c0_i32 = arith.constant 0 : i32
    %c0_i32_0 = arith.constant 0 : i32
    return %c0_i32, %arg1 : i32, i32
  }
  func.func @transform_3(%arg0: i32, %arg1: i32, %arg2: i32) -> (i32, i32) {
    %c0_i32 = arith.constant 0 : i32
    return %arg0, %arg1 : i32, i32
  }
}

module attributes {stable_mosaic.version = 11 : i64} {
  func.func @_attn_proj_kernel(%arg0: i32, %arg1: memref<2x8x96xbf16, #tpu.memory_space<vmem>>, %arg2: memref<2x8x32xbf16, #tpu.memory_space<vmem>>, %arg3: memref<32x32xbf16, #tpu.memory_space<vmem>>, %arg4: memref<1x32xf32, #tpu.memory_space<vmem>>, %arg5: memref<2x8x32xbf16, #tpu.memory_space<vmem>>, %arg6: memref<8x32xbf16, #tpu.memory_space<vmem>>) attributes {dimension_semantics = [#tpu.dimension_semantics<parallel>], iteration_bounds = array<i64: 2>, scalar_prefetch = 0 : i64, scratch_operands = 1 : i64, tpu.core_type = #tpu.core_type<tc>, window_params = [{transform_indices = @transform_0, window_bounds = array<i64: 2, 8, 96>}, {transform_indices = @transform_1, window_bounds = array<i64: 2, 8, 32>}, {pipeline_mode = #tpu.pipeline_mode<synchronous>, transform_indices = @transform_2, window_bounds = array<i64: 32, 32>}, {pipeline_mode = #tpu.pipeline_mode<synchronous>, transform_indices = @transform_3, window_bounds = array<i64: 1, 32>}, {transform_indices = @transform_4, window_bounds = array<i64: 2, 8, 32>}]} {
    %0 = tpu.iota {dimensions = array<i32: 1>} : vector<1x8xi32>
    %c5_i32 = arith.constant 5 : i32
    %1 = vector.broadcast %c5_i32 : i32 to vector<1x8xi32>
    %2 = arith.cmpi slt, %0, %1 : vector<1x8xi32>
    %c0 = arith.constant 0 : index
    %c0_0 = arith.constant 0 : index
    %3 = vector.load %arg3[%c0, %c0_0] : memref<32x32xbf16, #tpu.memory_space<vmem>>, vector<32x32xbf16>
    %c0_1 = arith.constant 0 : index
    %c0_2 = arith.constant 0 : index
    %4 = vector.load %arg4[%c0_1, %c0_2] : memref<1x32xf32, #tpu.memory_space<vmem>>, vector<1x32xf32>
    %c0_3 = arith.constant 0 : index
    %c0_4 = arith.constant 0 : index
    %c0_5 = arith.constant 0 : index
    %5 = vector.load %arg1[%c0_3, %c0_4, %c0_5] : memref<2x8x96xbf16, #tpu.memory_space<vmem>>, vector<1x8x96xbf16>
    %6 = vector.shape_cast %5 : vector<1x8x96xbf16> to vector<8x96xbf16>
    %7 = vector.extract_strided_slice %6 {offsets = [0, 0], sizes = [8, 8], strides = [1, 1]} : vector<8x96xbf16> to vector<8x8xbf16>
    %cst = arith.constant 3.535160e-01 : bf16
    %8 = vector.broadcast %cst : bf16 to vector<8x8xbf16>
    %9 = arith.mulf %7, %8 : vector<8x8xbf16>
    %10 = vector.extract_strided_slice %6 {offsets = [0, 32], sizes = [8, 8], strides = [1, 1]} : vector<8x96xbf16> to vector<8x8xbf16>
    %11 = vector.extract_strided_slice %6 {offsets = [0, 64], sizes = [8, 8], strides = [1, 1]} : vector<8x96xbf16> to vector<8x8xbf16>
    %cst_6 = arith.constant dense<0.000000e+00> : vector<8x8xf32>
    %12 = tpu.matmul %9, %10, %cst_6 {dimension_numbers = #tpu.dot_dimension_numbers<[1], [1], [0], [0], [0, 0, 1, 0], [], []>} : vector<8x8xbf16>, vector<8x8xbf16>, vector<8x8xf32> -> vector<8x8xf32>
    %cst_7 = arith.constant -1.000000e+30 : f32
    %13 = vector.shape_cast %2 : vector<1x8xi1> to vector<1x8xi1>
    %14 = vector.broadcast %13 : vector<1x8xi1> to vector<8x8xi1>
    %15 = vector.broadcast %cst_7 : f32 to vector<8x8xf32>
    %16 = arith.select %14, %12, %15 : vector<8x8xi1>, vector<8x8xf32>
    %cst_8 = arith.constant dense<0xFF800000> : vector<8xf32>
    %17 = vector.multi_reduction <maximumf>, %16, %cst_8 [1] : vector<8x8xf32> to vector<8xf32>
    %18 = vector.shape_cast %17 : vector<8xf32> to vector<8x1xf32>
    %19 = vector.broadcast %18 : vector<8x1xf32> to vector<8x8xf32>
    %20 = arith.subf %16, %19 : vector<8x8xf32>
    %21 = math.exp %20 : vector<8x8xf32>
    %cst_9 = arith.constant dense<0.000000e+00> : vector<8xf32>
    %22 = vector.multi_reduction <add>, %21, %cst_9 [1] : vector<8x8xf32> to vector<8xf32>
    %23 = vector.shape_cast %22 : vector<8xf32> to vector<8x1xf32>
    %24 = arith.truncf %21 : vector<8x8xf32> to vector<8x8xbf16>
    %cst_10 = arith.constant dense<0.000000e+00> : vector<8x8xf32>
    %25 = tpu.matmul %24, %11, %cst_10 {dimension_numbers = #tpu.dot_dimension_numbers<[1], [0], [0], [1], [0, 0, 1, 1], [], []>} : vector<8x8xbf16>, vector<8x8xbf16>, vector<8x8xf32> -> vector<8x8xf32>
    %26 = tpu.reciprocal %23 {approx = true} : vector<8x1xf32> -> vector<8x1xf32>
    %27 = vector.broadcast %26 : vector<8x1xf32> to vector<8x8xf32>
    %28 = arith.mulf %25, %27 : vector<8x8xf32>
    %29 = arith.truncf %28 : vector<8x8xf32> to vector<8x8xbf16>
    %c0_11 = arith.constant 0 : index
    %c0_12 = arith.constant 0 : index
    %30 = vector.load %arg6[%c0_11, %c0_12] : memref<8x32xbf16, #tpu.memory_space<vmem>>, vector<8x8xbf16>
    tpu.vector_store %arg6[%c0_11, %c0_12], %29 {strides = array<i32>} : memref<8x32xbf16, #tpu.memory_space<vmem>>, vector<8x8xbf16>,
    %31 = vector.extract_strided_slice %6 {offsets = [0, 8], sizes = [8, 8], strides = [1, 1]} : vector<8x96xbf16> to vector<8x8xbf16>
    %cst_13 = arith.constant 3.535160e-01 : bf16
    %32 = vector.broadcast %cst_13 : bf16 to vector<8x8xbf16>
    %33 = arith.mulf %31, %32 : vector<8x8xbf16>
    %34 = vector.extract_strided_slice %6 {offsets = [0, 40], sizes = [8, 8], strides = [1, 1]} : vector<8x96xbf16> to vector<8x8xbf16>
    %35 = vector.extract_strided_slice %6 {offsets = [0, 72], sizes = [8, 8], strides = [1, 1]} : vector<8x96xbf16> to vector<8x8xbf16>
    %cst_14 = arith.constant dense<0.000000e+00> : vector<8x8xf32>
    %36 = tpu.matmul %33, %34, %cst_14 {dimension_numbers = #tpu.dot_dimension_numbers<[1], [1], [0], [0], [0, 0, 1, 0], [], []>} : vector<8x8xbf16>, vector<8x8xbf16>, vector<8x8xf32> -> vector<8x8xf32>
    %cst_15 = arith.constant -1.000000e+30 : f32
    %37 = vector.shape_cast %2 : vector<1x8xi1> to vector<1x8xi1>
    %38 = vector.broadcast %37 : vector<1x8xi1> to vector<8x8xi1>
    %39 = vector.broadcast %cst_15 : f32 to vector<8x8xf32>
    %40 = arith.select %38, %36, %39 : vector<8x8xi1>, vector<8x8xf32>
    %cst_16 = arith.constant dense<0xFF800000> : vector<8xf32>
    %41 = vector.multi_reduction <maximumf>, %40, %cst_16 [1] : vector<8x8xf32> to vector<8xf32>
    %42 = vector.shape_cast %41 : vector<8xf32> to vector<8x1xf32>
    %43 = vector.broadcast %42 : vector<8x1xf32> to vector<8x8xf32>
    %44 = arith.subf %40, %43 : vector<8x8xf32>
    %45 = math.exp %44 : vector<8x8xf32>
    %cst_17 = arith.constant dense<0.000000e+00> : vector<8xf32>
    %46 = vector.multi_reduction <add>, %45, %cst_17 [1] : vector<8x8xf32> to vector<8xf32>
    %47 = vector.shape_cast %46 : vector<8xf32> to vector<8x1xf32>
    %48 = arith.truncf %45 : vector<8x8xf32> to vector<8x8xbf16>
    %cst_18 = arith.constant dense<0.000000e+00> : vector<8x8xf32>
    %49 = tpu.matmul %48, %35, %cst_18 {dimension_numbers = #tpu.dot_dimension_numbers<[1], [0], [0], [1], [0, 0, 1, 1], [], []>} : vector<8x8xbf16>, vector<8x8xbf16>, vector<8x8xf32> -> vector<8x8xf32>
    %50 = tpu.reciprocal %47 {approx = true} : vector<8x1xf32> -> vector<8x1xf32>
    %51 = vector.broadcast %50 : vector<8x1xf32> to vector<8x8xf32>
    %52 = arith.mulf %49, %51 : vector<8x8xf32>
    %53 = arith.truncf %52 : vector<8x8xf32> to vector<8x8xbf16>
    %c0_19 = arith.constant 0 : index
    %c8 = arith.constant 8 : index
    %54 = vector.load %arg6[%c0_19, %c8] : memref<8x32xbf16, #tpu.memory_space<vmem>>, vector<8x8xbf16>
    tpu.vector_store %arg6[%c0_19, %c8], %53 {strides = array<i32>} : memref<8x32xbf16, #tpu.memory_space<vmem>>, vector<8x8xbf16>,
    %55 = vector.extract_strided_slice %6 {offsets = [0, 16], sizes = [8, 8], strides = [1, 1]} : vector<8x96xbf16> to vector<8x8xbf16>
    %cst_20 = arith.constant 3.535160e-01 : bf16
    %56 = vector.broadcast %cst_20 : bf16 to vector<8x8xbf16>
    %57 = arith.mulf %55, %56 : vector<8x8xbf16>
    %58 = vector.extract_strided_slice %6 {offsets = [0, 48], sizes = [8, 8], strides = [1, 1]} : vector<8x96xbf16> to vector<8x8xbf16>
    %59 = vector.extract_strided_slice %6 {offsets = [0, 80], sizes = [8, 8], strides = [1, 1]} : vector<8x96xbf16> to vector<8x8xbf16>
    %cst_21 = arith.constant dense<0.000000e+00> : vector<8x8xf32>
    %60 = tpu.matmul %57, %58, %cst_21 {dimension_numbers = #tpu.dot_dimension_numbers<[1], [1], [0], [0], [0, 0, 1, 0], [], []>} : vector<8x8xbf16>, vector<8x8xbf16>, vector<8x8xf32> -> vector<8x8xf32>
    %cst_22 = arith.constant -1.000000e+30 : f32
    %61 = vector.shape_cast %2 : vector<1x8xi1> to vector<1x8xi1>
    %62 = vector.broadcast %61 : vector<1x8xi1> to vector<8x8xi1>
    %63 = vector.broadcast %cst_22 : f32 to vector<8x8xf32>
    %64 = arith.select %62, %60, %63 : vector<8x8xi1>, vector<8x8xf32>
    %cst_23 = arith.constant dense<0xFF800000> : vector<8xf32>
    %65 = vector.multi_reduction <maximumf>, %64, %cst_23 [1] : vector<8x8xf32> to vector<8xf32>
    %66 = vector.shape_cast %65 : vector<8xf32> to vector<8x1xf32>
    %67 = vector.broadcast %66 : vector<8x1xf32> to vector<8x8xf32>
    %68 = arith.subf %64, %67 : vector<8x8xf32>
    %69 = math.exp %68 : vector<8x8xf32>
    %cst_24 = arith.constant dense<0.000000e+00> : vector<8xf32>
    %70 = vector.multi_reduction <add>, %69, %cst_24 [1] : vector<8x8xf32> to vector<8xf32>
    %71 = vector.shape_cast %70 : vector<8xf32> to vector<8x1xf32>
    %72 = arith.truncf %69 : vector<8x8xf32> to vector<8x8xbf16>
    %cst_25 = arith.constant dense<0.000000e+00> : vector<8x8xf32>
    %73 = tpu.matmul %72, %59, %cst_25 {dimension_numbers = #tpu.dot_dimension_numbers<[1], [0], [0], [1], [0, 0, 1, 1], [], []>} : vector<8x8xbf16>, vector<8x8xbf16>, vector<8x8xf32> -> vector<8x8xf32>
    %74 = tpu.reciprocal %71 {approx = true} : vector<8x1xf32> -> vector<8x1xf32>
    %75 = vector.broadcast %74 : vector<8x1xf32> to vector<8x8xf32>
    %76 = arith.mulf %73, %75 : vector<8x8xf32>
    %77 = arith.truncf %76 : vector<8x8xf32> to vector<8x8xbf16>
    %c0_26 = arith.constant 0 : index
    %c16 = arith.constant 16 : index
    %78 = vector.load %arg6[%c0_26, %c16] : memref<8x32xbf16, #tpu.memory_space<vmem>>, vector<8x8xbf16>
    tpu.vector_store %arg6[%c0_26, %c16], %77 {strides = array<i32>} : memref<8x32xbf16, #tpu.memory_space<vmem>>, vector<8x8xbf16>,
    %79 = vector.extract_strided_slice %6 {offsets = [0, 24], sizes = [8, 8], strides = [1, 1]} : vector<8x96xbf16> to vector<8x8xbf16>
    %cst_27 = arith.constant 3.535160e-01 : bf16
    %80 = vector.broadcast %cst_27 : bf16 to vector<8x8xbf16>
    %81 = arith.mulf %79, %80 : vector<8x8xbf16>
    %82 = vector.extract_strided_slice %6 {offsets = [0, 56], sizes = [8, 8], strides = [1, 1]} : vector<8x96xbf16> to vector<8x8xbf16>
    %83 = vector.extract_strided_slice %6 {offsets = [0, 88], sizes = [8, 8], strides = [1, 1]} : vector<8x96xbf16> to vector<8x8xbf16>
    %cst_28 = arith.constant dense<0.000000e+00> : vector<8x8xf32>
    %84 = tpu.matmul %81, %82, %cst_28 {dimension_numbers = #tpu.dot_dimension_numbers<[1], [1], [0], [0], [0, 0, 1, 0], [], []>} : vector<8x8xbf16>, vector<8x8xbf16>, vector<8x8xf32> -> vector<8x8xf32>
    %cst_29 = arith.constant -1.000000e+30 : f32
    %85 = vector.shape_cast %2 : vector<1x8xi1> to vector<1x8xi1>
    %86 = vector.broadcast %85 : vector<1x8xi1> to vector<8x8xi1>
    %87 = vector.broadcast %cst_29 : f32 to vector<8x8xf32>
    %88 = arith.select %86, %84, %87 : vector<8x8xi1>, vector<8x8xf32>
    %cst_30 = arith.constant dense<0xFF800000> : vector<8xf32>
    %89 = vector.multi_reduction <maximumf>, %88, %cst_30 [1] : vector<8x8xf32> to vector<8xf32>
    %90 = vector.shape_cast %89 : vector<8xf32> to vector<8x1xf32>
    %91 = vector.broadcast %90 : vector<8x1xf32> to vector<8x8xf32>
    %92 = arith.subf %88, %91 : vector<8x8xf32>
    %93 = math.exp %92 : vector<8x8xf32>
    %cst_31 = arith.constant dense<0.000000e+00> : vector<8xf32>
    %94 = vector.multi_reduction <add>, %93, %cst_31 [1] : vector<8x8xf32> to vector<8xf32>
    %95 = vector.shape_cast %94 : vector<8xf32> to vector<8x1xf32>
    %96 = arith.truncf %93 : vector<8x8xf32> to vector<8x8xbf16>
    %cst_32 = arith.constant dense<0.000000e+00> : vector<8x8xf32>
    %97 = tpu.matmul %96, %83, %cst_32 {dimension_numbers = #tpu.dot_dimension_numbers<[1], [0], [0], [1], [0, 0, 1, 1], [], []>} : vector<8x8xbf16>, vector<8x8xbf16>, vector<8x8xf32> -> vector<8x8xf32>
    %98 = tpu.reciprocal %95 {approx = true} : vector<8x1xf32> -> vector<8x1xf32>
    %99 = vector.broadcast %98 : vector<8x1xf32> to vector<8x8xf32>
    %100 = arith.mulf %97, %99 : vector<8x8xf32>
    %101 = arith.truncf %100 : vector<8x8xf32> to vector<8x8xbf16>
    %c0_33 = arith.constant 0 : index
    %c24 = arith.constant 24 : index
    %102 = vector.load %arg6[%c0_33, %c24] : memref<8x32xbf16, #tpu.memory_space<vmem>>, vector<8x8xbf16>
    tpu.vector_store %arg6[%c0_33, %c24], %101 {strides = array<i32>} : memref<8x32xbf16, #tpu.memory_space<vmem>>, vector<8x8xbf16>,
    %c0_34 = arith.constant 0 : index
    %c0_35 = arith.constant 0 : index
    %103 = vector.load %arg6[%c0_34, %c0_35] : memref<8x32xbf16, #tpu.memory_space<vmem>>, vector<8x32xbf16>
    %cst_36 = arith.constant dense<0.000000e+00> : vector<8x32xf32>
    %104 = tpu.matmul %103, %3, %cst_36 {dimension_numbers = #tpu.dot_dimension_numbers<[1], [0], [0], [1], [0, 0, 1, 1], [], []>} : vector<8x32xbf16>, vector<32x32xbf16>, vector<8x32xf32> -> vector<8x32xf32>
    %105 = vector.broadcast %4 : vector<1x32xf32> to vector<8x32xf32>
    %106 = arith.addf %104, %105 : vector<8x32xf32>
    %c0_37 = arith.constant 0 : index
    %c0_38 = arith.constant 0 : index
    %c0_39 = arith.constant 0 : index
    %107 = vector.load %arg2[%c0_37, %c0_38, %c0_39] : memref<2x8x32xbf16, #tpu.memory_space<vmem>>, vector<1x8x32xbf16>
    %108 = vector.shape_cast %107 : vector<1x8x32xbf16> to vector<8x32xbf16>
    %109 = arith.extf %108 : vector<8x32xbf16> to vector<8x32xf32>
    %110 = arith.addf %106, %109 : vector<8x32xf32>
    %111 = arith.truncf %110 : vector<8x32xf32> to vector<8x32xbf16>
    %c0_40 = arith.constant 0 : index
    %c0_41 = arith.constant 0 : index
    %c0_42 = arith.constant 0 : index
    %112 = vector.load %arg5[%c0_40, %c0_41, %c0_42] : memref<2x8x32xbf16, #tpu.memory_space<vmem>>, vector<1x8x32xbf16>
    %113 = vector.shape_cast %112 : vector<1x8x32xbf16> to vector<8x32xbf16>
    %114 = vector.shape_cast %111 : vector<8x32xbf16> to vector<1x8x32xbf16>
    tpu.vector_store %arg5[%c0_40, %c0_41, %c0_42], %114 {strides = array<i32>} : memref<2x8x32xbf16, #tpu.memory_space<vmem>>, vector<1x8x32xbf16>,
    %c1 = arith.constant 1 : index
    %c0_43 = arith.constant 0 : index
    %c0_44 = arith.constant 0 : index
    %115 = vector.load %arg1[%c1, %c0_43, %c0_44] : memref<2x8x96xbf16, #tpu.memory_space<vmem>>, vector<1x8x96xbf16>
    %116 = vector.shape_cast %115 : vector<1x8x96xbf16> to vector<8x96xbf16>
    %117 = vector.extract_strided_slice %116 {offsets = [0, 0], sizes = [8, 8], strides = [1, 1]} : vector<8x96xbf16> to vector<8x8xbf16>
    %cst_45 = arith.constant 3.535160e-01 : bf16
    %118 = vector.broadcast %cst_45 : bf16 to vector<8x8xbf16>
    %119 = arith.mulf %117, %118 : vector<8x8xbf16>
    %120 = vector.extract_strided_slice %116 {offsets = [0, 32], sizes = [8, 8], strides = [1, 1]} : vector<8x96xbf16> to vector<8x8xbf16>
    %121 = vector.extract_strided_slice %116 {offsets = [0, 64], sizes = [8, 8], strides = [1, 1]} : vector<8x96xbf16> to vector<8x8xbf16>
    %cst_46 = arith.constant dense<0.000000e+00> : vector<8x8xf32>
    %122 = tpu.matmul %119, %120, %cst_46 {dimension_numbers = #tpu.dot_dimension_numbers<[1], [1], [0], [0], [0, 0, 1, 0], [], []>} : vector<8x8xbf16>, vector<8x8xbf16>, vector<8x8xf32> -> vector<8x8xf32>
    %cst_47 = arith.constant -1.000000e+30 : f32
    %123 = vector.shape_cast %2 : vector<1x8xi1> to vector<1x8xi1>
    %124 = vector.broadcast %123 : vector<1x8xi1> to vector<8x8xi1>
    %125 = vector.broadcast %cst_47 : f32 to vector<8x8xf32>
    %126 = arith.select %124, %122, %125 : vector<8x8xi1>, vector<8x8xf32>
    %cst_48 = arith.constant dense<0xFF800000> : vector<8xf32>
    %127 = vector.multi_reduction <maximumf>, %126, %cst_48 [1] : vector<8x8xf32> to vector<8xf32>
    %128 = vector.shape_cast %127 : vector<8xf32> to vector<8x1xf32>
    %129 = vector.broadcast %128 : vector<8x1xf32> to vector<8x8xf32>
    %130 = arith.subf %126, %129 : vector<8x8xf32>
    %131 = math.exp %130 : vector<8x8xf32>
    %cst_49 = arith.constant dense<0.000000e+00> : vector<8xf32>
    %132 = vector.multi_reduction <add>, %131, %cst_49 [1] : vector<8x8xf32> to vector<8xf32>
    %133 = vector.shape_cast %132 : vector<8xf32> to vector<8x1xf32>
    %134 = arith.truncf %131 : vector<8x8xf32> to vector<8x8xbf16>
    %cst_50 = arith.constant dense<0.000000e+00> : vector<8x8xf32>
    %135 = tpu.matmul %134, %121, %cst_50 {dimension_numbers = #tpu.dot_dimension_numbers<[1], [0], [0], [1], [0, 0, 1, 1], [], []>} : vector<8x8xbf16>, vector<8x8xbf16>, vector<8x8xf32> -> vector<8x8xf32>
    %136 = tpu.reciprocal %133 {approx = true} : vector<8x1xf32> -> vector<8x1xf32>
    %137 = vector.broadcast %136 : vector<8x1xf32> to vector<8x8xf32>
    %138 = arith.mulf %135, %137 : vector<8x8xf32>
    %139 = arith.truncf %138 : vector<8x8xf32> to vector<8x8xbf16>
    %c0_51 = arith.constant 0 : index
    %c0_52 = arith.constant 0 : index
    %140 = vector.load %arg6[%c0_51, %c0_52] : memref<8x32xbf16, #tpu.memory_space<vmem>>, vector<8x8xbf16>
    tpu.vector_store %arg6[%c0_51, %c0_52], %139 {strides = array<i32>} : memref<8x32xbf16, #tpu.memory_space<vmem>>, vector<8x8xbf16>,
    %141 = vector.extract_strided_slice %116 {offsets = [0, 8], sizes = [8, 8], strides = [1, 1]} : vector<8x96xbf16> to vector<8x8xbf16>
    %cst_53 = arith.constant 3.535160e-01 : bf16
    %142 = vector.broadcast %cst_53 : bf16 to vector<8x8xbf16>
    %143 = arith.mulf %141, %142 : vector<8x8xbf16>
    %144 = vector.extract_strided_slice %116 {offsets = [0, 40], sizes = [8, 8], strides = [1, 1]} : vector<8x96xbf16> to vector<8x8xbf16>
    %145 = vector.extract_strided_slice %116 {offsets = [0, 72], sizes = [8, 8], strides = [1, 1]} : vector<8x96xbf16> to vector<8x8xbf16>
    %cst_54 = arith.constant dense<0.000000e+00> : vector<8x8xf32>
    %146 = tpu.matmul %143, %144, %cst_54 {dimension_numbers = #tpu.dot_dimension_numbers<[1], [1], [0], [0], [0, 0, 1, 0], [], []>} : vector<8x8xbf16>, vector<8x8xbf16>, vector<8x8xf32> -> vector<8x8xf32>
    %cst_55 = arith.constant -1.000000e+30 : f32
    %147 = vector.shape_cast %2 : vector<1x8xi1> to vector<1x8xi1>
    %148 = vector.broadcast %147 : vector<1x8xi1> to vector<8x8xi1>
    %149 = vector.broadcast %cst_55 : f32 to vector<8x8xf32>
    %150 = arith.select %148, %146, %149 : vector<8x8xi1>, vector<8x8xf32>
    %cst_56 = arith.constant dense<0xFF800000> : vector<8xf32>
    %151 = vector.multi_reduction <maximumf>, %150, %cst_56 [1] : vector<8x8xf32> to vector<8xf32>
    %152 = vector.shape_cast %151 : vector<8xf32> to vector<8x1xf32>
    %153 = vector.broadcast %152 : vector<8x1xf32> to vector<8x8xf32>
    %154 = arith.subf %150, %153 : vector<8x8xf32>
    %155 = math.exp %154 : vector<8x8xf32>
    %cst_57 = arith.constant dense<0.000000e+00> : vector<8xf32>
    %156 = vector.multi_reduction <add>, %155, %cst_57 [1] : vector<8x8xf32> to vector<8xf32>
    %157 = vector.shape_cast %156 : vector<8xf32> to vector<8x1xf32>
    %158 = arith.truncf %155 : vector<8x8xf32> to vector<8x8xbf16>
    %cst_58 = arith.constant dense<0.000000e+00> : vector<8x8xf32>
    %159 = tpu.matmul %158, %145, %cst_58 {dimension_numbers = #tpu.dot_dimension_numbers<[1], [0], [0], [1], [0, 0, 1, 1], [], []>} : vector<8x8xbf16>, vector<8x8xbf16>, vector<8x8xf32> -> vector<8x8xf32>
    %160 = tpu.reciprocal %157 {approx = true} : vector<8x1xf32> -> vector<8x1xf32>
    %161 = vector.broadcast %160 : vector<8x1xf32> to vector<8x8xf32>
    %162 = arith.mulf %159, %161 : vector<8x8xf32>
    %163 = arith.truncf %162 : vector<8x8xf32> to vector<8x8xbf16>
    %c0_59 = arith.constant 0 : index
    %c8_60 = arith.constant 8 : index
    %164 = vector.load %arg6[%c0_59, %c8_60] : memref<8x32xbf16, #tpu.memory_space<vmem>>, vector<8x8xbf16>
    tpu.vector_store %arg6[%c0_59, %c8_60], %163 {strides = array<i32>} : memref<8x32xbf16, #tpu.memory_space<vmem>>, vector<8x8xbf16>,
    %165 = vector.extract_strided_slice %116 {offsets = [0, 16], sizes = [8, 8], strides = [1, 1]} : vector<8x96xbf16> to vector<8x8xbf16>
    %cst_61 = arith.constant 3.535160e-01 : bf16
    %166 = vector.broadcast %cst_61 : bf16 to vector<8x8xbf16>
    %167 = arith.mulf %165, %166 : vector<8x8xbf16>
    %168 = vector.extract_strided_slice %116 {offsets = [0, 48], sizes = [8, 8], strides = [1, 1]} : vector<8x96xbf16> to vector<8x8xbf16>
    %169 = vector.extract_strided_slice %116 {offsets = [0, 80], sizes = [8, 8], strides = [1, 1]} : vector<8x96xbf16> to vector<8x8xbf16>
    %cst_62 = arith.constant dense<0.000000e+00> : vector<8x8xf32>
    %170 = tpu.matmul %167, %168, %cst_62 {dimension_numbers = #tpu.dot_dimension_numbers<[1], [1], [0], [0], [0, 0, 1, 0], [], []>} : vector<8x8xbf16>, vector<8x8xbf16>, vector<8x8xf32> -> vector<8x8xf32>
    %cst_63 = arith.constant -1.000000e+30 : f32
    %171 = vector.shape_cast %2 : vector<1x8xi1> to vector<1x8xi1>
    %172 = vector.broadcast %171 : vector<1x8xi1> to vector<8x8xi1>
    %173 = vector.broadcast %cst_63 : f32 to vector<8x8xf32>
    %174 = arith.select %172, %170, %173 : vector<8x8xi1>, vector<8x8xf32>
    %cst_64 = arith.constant dense<0xFF800000> : vector<8xf32>
    %175 = vector.multi_reduction <maximumf>, %174, %cst_64 [1] : vector<8x8xf32> to vector<8xf32>
    %176 = vector.shape_cast %175 : vector<8xf32> to vector<8x1xf32>
    %177 = vector.broadcast %176 : vector<8x1xf32> to vector<8x8xf32>
    %178 = arith.subf %174, %177 : vector<8x8xf32>
    %179 = math.exp %178 : vector<8x8xf32>
    %cst_65 = arith.constant dense<0.000000e+00> : vector<8xf32>
    %180 = vector.multi_reduction <add>, %179, %cst_65 [1] : vector<8x8xf32> to vector<8xf32>
    %181 = vector.shape_cast %180 : vector<8xf32> to vector<8x1xf32>
    %182 = arith.truncf %179 : vector<8x8xf32> to vector<8x8xbf16>
    %cst_66 = arith.constant dense<0.000000e+00> : vector<8x8xf32>
    %183 = tpu.matmul %182, %169, %cst_66 {dimension_numbers = #tpu.dot_dimension_numbers<[1], [0], [0], [1], [0, 0, 1, 1], [], []>} : vector<8x8xbf16>, vector<8x8xbf16>, vector<8x8xf32> -> vector<8x8xf32>
    %184 = tpu.reciprocal %181 {approx = true} : vector<8x1xf32> -> vector<8x1xf32>
    %185 = vector.broadcast %184 : vector<8x1xf32> to vector<8x8xf32>
    %186 = arith.mulf %183, %185 : vector<8x8xf32>
    %187 = arith.truncf %186 : vector<8x8xf32> to vector<8x8xbf16>
    %c0_67 = arith.constant 0 : index
    %c16_68 = arith.constant 16 : index
    %188 = vector.load %arg6[%c0_67, %c16_68] : memref<8x32xbf16, #tpu.memory_space<vmem>>, vector<8x8xbf16>
    tpu.vector_store %arg6[%c0_67, %c16_68], %187 {strides = array<i32>} : memref<8x32xbf16, #tpu.memory_space<vmem>>, vector<8x8xbf16>,
    %189 = vector.extract_strided_slice %116 {offsets = [0, 24], sizes = [8, 8], strides = [1, 1]} : vector<8x96xbf16> to vector<8x8xbf16>
    %cst_69 = arith.constant 3.535160e-01 : bf16
    %190 = vector.broadcast %cst_69 : bf16 to vector<8x8xbf16>
    %191 = arith.mulf %189, %190 : vector<8x8xbf16>
    %192 = vector.extract_strided_slice %116 {offsets = [0, 56], sizes = [8, 8], strides = [1, 1]} : vector<8x96xbf16> to vector<8x8xbf16>
    %193 = vector.extract_strided_slice %116 {offsets = [0, 88], sizes = [8, 8], strides = [1, 1]} : vector<8x96xbf16> to vector<8x8xbf16>
    %cst_70 = arith.constant dense<0.000000e+00> : vector<8x8xf32>
    %194 = tpu.matmul %191, %192, %cst_70 {dimension_numbers = #tpu.dot_dimension_numbers<[1], [1], [0], [0], [0, 0, 1, 0], [], []>} : vector<8x8xbf16>, vector<8x8xbf16>, vector<8x8xf32> -> vector<8x8xf32>
    %cst_71 = arith.constant -1.000000e+30 : f32
    %195 = vector.shape_cast %2 : vector<1x8xi1> to vector<1x8xi1>
    %196 = vector.broadcast %195 : vector<1x8xi1> to vector<8x8xi1>
    %197 = vector.broadcast %cst_71 : f32 to vector<8x8xf32>
    %198 = arith.select %196, %194, %197 : vector<8x8xi1>, vector<8x8xf32>
    %cst_72 = arith.constant dense<0xFF800000> : vector<8xf32>
    %199 = vector.multi_reduction <maximumf>, %198, %cst_72 [1] : vector<8x8xf32> to vector<8xf32>
    %200 = vector.shape_cast %199 : vector<8xf32> to vector<8x1xf32>
    %201 = vector.broadcast %200 : vector<8x1xf32> to vector<8x8xf32>
    %202 = arith.subf %198, %201 : vector<8x8xf32>
    %203 = math.exp %202 : vector<8x8xf32>
    %cst_73 = arith.constant dense<0.000000e+00> : vector<8xf32>
    %204 = vector.multi_reduction <add>, %203, %cst_73 [1] : vector<8x8xf32> to vector<8xf32>
    %205 = vector.shape_cast %204 : vector<8xf32> to vector<8x1xf32>
    %206 = arith.truncf %203 : vector<8x8xf32> to vector<8x8xbf16>
    %cst_74 = arith.constant dense<0.000000e+00> : vector<8x8xf32>
    %207 = tpu.matmul %206, %193, %cst_74 {dimension_numbers = #tpu.dot_dimension_numbers<[1], [0], [0], [1], [0, 0, 1, 1], [], []>} : vector<8x8xbf16>, vector<8x8xbf16>, vector<8x8xf32> -> vector<8x8xf32>
    %208 = tpu.reciprocal %205 {approx = true} : vector<8x1xf32> -> vector<8x1xf32>
    %209 = vector.broadcast %208 : vector<8x1xf32> to vector<8x8xf32>
    %210 = arith.mulf %207, %209 : vector<8x8xf32>
    %211 = arith.truncf %210 : vector<8x8xf32> to vector<8x8xbf16>
    %c0_75 = arith.constant 0 : index
    %c24_76 = arith.constant 24 : index
    %212 = vector.load %arg6[%c0_75, %c24_76] : memref<8x32xbf16, #tpu.memory_space<vmem>>, vector<8x8xbf16>
    tpu.vector_store %arg6[%c0_75, %c24_76], %211 {strides = array<i32>} : memref<8x32xbf16, #tpu.memory_space<vmem>>, vector<8x8xbf16>,
    %c0_77 = arith.constant 0 : index
    %c0_78 = arith.constant 0 : index
    %213 = vector.load %arg6[%c0_77, %c0_78] : memref<8x32xbf16, #tpu.memory_space<vmem>>, vector<8x32xbf16>
    %cst_79 = arith.constant dense<0.000000e+00> : vector<8x32xf32>
    %214 = tpu.matmul %213, %3, %cst_79 {dimension_numbers = #tpu.dot_dimension_numbers<[1], [0], [0], [1], [0, 0, 1, 1], [], []>} : vector<8x32xbf16>, vector<32x32xbf16>, vector<8x32xf32> -> vector<8x32xf32>
    %215 = vector.broadcast %4 : vector<1x32xf32> to vector<8x32xf32>
    %216 = arith.addf %214, %215 : vector<8x32xf32>
    %c1_80 = arith.constant 1 : index
    %c0_81 = arith.constant 0 : index
    %c0_82 = arith.constant 0 : index
    %217 = vector.load %arg2[%c1_80, %c0_81, %c0_82] : memref<2x8x32xbf16, #tpu.memory_space<vmem>>, vector<1x8x32xbf16>
    %218 = vector.shape_cast %217 : vector<1x8x32xbf16> to vector<8x32xbf16>
    %219 = arith.extf %218 : vector<8x32xbf16> to vector<8x32xf32>
    %220 = arith.addf %216, %219 : vector<8x32xf32>
    %221 = arith.truncf %220 : vector<8x32xf32> to vector<8x32xbf16>
    %c1_83 = arith.constant 1 : index
    %c0_84 = arith.constant 0 : index
    %c0_85 = arith.constant 0 : index
    %222 = vector.load %arg5[%c1_83, %c0_84, %c0_85] : memref<2x8x32xbf16, #tpu.memory_space<vmem>>, vector<1x8x32xbf16>
    %223 = vector.shape_cast %222 : vector<1x8x32xbf16> to vector<8x32xbf16>
    %224 = vector.shape_cast %221 : vector<8x32xbf16> to vector<1x8x32xbf16>
    tpu.vector_store %arg5[%c1_83, %c0_84, %c0_85], %224 {strides = array<i32>} : memref<2x8x32xbf16, #tpu.memory_space<vmem>>, vector<1x8x32xbf16>,
    return
  }
  func.func @transform_0(%arg0: i32) -> (i32, i32, i32) {
    %c0_i32 = arith.constant 0 : i32
    %c0_i32_0 = arith.constant 0 : i32
    %c0_i32_1 = arith.constant 0 : i32
    return %arg0, %c0_i32, %c0_i32_0 : i32, i32, i32
  }
  func.func @transform_1(%arg0: i32) -> (i32, i32, i32) {
    %c0_i32 = arith.constant 0 : i32
    %c0_i32_0 = arith.constant 0 : i32
    %c0_i32_1 = arith.constant 0 : i32
    return %arg0, %c0_i32, %c0_i32_0 : i32, i32, i32
  }
  func.func @transform_2(%arg0: i32) -> (i32, i32) {
    %c0_i32 = arith.constant 0 : i32
    %c0_i32_0 = arith.constant 0 : i32
    %c0_i32_1 = arith.constant 0 : i32
    return %c0_i32, %c0_i32_0 : i32, i32
  }
  func.func @transform_3(%arg0: i32) -> (i32, i32) {
    %c0_i32 = arith.constant 0 : i32
    %c0_i32_0 = arith.constant 0 : i32
    %c0_i32_1 = arith.constant 0 : i32
    return %c0_i32, %c0_i32_0 : i32, i32
  }
  func.func @transform_4(%arg0: i32) -> (i32, i32, i32) {
    %c0_i32 = arith.constant 0 : i32
    %c0_i32_0 = arith.constant 0 : i32
    %c0_i32_1 = arith.constant 0 : i32
    return %arg0, %c0_i32, %c0_i32_0 : i32, i32, i32
  }
}

module attributes {stable_mosaic.version = 11 : i64} {
  func.func @_ln_linear_kernel(%arg0: i32, %arg1: i32, %arg2: memref<32x32xbf16, #tpu.memory_space<vmem>>, %arg3: memref<1x32xf32, #tpu.memory_space<vmem>>, %arg4: memref<1x32xf32, #tpu.memory_space<vmem>>, %arg5: memref<32x96xbf16, #tpu.memory_space<vmem>>, %arg6: memref<1x96xf32, #tpu.memory_space<vmem>>, %arg7: memref<32x96xbf16, #tpu.memory_space<vmem>>, %arg8: memref<32x32xbf16, #tpu.memory_space<vmem>>) attributes {dimension_semantics = [#tpu.dimension_semantics<parallel>, #tpu.dimension_semantics<arbitrary>], iteration_bounds = array<i64: 1, 1>, scalar_prefetch = 0 : i64, scratch_operands = 1 : i64, tpu.core_type = #tpu.core_type<tc>, window_params = [{transform_indices = @transform_0, window_bounds = array<i64: 32, 32>}, {pipeline_mode = #tpu.pipeline_mode<synchronous>, transform_indices = @transform_1, window_bounds = array<i64: 1, 32>}, {pipeline_mode = #tpu.pipeline_mode<synchronous>, transform_indices = @transform_2, window_bounds = array<i64: 1, 32>}, {transform_indices = @transform_3, window_bounds = array<i64: 32, 96>}, {transform_indices = @transform_4, window_bounds = array<i64: 1, 96>}, {transform_indices = @transform_5, window_bounds = array<i64: 32, 96>}]} {
    %c0_i32 = arith.constant 0 : i32
    %0 = arith.cmpi eq, %arg1, %c0_i32 : i32
    %1 = arith.extui %0 : i1 to i32
    %c0_i32_0 = arith.constant 0 : i32
    %2 = arith.cmpi ne, %1, %c0_i32_0 : i32
    scf.if %2 {
      %c0_8 = arith.constant 0 : index
      %c0_9 = arith.constant 0 : index
      %11 = vector.load %arg2[%c0_8, %c0_9] : memref<32x32xbf16, #tpu.memory_space<vmem>>, vector<32x32xbf16>
      %12 = arith.extf %11 : vector<32x32xbf16> to vector<32x32xf32>
      %cst_10 = arith.constant dense<0.000000e+00> : vector<32xf32>
      %13 = vector.multi_reduction <add>, %12, %cst_10 [1] : vector<32x32xf32> to vector<32xf32>
      %14 = vector.shape_cast %13 : vector<32xf32> to vector<32x1xf32>
      %cst_11 = arith.constant 3.200000e+01 : f32
      %15 = vector.broadcast %cst_11 : f32 to vector<32x1xf32>
      %16 = arith.divf %14, %15 : vector<32x1xf32>
      %17 = vector.broadcast %16 : vector<32x1xf32> to vector<32x32xf32>
      %18 = arith.subf %12, %17 : vector<32x32xf32>
      %19 = arith.mulf %18, %18 : vector<32x32xf32>
      %cst_12 = arith.constant dense<0.000000e+00> : vector<32xf32>
      %20 = vector.multi_reduction <add>, %19, %cst_12 [1] : vector<32x32xf32> to vector<32xf32>
      %21 = vector.shape_cast %20 : vector<32xf32> to vector<32x1xf32>
      %cst_13 = arith.constant 3.200000e+01 : f32
      %22 = vector.broadcast %cst_13 : f32 to vector<32x1xf32>
      %23 = arith.divf %21, %22 : vector<32x1xf32>
      %24 = vector.broadcast %16 : vector<32x1xf32> to vector<32x32xf32>
      %25 = arith.subf %12, %24 : vector<32x32xf32>
      %cst_14 = arith.constant 9.99999997E-7 : f32
      %26 = vector.broadcast %cst_14 : f32 to vector<32x1xf32>
      %27 = arith.addf %23, %26 : vector<32x1xf32>
      %28 = math.rsqrt %27 : vector<32x1xf32>
      %29 = vector.broadcast %28 : vector<32x1xf32> to vector<32x32xf32>
      %30 = arith.mulf %25, %29 : vector<32x32xf32>
      %c0_15 = arith.constant 0 : index
      %c0_16 = arith.constant 0 : index
      %31 = vector.load %arg3[%c0_15, %c0_16] : memref<1x32xf32, #tpu.memory_space<vmem>>, vector<1x32xf32>
      %32 = vector.broadcast %31 : vector<1x32xf32> to vector<32x32xf32>
      %33 = arith.mulf %30, %32 : vector<32x32xf32>
      %c0_17 = arith.constant 0 : index
      %c0_18 = arith.constant 0 : index
      %34 = vector.load %arg4[%c0_17, %c0_18] : memref<1x32xf32, #tpu.memory_space<vmem>>, vector<1x32xf32>
      %35 = vector.broadcast %34 : vector<1x32xf32> to vector<32x32xf32>
      %36 = arith.addf %33, %35 : vector<32x32xf32>
      %37 = arith.truncf %36 : vector<32x32xf32> to vector<32x32xbf16>
      %c0_19 = arith.constant 0 : index
      %c0_20 = arith.constant 0 : index
      %38 = vector.load %arg8[%c0_19, %c0_20] : memref<32x32xbf16, #tpu.memory_space<vmem>>, vector<32x32xbf16>
      tpu.vector_store %arg8[%c0_19, %c0_20], %37 {strides = array<i32>} : memref<32x32xbf16, #tpu.memory_space<vmem>>, vector<32x32xbf16>,
    } else {
    }
    %c0 = arith.constant 0 : index
    %c0_1 = arith.constant 0 : index
    %3 = vector.load %arg8[%c0, %c0_1] : memref<32x32xbf16, #tpu.memory_space<vmem>>, vector<32x32xbf16>
    %c0_2 = arith.constant 0 : index
    %c0_3 = arith.constant 0 : index
    %4 = vector.load %arg5[%c0_2, %c0_3] : memref<32x96xbf16, #tpu.memory_space<vmem>>, vector<32x96xbf16>
    %cst = arith.constant dense<0.000000e+00> : vector<32x96xf32>
    %5 = tpu.matmul %3, %4, %cst {dimension_numbers = #tpu.dot_dimension_numbers<[1], [0], [0], [1], [0, 0, 1, 1], [], []>} : vector<32x32xbf16>, vector<32x96xbf16>, vector<32x96xf32> -> vector<32x96xf32>
    %c0_4 = arith.constant 0 : index
    %c0_5 = arith.constant 0 : index
    %6 = vector.load %arg6[%c0_4, %c0_5] : memref<1x96xf32, #tpu.memory_space<vmem>>, vector<1x96xf32>
    %7 = vector.broadcast %6 : vector<1x96xf32> to vector<32x96xf32>
    %8 = arith.addf %5, %7 : vector<32x96xf32>
    %9 = arith.truncf %8 : vector<32x96xf32> to vector<32x96xbf16>
    %c0_6 = arith.constant 0 : index
    %c0_7 = arith.constant 0 : index
    %10 = vector.load %arg7[%c0_6, %c0_7] : memref<32x96xbf16, #tpu.memory_space<vmem>>, vector<32x96xbf16>
    tpu.vector_store %arg7[%c0_6, %c0_7], %9 {strides = array<i32>} : memref<32x96xbf16, #tpu.memory_space<vmem>>, vector<32x96xbf16>,
    return
  }
  func.func @transform_0(%arg0: i32, %arg1: i32) -> (i32, i32) {
    %c0_i32 = arith.constant 0 : i32
    %c0_i32_0 = arith.constant 0 : i32
    return %arg0, %c0_i32 : i32, i32
  }
  func.func @transform_1(%arg0: i32, %arg1: i32) -> (i32, i32) {
    %c0_i32 = arith.constant 0 : i32
    %c0_i32_0 = arith.constant 0 : i32
    %c0_i32_1 = arith.constant 0 : i32
    return %c0_i32, %c0_i32_0 : i32, i32
  }
  func.func @transform_2(%arg0: i32, %arg1: i32) -> (i32, i32) {
    %c0_i32 = arith.constant 0 : i32
    %c0_i32_0 = arith.constant 0 : i32
    %c0_i32_1 = arith.constant 0 : i32
    return %c0_i32, %c0_i32_0 : i32, i32
  }
  func.func @transform_3(%arg0: i32, %arg1: i32) -> (i32, i32) {
    %c0_i32 = arith.constant 0 : i32
    %c0_i32_0 = arith.constant 0 : i32
    return %c0_i32, %arg1 : i32, i32
  }
  func.func @transform_4(%arg0: i32, %arg1: i32) -> (i32, i32) {
    %c0_i32 = arith.constant 0 : i32
    %c0_i32_0 = arith.constant 0 : i32
    return %c0_i32, %arg1 : i32, i32
  }
  func.func @transform_5(%arg0: i32, %arg1: i32) -> (i32, i32) {
    %c0_i32 = arith.constant 0 : i32
    return %arg0, %arg1 : i32, i32
  }
}

module attributes {stable_mosaic.version = 11 : i64} {
  func.func @_ln_linear_kernel(%arg0: i32, %arg1: i32, %arg2: memref<32x32xbf16, #tpu.memory_space<vmem>>, %arg3: memref<1x32xf32, #tpu.memory_space<vmem>>, %arg4: memref<1x32xf32, #tpu.memory_space<vmem>>, %arg5: memref<32x128xbf16, #tpu.memory_space<vmem>>, %arg6: memref<1x128xf32, #tpu.memory_space<vmem>>, %arg7: memref<32x128xbf16, #tpu.memory_space<vmem>>, %arg8: memref<32x32xbf16, #tpu.memory_space<vmem>>) attributes {dimension_semantics = [#tpu.dimension_semantics<parallel>, #tpu.dimension_semantics<arbitrary>], iteration_bounds = array<i64: 1, 1>, scalar_prefetch = 0 : i64, scratch_operands = 1 : i64, tpu.core_type = #tpu.core_type<tc>, window_params = [{transform_indices = @transform_0, window_bounds = array<i64: 32, 32>}, {pipeline_mode = #tpu.pipeline_mode<synchronous>, transform_indices = @transform_1, window_bounds = array<i64: 1, 32>}, {pipeline_mode = #tpu.pipeline_mode<synchronous>, transform_indices = @transform_2, window_bounds = array<i64: 1, 32>}, {transform_indices = @transform_3, window_bounds = array<i64: 32, 128>}, {transform_indices = @transform_4, window_bounds = array<i64: 1, 128>}, {transform_indices = @transform_5, window_bounds = array<i64: 32, 128>}]} {
    %c0_i32 = arith.constant 0 : i32
    %0 = arith.cmpi eq, %arg1, %c0_i32 : i32
    %1 = arith.extui %0 : i1 to i32
    %c0_i32_0 = arith.constant 0 : i32
    %2 = arith.cmpi ne, %1, %c0_i32_0 : i32
    scf.if %2 {
      %c0_12 = arith.constant 0 : index
      %c0_13 = arith.constant 0 : index
      %24 = vector.load %arg2[%c0_12, %c0_13] : memref<32x32xbf16, #tpu.memory_space<vmem>>, vector<32x32xbf16>
      %25 = arith.extf %24 : vector<32x32xbf16> to vector<32x32xf32>
      %cst_14 = arith.constant dense<0.000000e+00> : vector<32xf32>
      %26 = vector.multi_reduction <add>, %25, %cst_14 [1] : vector<32x32xf32> to vector<32xf32>
      %27 = vector.shape_cast %26 : vector<32xf32> to vector<32x1xf32>
      %cst_15 = arith.constant 3.200000e+01 : f32
      %28 = vector.broadcast %cst_15 : f32 to vector<32x1xf32>
      %29 = arith.divf %27, %28 : vector<32x1xf32>
      %30 = vector.broadcast %29 : vector<32x1xf32> to vector<32x32xf32>
      %31 = arith.subf %25, %30 : vector<32x32xf32>
      %32 = arith.mulf %31, %31 : vector<32x32xf32>
      %cst_16 = arith.constant dense<0.000000e+00> : vector<32xf32>
      %33 = vector.multi_reduction <add>, %32, %cst_16 [1] : vector<32x32xf32> to vector<32xf32>
      %34 = vector.shape_cast %33 : vector<32xf32> to vector<32x1xf32>
      %cst_17 = arith.constant 3.200000e+01 : f32
      %35 = vector.broadcast %cst_17 : f32 to vector<32x1xf32>
      %36 = arith.divf %34, %35 : vector<32x1xf32>
      %37 = vector.broadcast %29 : vector<32x1xf32> to vector<32x32xf32>
      %38 = arith.subf %25, %37 : vector<32x32xf32>
      %cst_18 = arith.constant 9.99999997E-7 : f32
      %39 = vector.broadcast %cst_18 : f32 to vector<32x1xf32>
      %40 = arith.addf %36, %39 : vector<32x1xf32>
      %41 = math.rsqrt %40 : vector<32x1xf32>
      %42 = vector.broadcast %41 : vector<32x1xf32> to vector<32x32xf32>
      %43 = arith.mulf %38, %42 : vector<32x32xf32>
      %c0_19 = arith.constant 0 : index
      %c0_20 = arith.constant 0 : index
      %44 = vector.load %arg3[%c0_19, %c0_20] : memref<1x32xf32, #tpu.memory_space<vmem>>, vector<1x32xf32>
      %45 = vector.broadcast %44 : vector<1x32xf32> to vector<32x32xf32>
      %46 = arith.mulf %43, %45 : vector<32x32xf32>
      %c0_21 = arith.constant 0 : index
      %c0_22 = arith.constant 0 : index
      %47 = vector.load %arg4[%c0_21, %c0_22] : memref<1x32xf32, #tpu.memory_space<vmem>>, vector<1x32xf32>
      %48 = vector.broadcast %47 : vector<1x32xf32> to vector<32x32xf32>
      %49 = arith.addf %46, %48 : vector<32x32xf32>
      %50 = arith.truncf %49 : vector<32x32xf32> to vector<32x32xbf16>
      %c0_23 = arith.constant 0 : index
      %c0_24 = arith.constant 0 : index
      %51 = vector.load %arg8[%c0_23, %c0_24] : memref<32x32xbf16, #tpu.memory_space<vmem>>, vector<32x32xbf16>
      tpu.vector_store %arg8[%c0_23, %c0_24], %50 {strides = array<i32>} : memref<32x32xbf16, #tpu.memory_space<vmem>>, vector<32x32xbf16>,
    } else {
    }
    %c0 = arith.constant 0 : index
    %c0_1 = arith.constant 0 : index
    %3 = vector.load %arg8[%c0, %c0_1] : memref<32x32xbf16, #tpu.memory_space<vmem>>, vector<32x32xbf16>
    %c0_2 = arith.constant 0 : index
    %c0_3 = arith.constant 0 : index
    %4 = vector.load %arg5[%c0_2, %c0_3] : memref<32x128xbf16, #tpu.memory_space<vmem>>, vector<32x128xbf16>
    %cst = arith.constant dense<0.000000e+00> : vector<32x128xf32>
    %5 = tpu.matmul %3, %4, %cst {dimension_numbers = #tpu.dot_dimension_numbers<[1], [0], [0], [1], [0, 0, 1, 1], [], []>} : vector<32x32xbf16>, vector<32x128xbf16>, vector<32x128xf32> -> vector<32x128xf32>
    %c0_4 = arith.constant 0 : index
    %c0_5 = arith.constant 0 : index
    %6 = vector.load %arg6[%c0_4, %c0_5] : memref<1x128xf32, #tpu.memory_space<vmem>>, vector<1x128xf32>
    %7 = vector.broadcast %6 : vector<1x128xf32> to vector<32x128xf32>
    %8 = arith.addf %5, %7 : vector<32x128xf32>
    %9 = arith.mulf %8, %8 : vector<32x128xf32>
    %10 = arith.mulf %8, %9 : vector<32x128xf32>
    %cst_6 = arith.constant 4.471500e-02 : f32
    %11 = vector.broadcast %cst_6 : f32 to vector<32x128xf32>
    %12 = arith.mulf %11, %10 : vector<32x128xf32>
    %13 = arith.addf %8, %12 : vector<32x128xf32>
    %cst_7 = arith.constant 0.797884583 : f32
    %14 = vector.broadcast %cst_7 : f32 to vector<32x128xf32>
    %15 = arith.mulf %14, %13 : vector<32x128xf32>
    %16 = math.tanh %15 : vector<32x128xf32>
    %cst_8 = arith.constant 1.000000e+00 : f32
    %17 = vector.broadcast %cst_8 : f32 to vector<32x128xf32>
    %18 = arith.addf %17, %16 : vector<32x128xf32>
    %cst_9 = arith.constant 5.000000e-01 : f32
    %19 = vector.broadcast %cst_9 : f32 to vector<32x128xf32>
    %20 = arith.mulf %19, %18 : vector<32x128xf32>
    %21 = arith.mulf %8, %20 : vector<32x128xf32>
    %22 = arith.truncf %21 : vector<32x128xf32> to vector<32x128xbf16>
    %c0_10 = arith.constant 0 : index
    %c0_11 = arith.constant 0 : index
    %23 = vector.load %arg7[%c0_10, %c0_11] : memref<32x128xbf16, #tpu.memory_space<vmem>>, vector<32x128xbf16>
    tpu.vector_store %arg7[%c0_10, %c0_11], %22 {strides = array<i32>} : memref<32x128xbf16, #tpu.memory_space<vmem>>, vector<32x128xbf16>,
    return
  }
  func.func @transform_0(%arg0: i32, %arg1: i32) -> (i32, i32) {
    %c0_i32 = arith.constant 0 : i32
    %c0_i32_0 = arith.constant 0 : i32
    return %arg0, %c0_i32 : i32, i32
  }
  func.func @transform_1(%arg0: i32, %arg1: i32) -> (i32, i32) {
    %c0_i32 = arith.constant 0 : i32
    %c0_i32_0 = arith.constant 0 : i32
    %c0_i32_1 = arith.constant 0 : i32
    return %c0_i32, %c0_i32_0 : i32, i32
  }
  func.func @transform_2(%arg0: i32, %arg1: i32) -> (i32, i32) {
    %c0_i32 = arith.constant 0 : i32
    %c0_i32_0 = arith.constant 0 : i32
    %c0_i32_1 = arith.constant 0 : i32
    return %c0_i32, %c0_i32_0 : i32, i32
  }
  func.func @transform_3(%arg0: i32, %arg1: i32) -> (i32, i32) {
    %c0_i32 = arith.constant 0 : i32
    %c0_i32_0 = arith.constant 0 : i32
    return %c0_i32, %arg1 : i32, i32
  }
  func.func @transform_4(%arg0: i32, %arg1: i32) -> (i32, i32) {
    %c0_i32 = arith.constant 0 : i32
    %c0_i32_0 = arith.constant 0 : i32
    return %c0_i32, %arg1 : i32, i32
  }
  func.func @transform_5(%arg0: i32, %arg1: i32) -> (i32, i32) {
    %c0_i32 = arith.constant 0 : i32
    return %arg0, %arg1 : i32, i32
  }
}

module attributes {stable_mosaic.version = 11 : i64} {
  func.func @_linear_residual_kernel(%arg0: i32, %arg1: i32, %arg2: i32, %arg3: memref<32x128xbf16, #tpu.memory_space<vmem>>, %arg4: memref<128x32xbf16, #tpu.memory_space<vmem>>, %arg5: memref<1x32xf32, #tpu.memory_space<vmem>>, %arg6: memref<32x32xbf16, #tpu.memory_space<vmem>>, %arg7: memref<32x32xbf16, #tpu.memory_space<vmem>>, %arg8: memref<32x32xf32, #tpu.memory_space<vmem>>) attributes {dimension_semantics = [#tpu.dimension_semantics<parallel>, #tpu.dimension_semantics<parallel>, #tpu.dimension_semantics<arbitrary>], iteration_bounds = array<i64: 1, 1, 1>, scalar_prefetch = 0 : i64, scratch_operands = 1 : i64, tpu.core_type = #tpu.core_type<tc>, window_params = [{transform_indices = @transform_0, window_bounds = array<i64: 32, 128>}, {transform_indices = @transform_1, window_bounds = array<i64: 128, 32>}, {transform_indices = @transform_2, window_bounds = array<i64: 1, 32>}, {transform_indices = @transform_3, window_bounds = array<i64: 32, 32>}, {transform_indices = @transform_4, window_bounds = array<i64: 32, 32>}]} {
    %c0_i32 = arith.constant 0 : i32
    %0 = arith.cmpi eq, %arg2, %c0_i32 : i32
    %1 = arith.extui %0 : i1 to i32
    %c0_i32_0 = arith.constant 0 : i32
    %2 = arith.cmpi ne, %1, %c0_i32_0 : i32
    scf.if %2 {
      %cst_10 = arith.constant 0.000000e+00 : f32
      %12 = vector.broadcast %cst_10 : f32 to vector<32x32xf32>
      %c0_11 = arith.constant 0 : index
      %c0_12 = arith.constant 0 : index
      %13 = vector.load %arg8[%c0_11, %c0_12] : memref<32x32xf32, #tpu.memory_space<vmem>>, vector<32x32xf32>
      tpu.vector_store %arg8[%c0_11, %c0_12], %12 {strides = array<i32>} : memref<32x32xf32, #tpu.memory_space<vmem>>, vector<32x32xf32>,
    } else {
    }
    %c0 = arith.constant 0 : index
    %c0_1 = arith.constant 0 : index
    %3 = vector.load %arg8[%c0, %c0_1] : memref<32x32xf32, #tpu.memory_space<vmem>>, vector<32x32xf32>
    %c0_2 = arith.constant 0 : index
    %c0_3 = arith.constant 0 : index
    %4 = vector.load %arg3[%c0_2, %c0_3] : memref<32x128xbf16, #tpu.memory_space<vmem>>, vector<32x128xbf16>
    %c0_4 = arith.constant 0 : index
    %c0_5 = arith.constant 0 : index
    %5 = vector.load %arg4[%c0_4, %c0_5] : memref<128x32xbf16, #tpu.memory_space<vmem>>, vector<128x32xbf16>
    %cst = arith.constant dense<0.000000e+00> : vector<32x32xf32>
    %6 = tpu.matmul %4, %5, %cst {dimension_numbers = #tpu.dot_dimension_numbers<[1], [0], [0], [1], [0, 0, 1, 1], [], []>} : vector<32x128xbf16>, vector<128x32xbf16>, vector<32x32xf32> -> vector<32x32xf32>
    %7 = arith.addf %3, %6 : vector<32x32xf32>
    %c0_6 = arith.constant 0 : index
    %c0_7 = arith.constant 0 : index
    %8 = vector.load %arg8[%c0_6, %c0_7] : memref<32x32xf32, #tpu.memory_space<vmem>>, vector<32x32xf32>
    tpu.vector_store %arg8[%c0_6, %c0_7], %7 {strides = array<i32>} : memref<32x32xf32, #tpu.memory_space<vmem>>, vector<32x32xf32>,
    %c0_i32_8 = arith.constant 0 : i32
    %9 = arith.cmpi eq, %arg2, %c0_i32_8 : i32
    %10 = arith.extui %9 : i1 to i32
    %c0_i32_9 = arith.constant 0 : i32
    %11 = arith.cmpi ne, %10, %c0_i32_9 : i32
    scf.if %11 {
      %c0_10 = arith.constant 0 : index
      %c0_11 = arith.constant 0 : index
      %12 = vector.load %arg8[%c0_10, %c0_11] : memref<32x32xf32, #tpu.memory_space<vmem>>, vector<32x32xf32>
      %c0_12 = arith.constant 0 : index
      %c0_13 = arith.constant 0 : index
      %13 = vector.load %arg5[%c0_12, %c0_13] : memref<1x32xf32, #tpu.memory_space<vmem>>, vector<1x32xf32>
      %14 = vector.broadcast %13 : vector<1x32xf32> to vector<32x32xf32>
      %15 = arith.addf %12, %14 : vector<32x32xf32>
      %c0_14 = arith.constant 0 : index
      %c0_15 = arith.constant 0 : index
      %16 = vector.load %arg6[%c0_14, %c0_15] : memref<32x32xbf16, #tpu.memory_space<vmem>>, vector<32x32xbf16>
      %17 = arith.extf %16 : vector<32x32xbf16> to vector<32x32xf32>
      %18 = arith.addf %15, %17 : vector<32x32xf32>
      %19 = arith.truncf %18 : vector<32x32xf32> to vector<32x32xbf16>
      %c0_16 = arith.constant 0 : index
      %c0_17 = arith.constant 0 : index
      %20 = vector.load %arg7[%c0_16, %c0_17] : memref<32x32xbf16, #tpu.memory_space<vmem>>, vector<32x32xbf16>
      tpu.vector_store %arg7[%c0_16, %c0_17], %19 {strides = array<i32>} : memref<32x32xbf16, #tpu.memory_space<vmem>>, vector<32x32xbf16>,
    } else {
    }
    return
  }
  func.func @transform_0(%arg0: i32, %arg1: i32, %arg2: i32) -> (i32, i32) {
    %c0_i32 = arith.constant 0 : i32
    return %arg0, %arg2 : i32, i32
  }
  func.func @transform_1(%arg0: i32, %arg1: i32, %arg2: i32) -> (i32, i32) {
    %c0_i32 = arith.constant 0 : i32
    return %arg2, %arg1 : i32, i32
  }
  func.func @transform_2(%arg0: i32, %arg1: i32, %arg2: i32) -> (i32, i32) {
    %c0_i32 = arith.constant 0 : i32
    %c0_i32_0 = arith.constant 0 : i32
    return %c0_i32, %arg1 : i32, i32
  }
  func.func @transform_3(%arg0: i32, %arg1: i32, %arg2: i32) -> (i32, i32) {
    %c0_i32 = arith.constant 0 : i32
    return %arg0, %arg1 : i32, i32
  }
  func.func @transform_4(%arg0: i32, %arg1: i32, %arg2: i32) -> (i32, i32) {
    %c0_i32 = arith.constant 0 : i32
    return %arg0, %arg1 : i32, i32
  }
}

module attributes {stable_mosaic.version = 11 : i64} {
  func.func @_layernorm_kernel(%arg0: i32, %arg1: memref<32x32xbf16, #tpu.memory_space<vmem>>, %arg2: memref<1x32xf32, #tpu.memory_space<vmem>>, %arg3: memref<1x32xf32, #tpu.memory_space<vmem>>, %arg4: memref<32x32xbf16, #tpu.memory_space<vmem>>) attributes {dimension_semantics = [#tpu.dimension_semantics<parallel>], iteration_bounds = array<i64: 1>, scalar_prefetch = 0 : i64, scratch_operands = 0 : i64, tpu.core_type = #tpu.core_type<tc>, window_params = [{transform_indices = @transform_0, window_bounds = array<i64: 32, 32>}, {pipeline_mode = #tpu.pipeline_mode<synchronous>, transform_indices = @transform_1, window_bounds = array<i64: 1, 32>}, {pipeline_mode = #tpu.pipeline_mode<synchronous>, transform_indices = @transform_2, window_bounds = array<i64: 1, 32>}, {transform_indices = @transform_3, window_bounds = array<i64: 32, 32>}]} {
    %c0 = arith.constant 0 : index
    %c0_0 = arith.constant 0 : index
    %0 = vector.load %arg1[%c0, %c0_0] : memref<32x32xbf16, #tpu.memory_space<vmem>>, vector<32x32xbf16>
    %1 = arith.extf %0 : vector<32x32xbf16> to vector<32x32xf32>
    %cst = arith.constant dense<0.000000e+00> : vector<32xf32>
    %2 = vector.multi_reduction <add>, %1, %cst [1] : vector<32x32xf32> to vector<32xf32>
    %3 = vector.shape_cast %2 : vector<32xf32> to vector<32x1xf32>
    %cst_1 = arith.constant 3.200000e+01 : f32
    %4 = vector.broadcast %cst_1 : f32 to vector<32x1xf32>
    %5 = arith.divf %3, %4 : vector<32x1xf32>
    %6 = vector.broadcast %5 : vector<32x1xf32> to vector<32x32xf32>
    %7 = arith.subf %1, %6 : vector<32x32xf32>
    %8 = arith.mulf %7, %7 : vector<32x32xf32>
    %cst_2 = arith.constant dense<0.000000e+00> : vector<32xf32>
    %9 = vector.multi_reduction <add>, %8, %cst_2 [1] : vector<32x32xf32> to vector<32xf32>
    %10 = vector.shape_cast %9 : vector<32xf32> to vector<32x1xf32>
    %cst_3 = arith.constant 3.200000e+01 : f32
    %11 = vector.broadcast %cst_3 : f32 to vector<32x1xf32>
    %12 = arith.divf %10, %11 : vector<32x1xf32>
    %13 = vector.broadcast %5 : vector<32x1xf32> to vector<32x32xf32>
    %14 = arith.subf %1, %13 : vector<32x32xf32>
    %cst_4 = arith.constant 9.99999997E-7 : f32
    %15 = vector.broadcast %cst_4 : f32 to vector<32x1xf32>
    %16 = arith.addf %12, %15 : vector<32x1xf32>
    %17 = math.rsqrt %16 : vector<32x1xf32>
    %18 = vector.broadcast %17 : vector<32x1xf32> to vector<32x32xf32>
    %19 = arith.mulf %14, %18 : vector<32x32xf32>
    %c0_5 = arith.constant 0 : index
    %c0_6 = arith.constant 0 : index
    %20 = vector.load %arg2[%c0_5, %c0_6] : memref<1x32xf32, #tpu.memory_space<vmem>>, vector<1x32xf32>
    %21 = vector.broadcast %20 : vector<1x32xf32> to vector<32x32xf32>
    %22 = arith.mulf %19, %21 : vector<32x32xf32>
    %c0_7 = arith.constant 0 : index
    %c0_8 = arith.constant 0 : index
    %23 = vector.load %arg3[%c0_7, %c0_8] : memref<1x32xf32, #tpu.memory_space<vmem>>, vector<1x32xf32>
    %24 = vector.broadcast %23 : vector<1x32xf32> to vector<32x32xf32>
    %25 = arith.addf %22, %24 : vector<32x32xf32>
    %26 = arith.truncf %25 : vector<32x32xf32> to vector<32x32xbf16>
    %c0_9 = arith.constant 0 : index
    %c0_10 = arith.constant 0 : index
    %27 = vector.load %arg4[%c0_9, %c0_10] : memref<32x32xbf16, #tpu.memory_space<vmem>>, vector<32x32xbf16>
    tpu.vector_store %arg4[%c0_9, %c0_10], %26 {strides = array<i32>} : memref<32x32xbf16, #tpu.memory_space<vmem>>, vector<32x32xbf16>,
    return
  }
  func.func @transform_0(%arg0: i32) -> (i32, i32) {
    %c0_i32 = arith.constant 0 : i32
    %c0_i32_0 = arith.constant 0 : i32
    return %arg0, %c0_i32 : i32, i32
  }
  func.func @transform_1(%arg0: i32) -> (i32, i32) {
    %c0_i32 = arith.constant 0 : i32
    %c0_i32_0 = arith.constant 0 : i32
    %c0_i32_1 = arith.constant 0 : i32
    return %c0_i32, %c0_i32_0 : i32, i32
  }
  func.func @transform_2(%arg0: i32) -> (i32, i32) {
    %c0_i32 = arith.constant 0 : i32
    %c0_i32_0 = arith.constant 0 : i32
    %c0_i32_1 = arith.constant 0 : i32
    return %c0_i32, %c0_i32_0 : i32, i32
  }
  func.func @transform_3(%arg0: i32) -> (i32, i32) {
    %c0_i32 = arith.constant 0 : i32
    %c0_i32_0 = arith.constant 0 : i32
    return %arg0, %c0_i32 : i32, i32
  }
}

</mosaic_0001>

<llo_original>
// kernel: vit_forward.11
$region0: #{vit_forward.11}
  #allocation0 [shape = 'u32[]', space=smem, size = 0x4, offset = 0x4, fixed_abs, tag = 'smem constant byte address 0x4 - core index']
  #allocation1 [shape = 'u32[144,128]{1,0:T(1,128)}', space=vmem, size = 0x12000, scoped, tag = 'internal scratch']
  #allocation2 [shape = 'bf16[32,32]{1,0:T(16,128)(2,1)}', space=vmem, size = 0x2000, scoped, tag = 'scratch operand']
  %s0 = inlined_call_operand.vmem [shape: bf16[32,32], index: 0, kind: input, shape index: {}]
  %s1 = inlined_call_operand.vmem [shape: f32[1,32], index: 1, kind: input, shape index: {}]
  %s2 = inlined_call_operand.vmem [shape: f32[1,32], index: 2, kind: input, shape index: {}]
  %s3 = inlined_call_operand.vmem [shape: bf16[32,96], index: 3, kind: input, shape index: {}]
  %s4 = inlined_call_operand.vmem [shape: f32[1,96], index: 4, kind: input, shape index: {}]
  %s5 = inlined_call_operand.vmem [shape: bf16[32,96], index: 5, kind: output, shape index: {}]
  %s6 = sld [smem:[#allocation0]]
  $region34: #{vit_forward.11} parent=0
    _
  %s8 = ssub.s32 1, %s6
  %s9 = scalar_select 0, %s8, %s6
  // Predicated region
  $region2: #{vit_forward.11} parent=0 // pred_check
    _
  $region3: #{vit_forward.11} parent=0 // pred_check_branch
    %11 = sbr.rel (0) target = $region5
  $region4: #{vit_forward.11} parent=0 // pred_region
    _
  $region5: #{vit_forward.11} parent=0 // pred_fallthru
    _
  // Predicated region
  $region6: #{vit_forward.11} parent=0 // pred_check
    _
  $region7: #{vit_forward.11} parent=0 // pred_check_branch
    %13 = sbr.rel (0) target = $region9
  $region8: #{vit_forward.11} parent=0 // pred_region
    _
  $region9: #{vit_forward.11} parent=0 // pred_fallthru
    _
  // Predicated region
  $region10: #{vit_forward.11} parent=0 // pred_check
    _
  $region11: #{vit_forward.11} parent=0 // pred_check_branch
    %15 = sbr.rel (0) target = $region13
  $region12: #{vit_forward.11} parent=0 // pred_region
    _
  $region13: #{vit_forward.11} parent=0 // pred_fallthru
    _
  // Predicated region
  $region14: #{vit_forward.11} parent=0 // pred_check
    _
  $region15: #{vit_forward.11} parent=0 // pred_check_branch
    %17 = sbr.rel (0) target = $region17
  $region16: #{vit_forward.11} parent=0 // pred_region
    _
  $region17: #{vit_forward.11} parent=0 // pred_fallthru
    _
  // Predicated region
  $region18: #{vit_forward.11} parent=0 // pred_check
    _
  $region19: #{vit_forward.11} parent=0 // pred_check_branch
    %19 = sbr.rel (0) target = $region21
  $region20: #{vit_forward.11} parent=0 // pred_region
    _
  $region21: #{vit_forward.11} parent=0 // pred_fallthru
    _
  %p21 = scmp.eq.s32.totalorder 0, 0
  // Predicated region
  $region22: #{vit_forward.11} parent=0 // pred_check
    %p22 = pneg %p21
  $region23: #{vit_forward.11} parent=0 // pred_check_branch
    %24 = sbr.rel (%p22) target = $region25
  $region24: #{vit_forward.11} parent=0 // pred_region
    %v25 = vld [vmem:[%s0] sm:$0xf]
    %v26 = vld [vmem:[%s0 + $0x4] sm:$0xf]
    %v27 = vld [vmem:[%s0 + $0x8] sm:$0xf]
    %v28 = vld [vmem:[%s0 + $0xc] sm:$0xf]
    %v29 = vunpack.c.l.bf16 %v25
    %v30 = vunpack.c.l.bf16 %v26
    %v31 = vunpack.c.l.bf16 %v27
    %v32 = vunpack.c.l.bf16 %v28
    %vm33 = vcmask 261120
    %v34 = vsel %vm33, %v29, 0.0
    %35 = vadd.xlane.f32.xlu0 %v34
    %v36 = vpop.xlane.xlu0 %35
    %v37 = vsel %vm33, %v30, 0.0
    %38 = vadd.xlane.f32.xlu0 %v37
    %v39 = vpop.xlane.xlu0 %38
    %v40 = vsel %vm33, %v31, 0.0
    %41 = vadd.xlane.f32.xlu0 %v40
    %v42 = vpop.xlane.xlu0 %41
    %v43 = vsel %vm33, %v32, 0.0
    %44 = vadd.xlane.f32.xlu0 %v43
    %v45 = vpop.xlane.xlu0 %44
    %v46 = vrcp.pop 32.0
    %v47 = vmul.f32 %v36, %v46
    %v48 = vmul.f32 %v39, %v46
    %v49 = vmul.f32 %v42, %v46
    %v50 = vmul.f32 %v45, %v46
    %v51 = vsub.f32 %v29, %v47
    %v52 = vsub.f32 %v30, %v48
    %v53 = vsub.f32 %v31, %v49
    %v54 = vsub.f32 %v32, %v50
    %v55 = vmul.f32 %v51, %v51
    %v56 = vmul.f32 %v52, %v52
    %v57 = vmul.f32 %v53, %v53
    %v58 = vmul.f32 %v54, %v54
    %v59 = vsel %vm33, %v55, 0.0
    %60 = vadd.xlane.f32.xlu0 %v59
    %v61 = vpop.xlane.xlu0 %60
    %v62 = vsel %vm33, %v56, 0.0
    %63 = vadd.xlane.f32.xlu0 %v62
    %v64 = vpop.xlane.xlu0 %63
    %v65 = vsel %vm33, %v57, 0.0
    %66 = vadd.xlane.f32.xlu0 %v65
    %v67 = vpop.xlane.xlu0 %66
    %v68 = vsel %vm33, %v58, 0.0
    %69 = vadd.xlane.f32.xlu0 %v68
    %v70 = vpop.xlane.xlu0 %69
    %v71 = vmul.f32 %v61, %v46
    %v72 = vmul.f32 %v64, %v46
    %v73 = vmul.f32 %v67, %v46
    %v74 = vmul.f32 %v70, %v46
    %v75 = vadd.f32 %v71, 1e-06
    %v76 = vadd.f32 %v72, 1e-06
    %v77 = vadd.f32 %v73, 1e-06
    %v78 = vadd.f32 %v74, 1e-06
    %v79 = vrsqrt.pop %v75
    %v80 = vrsqrt.pop %v76
    %v81 = vrsqrt.pop %v77
    %v82 = vrsqrt.pop %v78
    %v83 = vmul.f32 %v51, %v79
    %v84 = vmul.f32 %v52, %v80
    %v85 = vmul.f32 %v53, %v81
    %v86 = vmul.f32 %v54, %v82
    %v87 = vld [vmem:[%s1] sm:$0x1]
    %v89 = vlaneseq
    %v90 = vshrl.u32 %v89, 7
    %v91 = vsub.s32 0, %v90
    %v92 = vrot.slane %v87, %v91
    %v94 = vmul.f32 %v83, %v92
    %v95 = vmul.f32 %v84, %v92
    %v96 = vmul.f32 %v85, %v92
    %v97 = vmul.f32 %v86, %v92
    %v98 = vld [vmem:[%s2] sm:$0x1]
    %v100 = vlaneseq
    %v101 = vshrl.u32 %v100, 7
    %v102 = vsub.s32 0, %v101
    %v103 = vrot.slane %v98, %v102
    %v105 = vadd.f32 %v94, %v103
    %v106 = vadd.f32 %v95, %v103
    %v107 = vadd.f32 %v96, %v103
    %v108 = vadd.f32 %v97, %v103
    %v109 = vpack.c.bf16 %v106, %v105
    %v110 = vpack.c.bf16 %v108, %v107
    %111 = vst.msk [vmem:[#allocation2] sm:$0xff] %vm33, %v109
    %112 = vst.msk [vmem:[#allocation2 + $0x8] sm:$0xff] %vm33, %v110
  $region25: #{vit_forward.11} parent=0 // pred_fallthru
    _
  %v113 = vld [vmem:[#allocation2] sm:$0xff]
  %v114 = vld [vmem:[#allocation2 + $0x8] sm:$0xff]
  %v115 = vld [vmem:[%s3] sm:$0xf]
  %v116 = vld [vmem:[%s3 + $0x4] sm:$0xf]
  %v117 = vld [vmem:[%s3 + $0x8] sm:$0xf]
  %v118 = vld [vmem:[%s3 + $0xc] sm:$0xf]
  %v119 = vld [vmem:[%s4] sm:$0x1]
  %v121 = vlaneseq
  %v122 = vshrl.u32 %v121, 7
  %v123 = vsub.s32 0, %v122
  %v124 = vrot.slane %v119, %v123
  %v130 = vunpack.c.l.b16 %v115
  %v131 = vunpack.c.l.b16 %v116
  %v132 = vunpack.c.l.b16 %v117
  %v133 = vunpack.c.l.b16 %v118
  %v134 = vpack.c.b16 %v131, %v130
  %v135 = vpack.c.b16 %v133, %v132
  %vm138 = vcmask 261120
  %v140 = vsel %vm138, %v113, 0
  %v143 = vsel %vm138, %v114, 0
  %145 = vmatprep.subr.bf16.mxu0 0
  %146 = vmatpush1.bf16.msra.mxu0 %v134
  %147 = vmatprep.subr.bf16.mxu0 0
  %148 = vmatpush1.bf16.msra.mxu0 %v135
  %149 = vmatprep.subr.bf16.mxu0 0
  %150 = vmatpush1.bf16.msra.mxu0 0
  %151 = vmatprep.subr.bf16.mxu0 0
  %152 = vmatpush1.bf16.msra.mxu0 0
  %153 = vmatprep.subr.bf16.mxu0 0
  %154 = vmatpush1.bf16.msra.mxu0 0
  %155 = vmatprep.subr.bf16.mxu0 0
  %156 = vmatpush1.bf16.msra.mxu0 0
  %157 = vmatprep.subr.bf16.mxu0 0
  %158 = vmatpush1.bf16.msra.mxu0 0
  %159 = vmatprep.subr.bf16.mxu0 0
  %160 = vmatpush1.bf16.msra.mxu0 0
  %161 = vmatprep.subr.bf16.mxu0 0
  %162 = vmatpush1.bf16.msra.mxu0 0
  %163 = vmatprep.subr.bf16.mxu0 0
  %164 = vmatpush1.bf16.msra.mxu0 0
  %165 = vmatprep.subr.bf16.mxu0 0
  %166 = vmatpush1.bf16.msra.mxu0 0
  %167 = vmatprep.subr.bf16.mxu0 0
  %168 = vmatpush1.bf16.msra.mxu0 0
  %169 = vmatprep.subr.bf16.mxu0 0
  %170 = vmatpush1.bf16.msra.mxu0 0
  %171 = vmatprep.subr.bf16.mxu0 0
  %172 = vmatpush1.bf16.msra.mxu0 0
  %173 = vmatprep.subr.bf16.mxu0 0
  %174 = vmatpush1.bf16.msra.mxu0 0
  %175 = vmatprep.subr.bf16.mxu0 0
  %176 = vmatpush1.bf16.msra.mxu0 0
  %177 = vmatprep.mubr.bf16.mxu0 0
  %178 = vmatmul.mubr.bf16.gmra.mrb[0].mxu0 %v140
  %v179 = vpop.f32.mrb[0].mxu0
  %v180 = vadd.f32 %v124, %v179
  %v181 = vpop.f32.mrb[0].mxu0
  %v182 = vpop.f32.mrb[0].mxu0
  %v183 = vadd.f32 %v124, %v182
  %v184 = vpop.f32.mrb[0].mxu0
  %185 = vmatprep.mubr.bf16.mxu0 0
  %186 = vmatmul.mubr.bf16.gmra.mrb[0].mxu0 %v143
  %v187 = vpop.f32.mrb[0].mxu0
  %v188 = vadd.f32 %v124, %v187
  %v189 = vpop.f32.mrb[0].mxu0
  %v190 = vpop.f32.mrb[0].mxu0
  %v191 = vadd.f32 %v124, %v190
  %v192 = vpop.f32.mrb[0].mxu0
  %193 = vdwg.mxu0
  %v194 = vpack.c.bf16 %v183, %v180
  %v195 = vpack.c.bf16 %v191, %v188
  %v198 = vunpack.c.l.b16 %v194
  %v199 = vunpack.c.h.b16 %v194
  %v200 = vunpack.c.l.b16 %v195
  %v201 = vunpack.c.h.b16 %v195
  %v202 = vpack.c.b16 %v198, %v198
  %v203 = vpack.c.b16 %v199, %v199
  %v204 = vpack.c.b16 %v200, %v200
  %v205 = vpack.c.b16 %v201, %v201
  %vm210 = vcmask 781312
  %211 = vst.msk [vmem:[%s5] sm:$0xf] %vm210, %v202
  %212 = vst.msk [vmem:[%s5 + $0x4] sm:$0xf] %vm210, %v203
  %213 = vst.msk [vmem:[%s5 + $0x8] sm:$0xf] %vm210, %v204
  %214 = vst.msk [vmem:[%s5 + $0xc] sm:$0xf] %vm210, %v205
  // Predicated region
  $region26: #{vit_forward.11} parent=0 // pred_check
    _
  $region27: #{vit_forward.11} parent=0 // pred_check_branch
    %216 = sbr.rel (0) target = $region29
  $region28: #{vit_forward.11} parent=0 // pred_region
    _
  $region29: #{vit_forward.11} parent=0 // pred_fallthru
    _
  // Predicated region
  $region30: #{vit_forward.11} parent=0 // pred_check
    _
  $region31: #{vit_forward.11} parent=0 // pred_check_branch
    %218 = sbr.rel (0) target = $region33
  $region32: #{vit_forward.11} parent=0 // pred_region
    _
  $region33: #{vit_forward.11} parent=0 // pred_fallthru
    _

// kernel: vit_forward.10
$region0: #{vit_forward.10}
  #allocation0 [shape = 'u32[]', space=smem, size = 0x4, offset = 0x4, fixed_abs, tag = 'smem constant byte address 0x4 - core index']
  #allocation1 [shape = 'u32[144,128]{1,0:T(1,128)}', space=vmem, size = 0x12000, scoped, tag = 'internal scratch']
  #allocation2 [shape = 'f32[16,32]{1,0:T(8,128)}', space=vmem, size = 0x2000, scoped, tag = 'scratch operand']
  %s0 = inlined_call_operand.vmem [shape: bf16[16,192], index: 0, kind: input, shape index: {}]
  %s1 = inlined_call_operand.vmem [shape: bf16[192,32], index: 1, kind: input, shape index: {}]
  %s2 = inlined_call_operand.vmem [shape: f32[1,32], index: 2, kind: input, shape index: {}]
  %s3 = inlined_call_operand.vmem [shape: f32[16,32], index: 3, kind: output, shape index: {}]
  %s4 = sld [smem:[#allocation0]]
  $region30: #{vit_forward.10} parent=0
    _
  %s6 = ssub.s32 1, %s4
  %s7 = scalar_select 0, %s6, %s4
  // Predicated region
  $region2: #{vit_forward.10} parent=0 // pred_check
    _
  $region3: #{vit_forward.10} parent=0 // pred_check_branch
    %9 = sbr.rel (0) target = $region5
  $region4: #{vit_forward.10} parent=0 // pred_region
    _
  $region5: #{vit_forward.10} parent=0 // pred_fallthru
    _
  // Predicated region
  $region6: #{vit_forward.10} parent=0 // pred_check
    _
  $region7: #{vit_forward.10} parent=0 // pred_check_branch
    %11 = sbr.rel (0) target = $region9
  $region8: #{vit_forward.10} parent=0 // pred_region
    _
  $region9: #{vit_forward.10} parent=0 // pred_fallthru
    _
  // Predicated region
  $region10: #{vit_forward.10} parent=0 // pred_check
    _
  $region11: #{vit_forward.10} parent=0 // pred_check_branch
    %13 = sbr.rel (0) target = $region13
  $region12: #{vit_forward.10} parent=0 // pred_region
    _
  $region13: #{vit_forward.10} parent=0 // pred_fallthru
    _
  %p15 = scmp.eq.s32.totalorder 0, 0
  // Predicated region
  $region14: #{vit_forward.10} parent=0 // pred_check
    %p16 = pneg %p15
  $region15: #{vit_forward.10} parent=0 // pred_check_branch
    %18 = sbr.rel (%p16) target = $region17
  $region16: #{vit_forward.10} parent=0 // pred_region
    %vm19 = vcmask 261120
    %20 = vst.msk [vmem:[#allocation2] sm:$0xff] %vm19, 0.0
    %21 = vst.msk [vmem:[#allocation2 + $0x8] sm:$0xff] %vm19, 0.0
  $region17: #{vit_forward.10} parent=0 // pred_fallthru
    _
  %v22 = vld [vmem:[#allocation2] sm:$0xff]
  %v23 = vld [vmem:[#allocation2 + $0x8] sm:$0xff]
  %v24 = vld [vmem:[%s0] sm:$0xff]
  %v25 = vld [vmem:[%s0 + $0x8] sm:$0xff]
  %v26 = vld [vmem:[%s1] sm:$0xf]
  %v27 = vld [vmem:[%s1 + $0x4] sm:$0xf]
  %v28 = vld [vmem:[%s1 + $0x8] sm:$0xf]
  %v29 = vld [vmem:[%s1 + $0xc] sm:$0xf]
  %v30 = vld [vmem:[%s1 + $0x10] sm:$0xf]
  %v31 = vld [vmem:[%s1 + $0x14] sm:$0xf]
  %v32 = vld [vmem:[%s1 + $0x18] sm:$0xf]
  %v33 = vld [vmem:[%s1 + $0x1c] sm:$0xf]
  %v34 = vld [vmem:[%s1 + $0x20] sm:$0xf]
  %v35 = vld [vmem:[%s1 + $0x24] sm:$0xf]
  %v36 = vld [vmem:[%s1 + $0x28] sm:$0xf]
  %v37 = vld [vmem:[%s1 + $0x2c] sm:$0xf]
  %v38 = vld [vmem:[%s1 + $0x30] sm:$0xf]
  %v39 = vld [vmem:[%s1 + $0x34] sm:$0xf]
  %v40 = vld [vmem:[%s1 + $0x38] sm:$0xf]
  %v41 = vld [vmem:[%s1 + $0x3c] sm:$0xf]
  %v42 = vld [vmem:[%s1 + $0x40] sm:$0xf]
  %v43 = vld [vmem:[%s1 + $0x44] sm:$0xf]
  %v44 = vld [vmem:[%s1 + $0x48] sm:$0xf]
  %v45 = vld [vmem:[%s1 + $0x4c] sm:$0xf]
  %v46 = vld [vmem:[%s1 + $0x50] sm:$0xf]
  %v47 = vld [vmem:[%s1 + $0x54] sm:$0xf]
  %v48 = vld [vmem:[%s1 + $0x58] sm:$0xf]
  %v49 = vld [vmem:[%s1 + $0x5c] sm:$0xf]
  %v52 = vunpack.c.l.b16 %v24
  %v53 = vunpack.c.h.b16 %v24
  %v54 = vunpack.c.l.b16 %v25
  %v55 = vunpack.c.h.b16 %v25
  %v56 = vpack.c.b16 %v54, %v52
  %v57 = vpack.c.b16 %v55, %v53
  %v83 = vunpack.c.l.b16 %v26
  %v84 = vunpack.c.l.b16 %v27
  %v85 = vunpack.c.l.b16 %v28
  %v86 = vunpack.c.l.b16 %v29
  %v87 = vunpack.c.l.b16 %v30
  %v88 = vunpack.c.l.b16 %v31
  %v89 = vunpack.c.l.b16 %v32
  %v90 = vunpack.c.l.b16 %v33
  %v91 = vunpack.c.l.b16 %v34
  %v92 = vunpack.c.l.b16 %v35
  %v93 = vunpack.c.l.b16 %v36
  %v94 = vunpack.c.l.b16 %v37
  %v95 = vunpack.c.l.b16 %v38
  %v96 = vunpack.c.l.b16 %v39
  %v97 = vunpack.c.l.b16 %v40
  %v98 = vunpack.c.l.b16 %v41
  %v99 = vunpack.c.l.b16 %v42
  %v100 = vunpack.c.l.b16 %v43
  %v101 = vunpack.c.l.b16 %v44
  %v102 = vunpack.c.l.b16 %v45
  %v103 = vunpack.c.l.b16 %v46
  %v104 = vunpack.c.l.b16 %v47
  %v105 = vunpack.c.l.b16 %v48
  %v106 = vunpack.c.l.b16 %v49
  %v107 = vpack.c.b16 %v84, %v83
  %v108 = vpack.c.b16 %v86, %v85
  %v109 = vpack.c.b16 %v88, %v87
  %v110 = vpack.c.b16 %v90, %v89
  %v111 = vpack.c.b16 %v92, %v91
  %v112 = vpack.c.b16 %v94, %v93
  %v113 = vpack.c.b16 %v96, %v95
  %v114 = vpack.c.b16 %v98, %v97
  %v115 = vpack.c.b16 %v100, %v99
  %v116 = vpack.c.b16 %v102, %v101
  %v117 = vpack.c.b16 %v104, %v103
  %v118 = vpack.c.b16 %v106, %v105
  %vm131 = vcmask 523264
  %v133 = vsel %vm131, %v57, 0
  %135 = vmatprep.subr.bf16.mxu0 0
  %136 = vmatpush1.bf16.msra.mxu0 %v107
  %137 = vmatprep.subr.bf16.mxu0 0
  %138 = vmatpush1.bf16.msra.mxu0 %v108
  %139 = vmatprep.subr.bf16.mxu0 0
  %140 = vmatpush1.bf16.msra.mxu0 %v109
  %141 = vmatprep.subr.bf16.mxu0 0
  %142 = vmatpush1.bf16.msra.mxu0 %v110
  %143 = vmatprep.subr.bf16.mxu0 0
  %144 = vmatpush1.bf16.msra.mxu0 %v111
  %145 = vmatprep.subr.bf16.mxu0 0
  %146 = vmatpush1.bf16.msra.mxu0 %v112
  %147 = vmatprep.subr.bf16.mxu0 0
  %148 = vmatpush1.bf16.msra.mxu0 %v113
  %149 = vmatprep.subr.bf16.mxu0 0
  %150 = vmatpush1.bf16.msra.mxu0 %v114
  %151 = vmatprep.subr.bf16.mxu0 0
  %152 = vmatpush1.bf16.msra.mxu0 %v115
  %153 = vmatprep.subr.bf16.mxu0 0
  %154 = vmatpush1.bf16.msra.mxu0 %v116
  %155 = vmatprep.subr.bf16.mxu0 0
  %156 = vmatpush1.bf16.msra.mxu0 %v117
  %157 = vmatprep.subr.bf16.mxu0 0
  %158 = vmatpush1.bf16.msra.mxu0 %v118
  %159 = vmatprep.subr.bf16.mxu0 0
  %160 = vmatpush1.bf16.msra.mxu0 0
  %161 = vmatprep.subr.bf16.mxu0 0
  %162 = vmatpush1.bf16.msra.mxu0 0
  %163 = vmatprep.subr.bf16.mxu0 0
  %164 = vmatpush1.bf16.msra.mxu0 0
  %165 = vmatprep.subr.bf16.mxu0 0
  %166 = vmatpush1.bf16.msra.mxu0 0
  %167 = vmatprep.mubr.bf16.mxu0 %v133
  %168 = vmatmul.mubr.bf16.gmra.mrb[0].mxu0 %v56
  %v169 = vpop.f32.mrb[0].mxu0
  %v170 = vadd.f32 0.0, %v169
  %v171 = vpop.f32.mrb[0].mxu0
  %v172 = vpop.f32.mrb[0].mxu0
  %v173 = vadd.f32 0.0, %v172
  %v174 = vpop.f32.mrb[0].mxu0
  %175 = vdwg.mxu0
  %v176 = vadd.f32 %v22, %v170
  %v177 = vadd.f32 %v23, %v173
  %vm178 = vcmask 261120
  %179 = vst.msk [vmem:[#allocation2] sm:$0xff] %vm178, %v176
  %180 = vst.msk [vmem:[#allocation2 + $0x8] sm:$0xff] %vm178, %v177
  // Predicated region
  $region18: #{vit_forward.10} parent=0 // pred_check
    %p181 = pneg %p15
  $region19: #{vit_forward.10} parent=0 // pred_check_branch
    %183 = sbr.rel (%p181) target = $region21
  $region20: #{vit_forward.10} parent=0 // pred_region
    %v184 = vld [vmem:[#allocation2] sm:$0xff]
    %v185 = vld [vmem:[#allocation2 + $0x8] sm:$0xff]
    %v186 = vld [vmem:[%s2] sm:$0x1]
    %v188 = vlaneseq
    %v189 = vshrl.u32 %v188, 7
    %v190 = vsub.s32 0, %v189
    %v191 = vrot.slane %v186, %v190
    %v193 = vadd.f32 %v184, %v191
    %v194 = vadd.f32 %v185, %v191
    %195 = vst.msk [vmem:[%s3] sm:$0xff] %vm178, %v193
    %196 = vst.msk [vmem:[%s3 + $0x8] sm:$0xff] %vm178, %v194
  $region21: #{vit_forward.10} parent=0 // pred_fallthru
    _
  // Predicated region
  $region22: #{vit_forward.10} parent=0 // pred_check
    _
  $region23: #{vit_forward.10} parent=0 // pred_check_branch
    %198 = sbr.rel (0) target = $region25
  $region24: #{vit_forward.10} parent=0 // pred_region
    _
  $region25: #{vit_forward.10} parent=0 // pred_fallthru
    _
  // Predicated region
  $region26: #{vit_forward.10} parent=0 // pred_check
    _
  $region27: #{vit_forward.10} parent=0 // pred_check_branch
    %200 = sbr.rel (0) target = $region29
  $region28: #{vit_forward.10} parent=0 // pred_region
    _
  $region29: #{vit_forward.10} parent=0 // pred_fallthru
    _

// kernel: vit_forward.12
$region0: #{vit_forward.12}
  #allocation0 [shape = 'u32[]', space=smem, size = 0x4, offset = 0x4, fixed_abs, tag = 'smem constant byte address 0x4 - core index']
  #allocation1 [shape = 'u32[144,128]{1,0:T(1,128)}', space=vmem, size = 0x12000, scoped, tag = 'internal scratch']
  #allocation2 [shape = 'bf16[8,32]{1,0:T(8,128)(2,1)}', space=vmem, size = 0x800, scoped, tag = 'scratch operand']
  %s0 = inlined_call_operand.vmem [shape: bf16[4,8,96], index: 0, kind: input, shape index: {}]
  %s1 = inlined_call_operand.vmem [shape: bf16[4,8,32], index: 1, kind: input, shape index: {}]
  %s2 = inlined_call_operand.vmem [shape: bf16[32,32], index: 2, kind: input, shape index: {}]
  %s3 = inlined_call_operand.vmem [shape: f32[1,32], index: 3, kind: input, shape index: {}]
  %s4 = inlined_call_operand.vmem [shape: bf16[4,8,32], index: 4, kind: output, shape index: {}]
  %s5 = sld [smem:[#allocation0]]
  $region49: #{vit_forward.12} parent=0
    _
  %s7 = ssub.s32 1, %s5
  %s8 = scalar_select 0, %s7, %s5
  loop: start=0, step=1, limit=4
  $region2: #{vit_forward.12} parent=0 // loop_pre_header
    _
  $region3: #{vit_forward.12} parent=0 // loop_header
    %s10 = sphi 0, %s14
    %p11 = scmp.ge.s32.totalorder %s10, 4
    %s20 = sphi 0, %s22
    %s23 = sphi 0, %s20
    %s24 = sphi 0, %s23
    %s40 = sphi 0, %s24
    %s46 = sphi 0, %s48
    %s49 = sphi 0, %s46
    %s50 = sphi 0, %s49
    %s66 = sphi 0, %s50
    %s70 = sphi 0, %s70
    %s72 = sphi 0, %s70
    %s73 = sphi 0, %s72
    %s87 = sphi 0, %s73
    %s91 = sphi 0, %s91
    %s93 = sphi 0, %s91
    %s94 = sphi 0, %s93
    %s108 = sphi 0, %s94
    %s114 = sphi 0, %s116
    %s117 = sphi 0, %s114
    %s118 = sphi 0, %s117
    %s134 = sphi 0, %s118
  $region4: #{vit_forward.12} parent=0 // loop_header_branch
    %13 = sbr.rel (%p11) target = $region8
  $region5: #{vit_forward.12} parent=0 // loop_body
    %s15 = ssub.s32 %s10, 1
    %s16 = ssub.s32 %s10, 2
    %s17 = sadd.s32 %s10, 1
    %s18 = ssub.s32 %s10, %s17
    %p19 = scmp.eq.s32.totalorder %s18, 0
    %s21 = sadd.s32 %s20, 1
    %s22 = scalar_select %p19, %s20, %s21
    %p25 = pneg %p19
    %p26 = scmp.eq.s32.totalorder %s10, 1
    %p27 = por %p25, %p26
    %p28 = scmp.ne.s32.totalorder %s20, %s23
    %p29 = scmp.eq.s32.totalorder %s10, 0
    %p30 = por %p28, %p29
    %p31 = scmp.ne.s32.totalorder %s20, %s23
    %p32 = scmp.eq.s32.totalorder %s15, 1
    %p33 = por %p31, %p32
    %p34 = scmp.ne.s32.totalorder %s23, %s24
    %p35 = scmp.eq.s32.totalorder %s15, 0
    %p36 = por %p34, %p35
    %p37 = scmp.ne.s32.totalorder %s23, %s24
    %p38 = scmp.eq.s32.totalorder %s16, 1
    %p39 = por %p37, %p38
    %p41 = scmp.ne.s32.totalorder %s24, %s40
    %p42 = scmp.eq.s32.totalorder %s16, 0
    %p43 = por %p41, %p42
    %s44 = ssub.s32 %s10, %s17
    %p45 = scmp.eq.s32.totalorder %s44, 0
    %s47 = sadd.s32 %s46, 1
    %s48 = scalar_select %p45, %s46, %s47
    %p51 = pneg %p45
    %p52 = scmp.eq.s32.totalorder %s10, 1
    %p53 = por %p51, %p52
    %p54 = scmp.ne.s32.totalorder %s46, %s49
    %p55 = scmp.eq.s32.totalorder %s10, 0
    %p56 = por %p54, %p55
    %p57 = scmp.ne.s32.totalorder %s46, %s49
    %p58 = scmp.eq.s32.totalorder %s15, 1
    %p59 = por %p57, %p58
    %p60 = scmp.ne.s32.totalorder %s49, %s50
    %p61 = scmp.eq.s32.totalorder %s15, 0
    %p62 = por %p60, %p61
    %p63 = scmp.ne.s32.totalorder %s49, %s50
    %p64 = scmp.eq.s32.totalorder %s16, 1
    %p65 = por %p63, %p64
    %p67 = scmp.ne.s32.totalorder %s50, %s66
    %p68 = scmp.eq.s32.totalorder %s16, 0
    %p69 = por %p67, %p68
    %s71 = sadd.s32 %s70, 1
    %p74 = scmp.eq.s32.totalorder %s10, 1
    %p75 = scmp.ne.s32.totalorder %s70, %s72
    %p76 = scmp.eq.s32.totalorder %s10, 0
    %p77 = por %p75, %p76
    %p78 = scmp.ne.s32.totalorder %s70, %s72
    %p79 = scmp.eq.s32.totalorder %s15, 1
    %p80 = por %p78, %p79
    %p81 = scmp.ne.s32.totalorder %s72, %s73
    %p82 = scmp.eq.s32.totalorder %s15, 0
    %p83 = por %p81, %p82
    %p84 = scmp.ne.s32.totalorder %s72, %s73
    %p85 = scmp.eq.s32.totalorder %s16, 1
    %p86 = por %p84, %p85
    %p88 = scmp.ne.s32.totalorder %s73, %s87
    %p89 = scmp.eq.s32.totalorder %s16, 0
    %p90 = por %p88, %p89
    %s92 = sadd.s32 %s91, 1
    %p95 = scmp.eq.s32.totalorder %s10, 1
    %p96 = scmp.ne.s32.totalorder %s91, %s93
    %p97 = scmp.eq.s32.totalorder %s10, 0
    %p98 = por %p96, %p97
    %p99 = scmp.ne.s32.totalorder %s91, %s93
    %p100 = scmp.eq.s32.totalorder %s15, 1
    %p101 = por %p99, %p100
    %p102 = scmp.ne.s32.totalorder %s93, %s94
    %p103 = scmp.eq.s32.totalorder %s15, 0
    %p104 = por %p102, %p103
    %p105 = scmp.ne.s32.totalorder %s93, %s94
    %p106 = scmp.eq.s32.totalorder %s16, 1
    %p107 = por %p105, %p106
    %p109 = scmp.ne.s32.totalorder %s94, %s108
    %p110 = scmp.eq.s32.totalorder %s16, 0
    %p111 = por %p109, %p110
    %s112 = ssub.s32 %s10, %s17
    %p113 = scmp.eq.s32.totalorder %s112, 0
    %s115 = sadd.s32 %s114, 1
    %s116 = scalar_select %p113, %s114, %s115
    %p119 = pneg %p113
    %p120 = scmp.eq.s32.totalorder %s10, 1
    %p121 = por %p119, %p120
    %p122 = scmp.ne.s32.totalorder %s114, %s117
    %p123 = scmp.eq.s32.totalorder %s10, 0
    %p124 = por %p122, %p123
    %p125 = scmp.ne.s32.totalorder %s114, %s117
    %p126 = scmp.eq.s32.totalorder %s15, 1
    %p127 = por %p125, %p126
    %p128 = scmp.ne.s32.totalorder %s117, %s118
    %p129 = scmp.eq.s32.totalorder %s15, 0
    %p130 = por %p128, %p129
    %p131 = scmp.ne.s32.totalorder %s117, %s118
    %p132 = scmp.eq.s32.totalorder %s16, 1
    %p133 = por %p131, %p132
    %p135 = scmp.ne.s32.totalorder %s118, %s134
    %p136 = scmp.eq.s32.totalorder %s16, 0
    %p137 = por %p135, %p136
    %p138 = scmp.le.s32.totalorder 1, %s10
    %p139 = scmp.lt.s32.totalorder %s10, 3
    %p140 = pnand %p138, %p139
    %p141 = pneg %p140
    // Predicated region
    $region9: #{vit_forward.12} parent=5 // pred_check
      _
    $region10: #{vit_forward.12} parent=5 // pred_check_branch
      %143 = sbr.rel (%p140) target = $region12
    $region11: #{vit_forward.12} parent=5 // pred_region
      %s144 = ssub.s32 %s10, 1
      // Predicated region
      $region13: #{vit_forward.12} parent=11 // pred_check
        %p145 = pneg %p83
      $region14: #{vit_forward.12} parent=11 // pred_check_branch
        %147 = sbr.rel (%p145) target = $region16
      $region15: #{vit_forward.12} parent=11 // pred_region
        _
      $region16: #{vit_forward.12} parent=11 // pred_fallthru
        _
      // Predicated region
      $region17: #{vit_forward.12} parent=11 // pred_check
        %p148 = pneg %p104
      $region18: #{vit_forward.12} parent=11 // pred_check_branch
        %150 = sbr.rel (%p148) target = $region20
      $region19: #{vit_forward.12} parent=11 // pred_region
        _
      $region20: #{vit_forward.12} parent=11 // pred_fallthru
        _
    $region12: #{vit_forward.12} parent=5 // pred_fallthru
      _
    %p151 = scmp.lt.s32.totalorder %s10, 2
    // Predicated region
    $region21: #{vit_forward.12} parent=5 // pred_check
      %p152 = pneg %p151
    $region22: #{vit_forward.12} parent=5 // pred_check_branch
      %154 = sbr.rel (%p152) target = $region24
    $region23: #{vit_forward.12} parent=5 // pred_region
      // Predicated region
      $region25: #{vit_forward.12} parent=23 // pred_check
        %p155 = pneg %p30
      $region26: #{vit_forward.12} parent=23 // pred_check_branch
        %157 = sbr.rel (%p155) target = $region28
      $region27: #{vit_forward.12} parent=23 // pred_region
        %s158 = smul.u32 2, %s10
        %p159 = scmp.lt.s32.totalorder %s158, 3
        %s160 = scalar_select %p159, %s158, 3
        %s161 = smul.addr %s160, 4
        %s162 = scalar_lea.vmem %s0, %s161
        %s163 = smul.u32 2, %s10
      $region28: #{vit_forward.12} parent=23 // pred_fallthru
        _
      // Predicated region
      $region29: #{vit_forward.12} parent=23 // pred_check
        %p164 = pneg %p56
      $region30: #{vit_forward.12} parent=23 // pred_check_branch
        %166 = sbr.rel (%p164) target = $region32
      $region31: #{vit_forward.12} parent=23 // pred_region
        %s167 = smul.u32 2, %s10
        %p168 = scmp.lt.s32.totalorder %s167, 3
        %s169 = scalar_select %p168, %s167, 3
        %s170 = smul.addr %s169, 4
        %s171 = scalar_lea.vmem %s1, %s170
        %s172 = smul.u32 2, %s10
      $region32: #{vit_forward.12} parent=23 // pred_fallthru
        _
    $region24: #{vit_forward.12} parent=5 // pred_fallthru
      _
    %p173 = scmp.le.s32.totalorder 1, %s10
    %p174 = scmp.lt.s32.totalorder %s10, 3
    %p175 = pnand %p173, %p174
    %p176 = pneg %p175
    // Predicated region
    $region33: #{vit_forward.12} parent=5 // pred_check
      _
    $region34: #{vit_forward.12} parent=5 // pred_check_branch
      %178 = sbr.rel (%p175) target = $region36
    $region35: #{vit_forward.12} parent=5 // pred_region
      %s179 = ssub.s32 %s10, 1
      %s180 = smul.u32 2, %s15
      %p181 = scmp.lt.s32.totalorder %s180, 3
      %s182 = scalar_select %p181, %s180, 3
      %s183 = smul.addr %s182, 4
      %s184 = scalar_lea.vmem %s0, %s183
      %p185 = pneg %p36
      %p186 = pneg %p33
      %s187 = smul.u32 2, %s15
      %p188 = scmp.lt.s32.totalorder %s187, 3
      %s189 = scalar_select %p188, %s187, 3
      %s190 = smul.addr %s189, 4
      %s191 = scalar_lea.vmem %s1, %s190
      %p192 = pneg %p62
      %p193 = pneg %p59
      %p194 = pneg %p83
      %p195 = pneg %p80
      %p196 = pneg %p104
      %p197 = pneg %p101
      %p198 = pneg %p130
      %p199 = pneg %p127
      %s200 = smul.u32 2, %s15
      %p201 = scmp.lt.s32.totalorder %s200, 3
      %s202 = scalar_select %p201, %s200, 3
      %s203 = smul.addr %s202, 4
      %s204 = scalar_lea.vmem %s4, %s203
      %s205 = smul.u32 2, %s15
      %p206 = scmp.lt.s32.totalorder %s205, 3
      %s207 = scalar_select %p206, %s205, 3
      %s208 = smul.addr %s207, 4
      %s209 = scalar_lea.vmem %s0, %s208
      %s210 = smul.u32 2, %s15
      %s211 = smul.u32 2, %s15
      %p212 = scmp.lt.s32.totalorder %s211, 3
      %s213 = scalar_select %p212, %s211, 3
      %s214 = smul.addr %s213, 4
      %s215 = scalar_lea.vmem %s1, %s214
      %s216 = smul.u32 2, %s15
      %s217 = smul.u32 2, %s15
      %p218 = scmp.lt.s32.totalorder %s217, 3
      %s219 = scalar_select %p218, %s217, 3
      %s220 = smul.addr %s219, 4
      %s221 = scalar_lea.vmem %s4, %s220
      %s222 = smul.u32 2, %s15
      %v225 = vlaneseq
      %v226 = vand.u32 %v225, 127
      %vm227 = vcmp.lt.s32.totalorder %v226, 5
      %v228 = vld [vmem:[%s2] sm:$0xf]
      %v229 = vld [vmem:[%s2 + $0x4] sm:$0xf]
      %v230 = vld [vmem:[%s2 + $0x8] sm:$0xf]
      %v231 = vld [vmem:[%s2 + $0xc] sm:$0xf]
      %v232 = vld [vmem:[%s3] sm:$0x1]
      %v233 = vld [vmem:[%s209] sm:$0xf]
      %v234 = vmul.bf16 %v233, 1052065461
      %v236 = vunpack.c.l.b16 %v233
      %v237 = vpack.c.b16 %v236, %v236
      %238 = vrot.lane.b32.xlu0 %v237, 96
      %v239 = vpop.permute.xlu0 %238
      %vm240 = vcmask 64512
      %v242 = vsel %vm240, %v234, 0
      %v245 = vsel %vm240, %v239, 0
      %247 = vmatprep.subr.bf16.mxu0 0
      %248 = vmatpush1.bf16.xpose.msra.mxu0 %v245
      %249 = vmatprep.subr.bf16.mxu0 0
      %250 = vmatpush1.bf16.xpose.msra.mxu0 0
      %251 = vmatprep.subr.bf16.mxu0 0
      %252 = vmatpush1.bf16.xpose.msra.mxu0 0
      %253 = vmatprep.subr.bf16.mxu0 0
      %254 = vmatpush1.bf16.xpose.msra.mxu0 0
      %255 = vmatprep.subr.bf16.mxu0 0
      %256 = vmatpush1.bf16.xpose.msra.mxu0 0
      %257 = vmatprep.subr.bf16.mxu0 0
      %258 = vmatpush1.bf16.xpose.msra.mxu0 0
      %259 = vmatprep.subr.bf16.mxu0 0
      %260 = vmatpush1.bf16.xpose.msra.mxu0 0
      %261 = vmatprep.subr.bf16.mxu0 0
      %262 = vmatpush1.bf16.xpose.msra.mxu0 0
      %263 = vmatprep.subr.bf16.mxu0 0
      %264 = vmatpush1.bf16.xpose.msra.mxu0 0
      %265 = vmatprep.subr.bf16.mxu0 0
      %266 = vmatpush1.bf16.xpose.msra.mxu0 0
      %267 = vmatprep.subr.bf16.mxu0 0
      %268 = vmatpush1.bf16.xpose.msra.mxu0 0
      %269 = vmatprep.subr.bf16.mxu0 0
      %270 = vmatpush1.bf16.xpose.msra.mxu0 0
      %271 = vmatprep.subr.bf16.mxu0 0
      %272 = vmatpush1.bf16.xpose.msra.mxu0 0
      %273 = vmatprep.subr.bf16.mxu0 0
      %274 = vmatpush1.bf16.xpose.msra.mxu0 0
      %275 = vmatprep.subr.bf16.mxu0 0
      %276 = vmatpush1.bf16.xpose.msra.mxu0 0
      %277 = vmatprep.subr.bf16.mxu0 0
      %278 = vmatpush1.bf16.xpose.msra.mxu0 0
      %279 = vmatprep.mubr.bf16.mxu0 0
      %280 = vmatmul.mubr.bf16.gmra.mrb[0].mxu0 %v242
      %v281 = vpop.f32.mrb[0].mxu0
      %v282 = vadd.f32 0.0, %v281
      %v283 = vpop.f32.mrb[0].mxu0
      %v284 = vpop.f32.mrb[0].mxu0
      %v285 = vpop.f32.mrb[0].mxu0
      %286 = vdwg.mxu0
      %v287 = vsel %vm227, 1, 0
      %vm288 = vcmp.eq.s32.totalorder %v287, 1
      %v289 = vsel %vm288, %v282, -1e+30
      %v290 = vsel %vm240, %v289, -inf
      %291 = vmax.xlane.f32.xlu0 %v290
      %v292 = vpop.xlane.xlu0 %291
      %v293 = vsub.f32 %v289, %v292
      %v294 = vmul.f32 %v293, 1.442695
      %v295 = vpow.pop %v294
      %v296 = vsel %vm240, %v295, 0.0
      %297 = vadd.xlane.f32.xlu0 %v296
      %v298 = vpop.xlane.xlu0 %297
      %v299 = vpack.c.bf16 %v295, %v295
      %300 = vrot.lane.b32.xlu0 %v237, 64
      %v301 = vpop.permute.xlu0 %300
      %v303 = vsel %vm240, %v299, 0
      %vm305 = vcmask 1043456
      %v307 = vsel %vm305, %v301, 0
      %309 = vmatprep.subr.bf16.mxu0 0
      %310 = vmatpush1.bf16.msra.mxu0 %v307
      %311 = vmatprep.subr.bf16.mxu0 0
      %312 = vmatpush1.bf16.msra.mxu0 0
      %313 = vmatprep.subr.bf16.mxu0 0
      %314 = vmatpush1.bf16.msra.mxu0 0
      %315 = vmatprep.subr.bf16.mxu0 0
      %316 = vmatpush1.bf16.msra.mxu0 0
      %317 = vmatprep.subr.bf16.mxu0 0
      %318 = vmatpush1.bf16.msra.mxu0 0
      %319 = vmatprep.subr.bf16.mxu0 0
      %320 = vmatpush1.bf16.msra.mxu0 0
      %321 = vmatprep.subr.bf16.mxu0 0
      %322 = vmatpush1.bf16.msra.mxu0 0
      %323 = vmatprep.subr.bf16.mxu0 0
      %324 = vmatpush1.bf16.msra.mxu0 0
      %325 = vmatprep.subr.bf16.mxu0 0
      %326 = vmatpush1.bf16.msra.mxu0 0
      %327 = vmatprep.subr.bf16.mxu0 0
      %328 = vmatpush1.bf16.msra.mxu0 0
      %329 = vmatprep.subr.bf16.mxu0 0
      %330 = vmatpush1.bf16.msra.mxu0 0
      %331 = vmatprep.subr.bf16.mxu0 0
      %332 = vmatpush1.bf16.msra.mxu0 0
      %333 = vmatprep.subr.bf16.mxu0 0
      %334 = vmatpush1.bf16.msra.mxu0 0
      %335 = vmatprep.subr.bf16.mxu0 0
      %336 = vmatpush1.bf16.msra.mxu0 0
      %337 = vmatprep.subr.bf16.mxu0 0
      %338 = vmatpush1.bf16.msra.mxu0 0
      %339 = vmatprep.subr.bf16.mxu0 0
      %340 = vmatpush1.bf16.msra.mxu0 0
      %341 = vmatprep.mubr.bf16.mxu0 0
      %342 = vmatmul.mubr.bf16.gmra.mrb[0].mxu0 %v303
      %v343 = vpop.f32.mrb[0].mxu0
      %v344 = vadd.f32 0.0, %v343
      %v345 = vpop.f32.mrb[0].mxu0
      %v346 = vpop.f32.mrb[0].mxu0
      %v347 = vpop.f32.mrb[0].mxu0
      %348 = vdwg.mxu0
      %v349 = vrcp.pop %v298
      %v350 = vmul.f32 %v344, %v349
      %v351 = vpack.c.bf16 %v350, %v350
      %vm352 = vcmask 60416
      %353 = vst.msk [vmem:[#allocation2] sm:$0xf] %vm352, %v351
      %v355 = vunpack.c.l.b16 %v234
      %v356 = vpack.c.b16 %v355, %v355
      %357 = vrot.lane.b32.xlu0 %v356, 120
      %v358 = vpop.permute.xlu0 %357
      %359 = vrot.lane.b32.xlu0 %v237, 88
      %v360 = vpop.permute.xlu0 %359
      %v362 = vsel %vm240, %v358, 0
      %v365 = vsel %vm240, %v360, 0
      %367 = vmatprep.subr.bf16.mxu0 0
      %368 = vmatpush1.bf16.xpose.msra.mxu0 %v365
      %369 = vmatprep.subr.bf16.mxu0 0
      %370 = vmatpush1.bf16.xpose.msra.mxu0 0
      %371 = vmatprep.subr.bf16.mxu0 0
      %372 = vmatpush1.bf16.xpose.msra.mxu0 0
      %373 = vmatprep.subr.bf16.mxu0 0
      %374 = vmatpush1.bf16.xpose.msra.mxu0 0
      %375 = vmatprep.subr.bf16.mxu0 0
      %376 = vmatpush1.bf16.xpose.msra.mxu0 0
      %377 = vmatprep.subr.bf16.mxu0 0
      %378 = vmatpush1.bf16.xpose.msra.mxu0 0
      %379 = vmatprep.subr.bf16.mxu0 0
      %380 = vmatpush1.bf16.xpose.msra.mxu0 0
      %381 = vmatprep.subr.bf16.mxu0 0
      %382 = vmatpush1.bf16.xpose.msra.mxu0 0
      %383 = vmatprep.subr.bf16.mxu0 0
      %384 = vmatpush1.bf16.xpose.msra.mxu0 0
      %385 = vmatprep.subr.bf16.mxu0 0
      %386 = vmatpush1.bf16.xpose.msra.mxu0 0
      %387 = vmatprep.subr.bf16.mxu0 0
      %388 = vmatpush1.bf16.xpose.msra.mxu0 0
      %389 = vmatprep.subr.bf16.mxu0 0
      %390 = vmatpush1.bf16.xpose.msra.mxu0 0
      %391 = vmatprep.subr.bf16.mxu0 0
      %392 = vmatpush1.bf16.xpose.msra.mxu0 0
      %393 = vmatprep.subr.bf16.mxu0 0
      %394 = vmatpush1.bf16.xpose.msra.mxu0 0
      %395 = vmatprep.subr.bf16.mxu0 0
      %396 = vmatpush1.bf16.xpose.msra.mxu0 0
      %397 = vmatprep.subr.bf16.mxu0 0
      %398 = vmatpush1.bf16.xpose.msra.mxu0 0
      %399 = vmatprep.mubr.bf16.mxu0 0
      %400 = vmatmul.mubr.bf16.gmra.mrb[0].mxu0 %v362
      %v401 = vpop.f32.mrb[0].mxu0
      %v402 = vadd.f32 0.0, %v401
      %v403 = vpop.f32.mrb[0].mxu0
      %v404 = vpop.f32.mrb[0].mxu0
      %v405 = vpop.f32.mrb[0].mxu0
      %406 = vdwg.mxu0
      %v407 = vsel %vm288, %v402, -1e+30
      %v408 = vsel %vm240, %v407, -inf
      %409 = vmax.xlane.f32.xlu0 %v408
      %v410 = vpop.xlane.xlu0 %409
      %v411 = vsub.f32 %v407, %v410
      %v412 = vmul.f32 %v411, 1.442695
      %v413 = vpow.pop %v412
      %v414 = vsel %vm240, %v413, 0.0
      %415 = vadd.xlane.f32.xlu0 %v414
      %v416 = vpop.xlane.xlu0 %415
      %v417 = vpack.c.bf16 %v413, %v413
      %418 = vrot.lane.b32.xlu0 %v237, 56
      %v419 = vpop.permute.xlu0 %418
      %v421 = vsel %vm240, %v417, 0
      %v424 = vsel %vm305, %v419, 0
      %426 = vmatprep.subr.bf16.mxu0 0
      %427 = vmatpush1.bf16.msra.mxu0 %v424
      %428 = vmatprep.subr.bf16.mxu0 0
      %429 = vmatpush1.bf16.msra.mxu0 0
      %430 = vmatprep.subr.bf16.mxu0 0
      %431 = vmatpush1.bf16.msra.mxu0 0
      %432 = vmatprep.subr.bf16.mxu0 0
      %433 = vmatpush1.bf16.msra.mxu0 0
      %434 = vmatprep.subr.bf16.mxu0 0
      %435 = vmatpush1.bf16.msra.mxu0 0
      %436 = vmatprep.subr.bf16.mxu0 0
      %437 = vmatpush1.bf16.msra.mxu0 0
      %438 = vmatprep.subr.bf16.mxu0 0
      %439 = vmatpush1.bf16.msra.mxu0 0
      %440 = vmatprep.subr.bf16.mxu0 0
      %441 = vmatpush1.bf16.msra.mxu0 0
      %442 = vmatprep.subr.bf16.mxu0 0
      %443 = vmatpush1.bf16.msra.mxu0 0
      %444 = vmatprep.subr.bf16.mxu0 0
      %445 = vmatpush1.bf16.msra.mxu0 0
      %446 = vmatprep.subr.bf16.mxu0 0
      %447 = vmatpush1.bf16.msra.mxu0 0
      %448 = vmatprep.subr.bf16.mxu0 0
      %449 = vmatpush1.bf16.msra.mxu0 0
      %450 = vmatprep.subr.bf16.mxu0 0
      %451 = vmatpush1.bf16.msra.mxu0 0
      %452 = vmatprep.subr.bf16.mxu0 0
      %453 = vmatpush1.bf16.msra.mxu0 0
      %454 = vmatprep.subr.bf16.mxu0 0
      %455 = vmatpush1.bf16.msra.mxu0 0
      %456 = vmatprep.subr.bf16.mxu0 0
      %457 = vmatpush1.bf16.msra.mxu0 0
      %458 = vmatprep.mubr.bf16.mxu0 0
      %459 = vmatmul.mubr.bf16.gmra.mrb[0].mxu0 %v421
      %v460 = vpop.f32.mrb[0].mxu0
      %v461 = vadd.f32 0.0, %v460
      %v462 = vpop.f32.mrb[0].mxu0
      %v463 = vpop.f32.mrb[0].mxu0
      %v464 = vpop.f32.mrb[0].mxu0
      %465 = vdwg.mxu0
      %v466 = vrcp.pop %v416
      %v467 = vmul.f32 %v461, %v466
      %v468 = vpack.c.bf16 %v467, %v467
      %v470 = vunpack.c.l.b16 %v468
      %v471 = vpack.c.b16 %v470, %v470
      %472 = vrot.lane.b32.xlu0 %v471, 8
      %v473 = vpop.permute.xlu0 %472
      %vm475 = vcmask 126016
      %476 = vst.msk [vmem:[#allocation2] sm:$0xf] %vm475, %v473
      %477 = vrot.lane.b32.xlu0 %v356, 112
      %v478 = vpop.permute.xlu0 %477
      %479 = vrot.lane.b32.xlu0 %v237, 80
      %v480 = vpop.permute.xlu0 %479
      %v482 = vsel %vm240, %v478, 0
      %v485 = vsel %vm240, %v480, 0
      %487 = vmatprep.subr.bf16.mxu0 0
      %488 = vmatpush1.bf16.xpose.msra.mxu0 %v485
      %489 = vmatprep.subr.bf16.mxu0 0
      %490 = vmatpush1.bf16.xpose.msra.mxu0 0
      %491 = vmatprep.subr.bf16.mxu0 0
      %492 = vmatpush1.bf16.xpose.msra.mxu0 0
      %493 = vmatprep.subr.bf16.mxu0 0
      %494 = vmatpush1.bf16.xpose.msra.mxu0 0
      %495 = vmatprep.subr.bf16.mxu0 0
      %496 = vmatpush1.bf16.xpose.msra.mxu0 0
      %497 = vmatprep.subr.bf16.mxu0 0
      %498 = vmatpush1.bf16.xpose.msra.mxu0 0
      %499 = vmatprep.subr.bf16.mxu0 0
      %500 = vmatpush1.bf16.xpose.msra.mxu0 0
      %501 = vmatprep.subr.bf16.mxu0 0
      %502 = vmatpush1.bf16.xpose.msra.mxu0 0
      %503 = vmatprep.subr.bf16.mxu0 0
      %504 = vmatpush1.bf16.xpose.msra.mxu0 0
      %505 = vmatprep.subr.bf16.mxu0 0
      %506 = vmatpush1.bf16.xpose.msra.mxu0 0
      %507 = vmatprep.subr.bf16.mxu0 0
      %508 = vmatpush1.bf16.xpose.msra.mxu0 0
      %509 = vmatprep.subr.bf16.mxu0 0
      %510 = vmatpush1.bf16.xpose.msra.mxu0 0
      %511 = vmatprep.subr.bf16.mxu0 0
      %512 = vmatpush1.bf16.xpose.msra.mxu0 0
      %513 = vmatprep.subr.bf16.mxu0 0
      %514 = vmatpush1.bf16.xpose.msra.mxu0 0
      %515 = vmatprep.subr.bf16.mxu0 0
      %516 = vmatpush1.bf16.xpose.msra.mxu0 0
      %517 = vmatprep.subr.bf16.mxu0 0
      %518 = vmatpush1.bf16.xpose.msra.mxu0 0
      %519 = vmatprep.mubr.bf16.mxu0 0
      %520 = vmatmul.mubr.bf16.gmra.mrb[0].mxu0 %v482
      %v521 = vpop.f32.mrb[0].mxu0
      %v522 = vadd.f32 0.0, %v521
      %v523 = vpop.f32.mrb[0].mxu0
      %v524 = vpop.f32.mrb[0].mxu0
      %v525 = vpop.f32.mrb[0].mxu0
      %526 = vdwg.mxu0
      %v527 = vsel %vm288, %v522, -1e+30
      %v528 = vsel %vm240, %v527, -inf
      %529 = vmax.xlane.f32.xlu0 %v528
      %v530 = vpop.xlane.xlu0 %529
      %v531 = vsub.f32 %v527, %v530
      %v532 = vmul.f32 %v531, 1.442695
      %v533 = vpow.pop %v532
      %v534 = vsel %vm240, %v533, 0.0
      %535 = vadd.xlane.f32.xlu0 %v534
      %v536 = vpop.xlane.xlu0 %535
      %v537 = vpack.c.bf16 %v533, %v533
      %538 = vrot.lane.b32.xlu0 %v237, 48
      %v539 = vpop.permute.xlu0 %538
      %v541 = vsel %vm240, %v537, 0
      %v544 = vsel %vm305, %v539, 0
      %546 = vmatprep.subr.bf16.mxu0 0
      %547 = vmatpush1.bf16.msra.mxu0 %v544
      %548 = vmatprep.subr.bf16.mxu0 0
      %549 = vmatpush1.bf16.msra.mxu0 0
      %550 = vmatprep.subr.bf16.mxu0 0
      %551 = vmatpush1.bf16.msra.mxu0 0
      %552 = vmatprep.subr.bf16.mxu0 0
      %553 = vmatpush1.bf16.msra.mxu0 0
      %554 = vmatprep.subr.bf16.mxu0 0
      %555 = vmatpush1.bf16.msra.mxu0 0
      %556 = vmatprep.subr.bf16.mxu0 0
      %557 = vmatpush1.bf16.msra.mxu0 0
      %558 = vmatprep.subr.bf16.mxu0 0
      %559 = vmatpush1.bf16.msra.mxu0 0
      %560 = vmatprep.subr.bf16.mxu0 0
      %561 = vmatpush1.bf16.msra.mxu0 0
      %562 = vmatprep.subr.bf16.mxu0 0
      %563 = vmatpush1.bf16.msra.mxu0 0
      %564 = vmatprep.subr.bf16.mxu0 0
      %565 = vmatpush1.bf16.msra.mxu0 0
      %566 = vmatprep.subr.bf16.mxu0 0
      %567 = vmatpush1.bf16.msra.mxu0 0
      %568 = vmatprep.subr.bf16.mxu0 0
      %569 = vmatpush1.bf16.msra.mxu0 0
      %570 = vmatprep.subr.bf16.mxu0 0
      %571 = vmatpush1.bf16.msra.mxu0 0
      %572 = vmatprep.subr.bf16.mxu0 0
      %573 = vmatpush1.bf16.msra.mxu0 0
      %574 = vmatprep.subr.bf16.mxu0 0
      %575 = vmatpush1.bf16.msra.mxu0 0
      %576 = vmatprep.subr.bf16.mxu0 0
      %577 = vmatpush1.bf16.msra.mxu0 0
      %578 = vmatprep.mubr.bf16.mxu0 0
      %579 = vmatmul.mubr.bf16.gmra.mrb[0].mxu0 %v541
      %v580 = vpop.f32.mrb[0].mxu0
      %v581 = vadd.f32 0.0, %v580
      %v582 = vpop.f32.mrb[0].mxu0
      %v583 = vpop.f32.mrb[0].mxu0
      %v584 = vpop.f32.mrb[0].mxu0
      %585 = vdwg.mxu0
      %v586 = vrcp.pop %v536
      %v587 = vmul.f32 %v581, %v586
      %v588 = vpack.c.bf16 %v587, %v587
      %v590 = vunpack.c.l.b16 %v588
      %v591 = vpack.c.b16 %v590, %v590
      %592 = vrot.lane.b32.xlu0 %v591, 16
      %v593 = vpop.permute.xlu0 %592
      %vm595 = vcmask 191616
      %596 = vst.msk [vmem:[#allocation2] sm:$0xf] %vm595, %v593
      %597 = vrot.lane.b32.xlu0 %v356, 104
      %v598 = vpop.permute.xlu0 %597
      %599 = vrot.lane.b32.xlu0 %v237, 72
      %v600 = vpop.permute.xlu0 %599
      %v602 = vsel %vm240, %v598, 0
      %v605 = vsel %vm240, %v600, 0
      %607 = vmatprep.subr.bf16.mxu0 0
      %608 = vmatpush1.bf16.xpose.msra.mxu0 %v605
      %609 = vmatprep.subr.bf16.mxu0 0
      %610 = vmatpush1.bf16.xpose.msra.mxu0 0
      %611 = vmatprep.subr.bf16.mxu0 0
      %612 = vmatpush1.bf16.xpose.msra.mxu0 0
      %613 = vmatprep.subr.bf16.mxu0 0
      %614 = vmatpush1.bf16.xpose.msra.mxu0 0
      %615 = vmatprep.subr.bf16.mxu0 0
      %616 = vmatpush1.bf16.xpose.msra.mxu0 0
      %617 = vmatprep.subr.bf16.mxu0 0
      %618 = vmatpush1.bf16.xpose.msra.mxu0 0
      %619 = vmatprep.subr.bf16.mxu0 0
      %620 = vmatpush1.bf16.xpose.msra.mxu0 0
      %621 = vmatprep.subr.bf16.mxu0 0
      %622 = vmatpush1.bf16.xpose.msra.mxu0 0
      %623 = vmatprep.subr.bf16.mxu0 0
      %624 = vmatpush1.bf16.xpose.msra.mxu0 0
      %625 = vmatprep.subr.bf16.mxu0 0
      %626 = vmatpush1.bf16.xpose.msra.mxu0 0
      %627 = vmatprep.subr.bf16.mxu0 0
      %628 = vmatpush1.bf16.xpose.msra.mxu0 0
      %629 = vmatprep.subr.bf16.mxu0 0
      %630 = vmatpush1.bf16.xpose.msra.mxu0 0
      %631 = vmatprep.subr.bf16.mxu0 0
      %632 = vmatpush1.bf16.xpose.msra.mxu0 0
      %633 = vmatprep.subr.bf16.mxu0 0
      %634 = vmatpush1.bf16.xpose.msra.mxu0 0
      %635 = vmatprep.subr.bf16.mxu0 0
      %636 = vmatpush1.bf16.xpose.msra.mxu0 0
      %637 = vmatprep.subr.bf16.mxu0 0
      %638 = vmatpush1.bf16.xpose.msra.mxu0 0
      %639 = vmatprep.mubr.bf16.mxu0 0
      %640 = vmatmul.mubr.bf16.gmra.mrb[0].mxu0 %v602
      %v641 = vpop.f32.mrb[0].mxu0
      %v642 = vadd.f32 0.0, %v641
      %v643 = vpop.f32.mrb[0].mxu0
      %v644 = vpop.f32.mrb[0].mxu0
      %v645 = vpop.f32.mrb[0].mxu0
      %646 = vdwg.mxu0
      %v647 = vsel %vm288, %v642, -1e+30
      %v648 = vsel %vm240, %v647, -inf
      %649 = vmax.xlane.f32.xlu0 %v648
      %v650 = vpop.xlane.xlu0 %649
      %v651 = vsub.f32 %v647, %v650
      %v652 = vmul.f32 %v651, 1.442695
      %v653 = vpow.pop %v652
      %v654 = vsel %vm240, %v653, 0.0
      %655 = vadd.xlane.f32.xlu0 %v654
      %v656 = vpop.xlane.xlu0 %655
      %v657 = vpack.c.bf16 %v653, %v653
      %658 = vrot.lane.b32.xlu0 %v237, 40
      %v659 = vpop.permute.xlu0 %658
      %v661 = vsel %vm240, %v657, 0
      %v664 = vsel %vm305, %v659, 0
      %666 = vmatprep.subr.bf16.mxu0 0
      %667 = vmatpush1.bf16.msra.mxu0 %v664
      %668 = vmatprep.subr.bf16.mxu0 0
      %669 = vmatpush1.bf16.msra.mxu0 0
      %670 = vmatprep.subr.bf16.mxu0 0
      %671 = vmatpush1.bf16.msra.mxu0 0
      %672 = vmatprep.subr.bf16.mxu0 0
      %673 = vmatpush1.bf16.msra.mxu0 0
      %674 = vmatprep.subr.bf16.mxu0 0
      %675 = vmatpush1.bf16.msra.mxu0 0
      %676 = vmatprep.subr.bf16.mxu0 0
      %677 = vmatpush1.bf16.msra.mxu0 0
      %678 = vmatprep.subr.bf16.mxu0 0
      %679 = vmatpush1.bf16.msra.mxu0 0
      %680 = vmatprep.subr.bf16.mxu0 0
      %681 = vmatpush1.bf16.msra.mxu0 0
      %682 = vmatprep.subr.bf16.mxu0 0
      %683 = vmatpush1.bf16.msra.mxu0 0
      %684 = vmatprep.subr.bf16.mxu0 0
      %685 = vmatpush1.bf16.msra.mxu0 0
      %686 = vmatprep.subr.bf16.mxu0 0
      %687 = vmatpush1.bf16.msra.mxu0 0
      %688 = vmatprep.subr.bf16.mxu0 0
      %689 = vmatpush1.bf16.msra.mxu0 0
      %690 = vmatprep.subr.bf16.mxu0 0
      %691 = vmatpush1.bf16.msra.mxu0 0
      %692 = vmatprep.subr.bf16.mxu0 0
      %693 = vmatpush1.bf16.msra.mxu0 0
      %694 = vmatprep.subr.bf16.mxu0 0
      %695 = vmatpush1.bf16.msra.mxu0 0
      %696 = vmatprep.subr.bf16.mxu0 0
      %697 = vmatpush1.bf16.msra.mxu0 0
      %698 = vmatprep.mubr.bf16.mxu0 0
      %699 = vmatmul.mubr.bf16.gmra.mrb[0].mxu0 %v661
      %v700 = vpop.f32.mrb[0].mxu0
      %v701 = vadd.f32 0.0, %v700
      %v702 = vpop.f32.mrb[0].mxu0
      %v703 = vpop.f32.mrb[0].mxu0
      %v704 = vpop.f32.mrb[0].mxu0
      %705 = vdwg.mxu0
      %v706 = vrcp.pop %v656
      %v707 = vmul.f32 %v701, %v706
      %v708 = vpack.c.bf16 %v707, %v707
      %v710 = vunpack.c.l.b16 %v708
      %v711 = vpack.c.b16 %v710, %v710
      %712 = vrot.lane.b32.xlu0 %v711, 24
      %v713 = vpop.permute.xlu0 %712
      %vm715 = vcmask 257216
      %716 = vst.msk [vmem:[#allocation2] sm:$0xf] %vm715, %v713
      %v717 = vld [vmem:[#allocation2] sm:$0xf]
      %v719 = vlaneseq
      %v720 = vshrl.u32 %v719, 7
      %v721 = vsub.s32 0, %v720
      %v722 = vrot.slane %v232, %v721
      %v728 = vunpack.c.l.b16 %v228
      %v729 = vunpack.c.l.b16 %v229
      %v730 = vunpack.c.l.b16 %v230
      %v731 = vunpack.c.l.b16 %v231
      %v732 = vpack.c.b16 %v729, %v728
      %v733 = vpack.c.b16 %v731, %v730
      %vm736 = vcmask 261120
      %v738 = vsel %vm736, %v717, 0
      %740 = vmatprep.subr.bf16.mxu0 0
      %741 = vmatpush1.bf16.msra.mxu0 %v732
      %742 = vmatprep.subr.bf16.mxu0 0
      %743 = vmatpush1.bf16.msra.mxu0 %v733
      %744 = vmatprep.subr.bf16.mxu0 0
      %745 = vmatpush1.bf16.msra.mxu0 0
      %746 = vmatprep.subr.bf16.mxu0 0
      %747 = vmatpush1.bf16.msra.mxu0 0
      %748 = vmatprep.subr.bf16.mxu0 0
      %749 = vmatpush1.bf16.msra.mxu0 0
      %750 = vmatprep.subr.bf16.mxu0 0
      %751 = vmatpush1.bf16.msra.mxu0 0
      %752 = vmatprep.subr.bf16.mxu0 0
      %753 = vmatpush1.bf16.msra.mxu0 0
      %754 = vmatprep.subr.bf16.mxu0 0
      %755 = vmatpush1.bf16.msra.mxu0 0
      %756 = vmatprep.subr.bf16.mxu0 0
      %757 = vmatpush1.bf16.msra.mxu0 0
      %758 = vmatprep.subr.bf16.mxu0 0
      %759 = vmatpush1.bf16.msra.mxu0 0
      %760 = vmatprep.subr.bf16.mxu0 0
      %761 = vmatpush1.bf16.msra.mxu0 0
      %762 = vmatprep.subr.bf16.mxu0 0
      %763 = vmatpush1.bf16.msra.mxu0 0
      %764 = vmatprep.subr.bf16.mxu0 0
      %765 = vmatpush1.bf16.msra.mxu0 0
      %766 = vmatprep.subr.bf16.mxu0 0
      %767 = vmatpush1.bf16.msra.mxu0 0
      %768 = vmatprep.subr.bf16.mxu0 0
      %769 = vmatpush1.bf16.msra.mxu0 0
      %770 = vmatprep.subr.bf16.mxu0 0
      %771 = vmatpush1.bf16.msra.mxu0 0
      %772 = vmatprep.mubr.bf16.mxu0 0
      %773 = vmatmul.mubr.bf16.gmra.mrb[0].mxu0 %v738
      %v774 = vpop.f32.mrb[0].mxu0
      %v775 = vadd.f32 %v722, %v774
      %v776 = vpop.f32.mrb[0].mxu0
      %v777 = vpop.f32.mrb[0].mxu0
      %v778 = vpop.f32.mrb[0].mxu0
      %779 = vdwg.mxu0
      %v780 = vld [vmem:[%s215] sm:$0xf]
      %v781 = vunpack.c.l.bf16 %v780
      %v782 = vadd.f32 %v775, %v781
      %v783 = vpack.c.bf16 %v782, %v782
      %vm784 = vcmask 257024
      %785 = vst.msk [vmem:[%s221] sm:$0xf] %vm784, %v783
      %s786 = scalar_lea.vmem %s209, 4
      %v787 = vld [vmem:[%s786] sm:$0xf]
      %v788 = vmul.bf16 %v787, 1052065461
      %v790 = vunpack.c.l.b16 %v787
      %v791 = vpack.c.b16 %v790, %v790
      %792 = vrot.lane.b32.xlu0 %v791, 96
      %v793 = vpop.permute.xlu0 %792
      %v795 = vsel %vm240, %v788, 0
      %v798 = vsel %vm240, %v793, 0
      %800 = vmatprep.subr.bf16.mxu0 0
      %801 = vmatpush1.bf16.xpose.msra.mxu0 %v798
      %802 = vmatprep.subr.bf16.mxu0 0
      %803 = vmatpush1.bf16.xpose.msra.mxu0 0
      %804 = vmatprep.subr.bf16.mxu0 0
      %805 = vmatpush1.bf16.xpose.msra.mxu0 0
      %806 = vmatprep.subr.bf16.mxu0 0
      %807 = vmatpush1.bf16.xpose.msra.mxu0 0
      %808 = vmatprep.subr.bf16.mxu0 0
      %809 = vmatpush1.bf16.xpose.msra.mxu0 0
      %810 = vmatprep.subr.bf16.mxu0 0
      %811 = vmatpush1.bf16.xpose.msra.mxu0 0
      %812 = vmatprep.subr.bf16.mxu0 0
      %813 = vmatpush1.bf16.xpose.msra.mxu0 0
      %814 = vmatprep.subr.bf16.mxu0 0
      %815 = vmatpush1.bf16.xpose.msra.mxu0 0
      %816 = vmatprep.subr.bf16.mxu0 0
      %817 = vmatpush1.bf16.xpose.msra.mxu0 0
      %818 = vmatprep.subr.bf16.mxu0 0
      %819 = vmatpush1.bf16.xpose.msra.mxu0 0
      %820 = vmatprep.subr.bf16.mxu0 0
      %821 = vmatpush1.bf16.xpose.msra.mxu0 0
      %822 = vmatprep.subr.bf16.mxu0 0
      %823 = vmatpush1.bf16.xpose.msra.mxu0 0
      %824 = vmatprep.subr.bf16.mxu0 0
      %825 = vmatpush1.bf16.xpose.msra.mxu0 0
      %826 = vmatprep.subr.bf16.mxu0 0
      %827 = vmatpush1.bf16.xpose.msra.mxu0 0
      %828 = vmatprep.subr.bf16.mxu0 0
      %829 = vmatpush1.bf16.xpose.msra.mxu0 0
      %830 = vmatprep.subr.bf16.mxu0 0
      %831 = vmatpush1.bf16.xpose.msra.mxu0 0
      %832 = vmatprep.mubr.bf16.mxu0 0
      %833 = vmatmul.mubr.bf16.gmra.mrb[0].mxu0 %v795
      %v834 = vpop.f32.mrb[0].mxu0
      %v835 = vadd.f32 0.0, %v834
      %v836 = vpop.f32.mrb[0].mxu0
      %v837 = vpop.f32.mrb[0].mxu0
      %v838 = vpop.f32.mrb[0].mxu0
      %839 = vdwg.mxu0
      %v840 = vsel %vm288, %v835, -1e+30
      %v841 = vsel %vm240, %v840, -inf
      %842 = vmax.xlane.f32.xlu0 %v841
      %v843 = vpop.xlane.xlu0 %842
      %v844 = vsub.f32 %v840, %v843
      %v845 = vmul.f32 %v844, 1.442695
      %v846 = vpow.pop %v845
      %v847 = vsel %vm240, %v846, 0.0
      %848 = vadd.xlane.f32.xlu0 %v847
      %v849 = vpop.xlane.xlu0 %848
      %v850 = vpack.c.bf16 %v846, %v846
      %851 = vrot.lane.b32.xlu0 %v791, 64
      %v852 = vpop.permute.xlu0 %851
      %v854 = vsel %vm240, %v850, 0
      %v857 = vsel %vm305, %v852, 0
      %859 = vmatprep.subr.bf16.mxu0 0
      %860 = vmatpush1.bf16.msra.mxu0 %v857
      %861 = vmatprep.subr.bf16.mxu0 0
      %862 = vmatpush1.bf16.msra.mxu0 0
      %863 = vmatprep.subr.bf16.mxu0 0
      %864 = vmatpush1.bf16.msra.mxu0 0
      %865 = vmatprep.subr.bf16.mxu0 0
      %866 = vmatpush1.bf16.msra.mxu0 0
      %867 = vmatprep.subr.bf16.mxu0 0
      %868 = vmatpush1.bf16.msra.mxu0 0
      %869 = vmatprep.subr.bf16.mxu0 0
      %870 = vmatpush1.bf16.msra.mxu0 0
      %871 = vmatprep.subr.bf16.mxu0 0
      %872 = vmatpush1.bf16.msra.mxu0 0
      %873 = vmatprep.subr.bf16.mxu0 0
      %874 = vmatpush1.bf16.msra.mxu0 0
      %875 = vmatprep.subr.bf16.mxu0 0
      %876 = vmatpush1.bf16.msra.mxu0 0
      %877 = vmatprep.subr.bf16.mxu0 0
      %878 = vmatpush1.bf16.msra.mxu0 0
      %879 = vmatprep.subr.bf16.mxu0 0
      %880 = vmatpush1.bf16.msra.mxu0 0
      %881 = vmatprep.subr.bf16.mxu0 0
      %882 = vmatpush1.bf16.msra.mxu0 0
      %883 = vmatprep.subr.bf16.mxu0 0
      %884 = vmatpush1.bf16.msra.mxu0 0
      %885 = vmatprep.subr.bf16.mxu0 0
      %886 = vmatpush1.bf16.msra.mxu0 0
      %887 = vmatprep.subr.bf16.mxu0 0
      %888 = vmatpush1.bf16.msra.mxu0 0
      %889 = vmatprep.subr.bf16.mxu0 0
      %890 = vmatpush1.bf16.msra.mxu0 0
      %891 = vmatprep.mubr.bf16.mxu0 0
      %892 = vmatmul.mubr.bf16.gmra.mrb[0].mxu0 %v854
      %v893 = vpop.f32.mrb[0].mxu0
      %v894 = vadd.f32 0.0, %v893
      %v895 = vpop.f32.mrb[0].mxu0
      %v896 = vpop.f32.mrb[0].mxu0
      %v897 = vpop.f32.mrb[0].mxu0
      %898 = vdwg.mxu0
      %v899 = vrcp.pop %v849
      %v900 = vmul.f32 %v894, %v899
      %v901 = vpack.c.bf16 %v900, %v900
      %902 = vst.msk [vmem:[#allocation2] sm:$0xf] %vm352, %v901
      %v904 = vunpack.c.l.b16 %v788
      %v905 = vpack.c.b16 %v904, %v904
      %906 = vrot.lane.b32.xlu0 %v905, 120
      %v907 = vpop.permute.xlu0 %906
      %908 = vrot.lane.b32.xlu0 %v791, 88
      %v909 = vpop.permute.xlu0 %908
      %v911 = vsel %vm240, %v907, 0
      %v914 = vsel %vm240, %v909, 0
      %916 = vmatprep.subr.bf16.mxu0 0
      %917 = vmatpush1.bf16.xpose.msra.mxu0 %v914
      %918 = vmatprep.subr.bf16.mxu0 0
      %919 = vmatpush1.bf16.xpose.msra.mxu0 0
      %920 = vmatprep.subr.bf16.mxu0 0
      %921 = vmatpush1.bf16.xpose.msra.mxu0 0
      %922 = vmatprep.subr.bf16.mxu0 0
      %923 = vmatpush1.bf16.xpose.msra.mxu0 0
      %924 = vmatprep.subr.bf16.mxu0 0
      %925 = vmatpush1.bf16.xpose.msra.mxu0 0
      %926 = vmatprep.subr.bf16.mxu0 0
      %927 = vmatpush1.bf16.xpose.msra.mxu0 0
      %928 = vmatprep.subr.bf16.mxu0 0
      %929 = vmatpush1.bf16.xpose.msra.mxu0 0
      %930 = vmatprep.subr.bf16.mxu0 0
      %931 = vmatpush1.bf16.xpose.msra.mxu0 0
      %932 = vmatprep.subr.bf16.mxu0 0
      %933 = vmatpush1.bf16.xpose.msra.mxu0 0
      %934 = vmatprep.subr.bf16.mxu0 0
      %935 = vmatpush1.bf16.xpose.msra.mxu0 0
      %936 = vmatprep.subr.bf16.mxu0 0
      %937 = vmatpush1.bf16.xpose.msra.mxu0 0
      %938 = vmatprep.subr.bf16.mxu0 0
      %939 = vmatpush1.bf16.xpose.msra.mxu0 0
      %940 = vmatprep.subr.bf16.mxu0 0
      %941 = vmatpush1.bf16.xpose.msra.mxu0 0
      %942 = vmatprep.subr.bf16.mxu0 0
      %943 = vmatpush1.bf16.xpose.msra.mxu0 0
      %944 = vmatprep.subr.bf16.mxu0 0
      %945 = vmatpush1.bf16.xpose.msra.mxu0 0
      %946 = vmatprep.subr.bf16.mxu0 0
      %947 = vmatpush1.bf16.xpose.msra.mxu0 0
      %948 = vmatprep.mubr.bf16.mxu0 0
      %949 = vmatmul.mubr.bf16.gmra.mrb[0].mxu0 %v911
      %v950 = vpop.f32.mrb[0].mxu0
      %v951 = vadd.f32 0.0, %v950
      %v952 = vpop.f32.mrb[0].mxu0
      %v953 = vpop.f32.mrb[0].mxu0
      %v954 = vpop.f32.mrb[0].mxu0
      %955 = vdwg.mxu0
      %v956 = vsel %vm288, %v951, -1e+30
      %v957 = vsel %vm240, %v956, -inf
      %958 = vmax.xlane.f32.xlu0 %v957
      %v959 = vpop.xlane.xlu0 %958
      %v960 = vsub.f32 %v956, %v959
      %v961 = vmul.f32 %v960, 1.442695
      %v962 = vpow.pop %v961
      %v963 = vsel %vm240, %v962, 0.0
      %964 = vadd.xlane.f32.xlu0 %v963
      %v965 = vpop.xlane.xlu0 %964
      %v966 = vpack.c.bf16 %v962, %v962
      %967 = vrot.lane.b32.xlu0 %v791, 56
      %v968 = vpop.permute.xlu0 %967
      %v970 = vsel %vm240, %v966, 0
      %v973 = vsel %vm305, %v968, 0
      %975 = vmatprep.subr.bf16.mxu0 0
      %976 = vmatpush1.bf16.msra.mxu0 %v973
      %977 = vmatprep.subr.bf16.mxu0 0
      %978 = vmatpush1.bf16.msra.mxu0 0
      %979 = vmatprep.subr.bf16.mxu0 0
      %980 = vmatpush1.bf16.msra.mxu0 0
      %981 = vmatprep.subr.bf16.mxu0 0
      %982 = vmatpush1.bf16.msra.mxu0 0
      %983 = vmatprep.subr.bf16.mxu0 0
      %984 = vmatpush1.bf16.msra.mxu0 0
      %985 = vmatprep.subr.bf16.mxu0 0
      %986 = vmatpush1.bf16.msra.mxu0 0
      %987 = vmatprep.subr.bf16.mxu0 0
      %988 = vmatpush1.bf16.msra.mxu0 0
      %989 = vmatprep.subr.bf16.mxu0 0
      %990 = vmatpush1.bf16.msra.mxu0 0
      %991 = vmatprep.subr.bf16.mxu0 0
      %992 = vmatpush1.bf16.msra.mxu0 0
      %993 = vmatprep.subr.bf16.mxu0 0
      %994 = vmatpush1.bf16.msra.mxu0 0
      %995 = vmatprep.subr.bf16.mxu0 0
      %996 = vmatpush1.bf16.msra.mxu0 0
      %997 = vmatprep.subr.bf16.mxu0 0
      %998 = vmatpush1.bf16.msra.mxu0 0
      %999 = vmatprep.subr.bf16.mxu0 0
      %1000 = vmatpush1.bf16.msra.mxu0 0
      %1001 = vmatprep.subr.bf16.mxu0 0
      %1002 = vmatpush1.bf16.msra.mxu0 0
      %1003 = vmatprep.subr.bf16.mxu0 0
      %1004 = vmatpush1.bf16.msra.mxu0 0
      %1005 = vmatprep.subr.bf16.mxu0 0
      %1006 = vmatpush1.bf16.msra.mxu0 0
      %1007 = vmatprep.mubr.bf16.mxu0 0
      %1008 = vmatmul.mubr.bf16.gmra.mrb[0].mxu0 %v970
      %v1009 = vpop.f32.mrb[0].mxu0
      %v1010 = vadd.f32 0.0, %v1009
      %v1011 = vpop.f32.mrb[0].mxu0
      %v1012 = vpop.f32.mrb[0].mxu0
      %v1013 = vpop.f32.mrb[0].mxu0
      %1014 = vdwg.mxu0
      %v1015 = vrcp.pop %v965
      %v1016 = vmul.f32 %v1010, %v1015
      %v1017 = vpack.c.bf16 %v1016, %v1016
      %v1019 = vunpack.c.l.b16 %v1017
      %v1020 = vpack.c.b16 %v1019, %v1019
      %1021 = vrot.lane.b32.xlu0 %v1020, 8
      %v1022 = vpop.permute.xlu0 %1021
      %1024 = vst.msk [vmem:[#allocation2] sm:$0xf] %vm475, %v1022
      %1025 = vrot.lane.b32.xlu0 %v905, 112
      %v1026 = vpop.permute.xlu0 %1025
      %1027 = vrot.lane.b32.xlu0 %v791, 80
      %v1028 = vpop.permute.xlu0 %1027
      %v1030 = vsel %vm240, %v1026, 0
      %v1033 = vsel %vm240, %v1028, 0
      %1035 = vmatprep.subr.bf16.mxu0 0
      %1036 = vmatpush1.bf16.xpose.msra.mxu0 %v1033
      %1037 = vmatprep.subr.bf16.mxu0 0
      %1038 = vmatpush1.bf16.xpose.msra.mxu0 0
      %1039 = vmatprep.subr.bf16.mxu0 0
      %1040 = vmatpush1.bf16.xpose.msra.mxu0 0
      %1041 = vmatprep.subr.bf16.mxu0 0
      %1042 = vmatpush1.bf16.xpose.msra.mxu0 0
      %1043 = vmatprep.subr.bf16.mxu0 0
      %1044 = vmatpush1.bf16.xpose.msra.mxu0 0
      %1045 = vmatprep.subr.bf16.mxu0 0
      %1046 = vmatpush1.bf16.xpose.msra.mxu0 0
      %1047 = vmatprep.subr.bf16.mxu0 0
      %1048 = vmatpush1.bf16.xpose.msra.mxu0 0
      %1049 = vmatprep.subr.bf16.mxu0 0
      %1050 = vmatpush1.bf16.xpose.msra.mxu0 0
      %1051 = vmatprep.subr.bf16.mxu0 0
      %1052 = vmatpush1.bf16.xpose.msra.mxu0 0
      %1053 = vmatprep.subr.bf16.mxu0 0
      %1054 = vmatpush1.bf16.xpose.msra.mxu0 0
      %1055 = vmatprep.subr.bf16.mxu0 0
      %1056 = vmatpush1.bf16.xpose.msra.mxu0 0
      %1057 = vmatprep.subr.bf16.mxu0 0
      %1058 = vmatpush1.bf16.xpose.msra.mxu0 0
      %1059 = vmatprep.subr.bf16.mxu0 0
      %1060 = vmatpush1.bf16.xpose.msra.mxu0 0
      %1061 = vmatprep.subr.bf16.mxu0 0
      %1062 = vmatpush1.bf16.xpose.msra.mxu0 0
      %1063 = vmatprep.subr.bf16.mxu0 0
      %1064 = vmatpush1.bf16.xpose.msra.mxu0 0
      %1065 = vmatprep.subr.bf16.mxu0 0
      %1066 = vmatpush1.bf16.xpose.msra.mxu0 0
      %1067 = vmatprep.mubr.bf16.mxu0 0
      %1068 = vmatmul.mubr.bf16.gmra.mrb[0].mxu0 %v1030
      %v1069 = vpop.f32.mrb[0].mxu0
      %v1070 = vadd.f32 0.0, %v1069
      %v1071 = vpop.f32.mrb[0].mxu0
      %v1072 = vpop.f32.mrb[0].mxu0
      %v1073 = vpop.f32.mrb[0].mxu0
      %1074 = vdwg.mxu0
      %v1075 = vsel %vm288, %v1070, -1e+30
      %v1076 = vsel %vm240, %v1075, -inf
      %1077 = vmax.xlane.f32.xlu0 %v1076
      %v1078 = vpop.xlane.xlu0 %1077
      %v1079 = vsub.f32 %v1075, %v1078
      %v1080 = vmul.f32 %v1079, 1.442695
      %v1081 = vpow.pop %v1080
      %v1082 = vsel %vm240, %v1081, 0.0
      %1083 = vadd.xlane.f32.xlu0 %v1082
      %v1084 = vpop.xlane.xlu0 %1083
      %v1085 = vpack.c.bf16 %v1081, %v1081
      %1086 = vrot.lane.b32.xlu0 %v791, 48
      %v1087 = vpop.permute.xlu0 %1086
      %v1089 = vsel %vm240, %v1085, 0
      %v1092 = vsel %vm305, %v1087, 0
      %1094 = vmatprep.subr.bf16.mxu0 0
      %1095 = vmatpush1.bf16.msra.mxu0 %v1092
      %1096 = vmatprep.subr.bf16.mxu0 0
      %1097 = vmatpush1.bf16.msra.mxu0 0
      %1098 = vmatprep.subr.bf16.mxu0 0
      %1099 = vmatpush1.bf16.msra.mxu0 0
      %1100 = vmatprep.subr.bf16.mxu0 0
      %1101 = vmatpush1.bf16.msra.mxu0 0
      %1102 = vmatprep.subr.bf16.mxu0 0
      %1103 = vmatpush1.bf16.msra.mxu0 0
      %1104 = vmatprep.subr.bf16.mxu0 0
      %1105 = vmatpush1.bf16.msra.mxu0 0
      %1106 = vmatprep.subr.bf16.mxu0 0
      %1107 = vmatpush1.bf16.msra.mxu0 0
      %1108 = vmatprep.subr.bf16.mxu0 0
      %1109 = vmatpush1.bf16.msra.mxu0 0
      %1110 = vmatprep.subr.bf16.mxu0 0
      %1111 = vmatpush1.bf16.msra.mxu0 0
      %1112 = vmatprep.subr.bf16.mxu0 0
      %1113 = vmatpush1.bf16.msra.mxu0 0
      %1114 = vmatprep.subr.bf16.mxu0 0
      %1115 = vmatpush1.bf16.msra.mxu0 0
      %1116 = vmatprep.subr.bf16.mxu0 0
      %1117 = vmatpush1.bf16.msra.mxu0 0
      %1118 = vmatprep.subr.bf16.mxu0 0
      %1119 = vmatpush1.bf16.msra.mxu0 0
      %1120 = vmatprep.subr.bf16.mxu0 0
      %1121 = vmatpush1.bf16.msra.mxu0 0
      %1122 = vmatprep.subr.bf16.mxu0 0
      %1123 = vmatpush1.bf16.msra.mxu0 0
      %1124 = vmatprep.subr.bf16.mxu0 0
      %1125 = vmatpush1.bf16.msra.mxu0 0
      %1126 = vmatprep.mubr.bf16.mxu0 0
      %1127 = vmatmul.mubr.bf16.gmra.mrb[0].mxu0 %v1089
      %v1128 = vpop.f32.mrb[0].mxu0
      %v1129 = vadd.f32 0.0, %v1128
      %v1130 = vpop.f32.mrb[0].mxu0
      %v1131 = vpop.f32.mrb[0].mxu0
      %v1132 = vpop.f32.mrb[0].mxu0
      %1133 = vdwg.mxu0
      %v1134 = vrcp.pop %v1084
      %v1135 = vmul.f32 %v1129, %v1134
      %v1136 = vpack.c.bf16 %v1135, %v1135
      %v1138 = vunpack.c.l.b16 %v1136
      %v1139 = vpack.c.b16 %v1138, %v1138
      %1140 = vrot.lane.b32.xlu0 %v1139, 16
      %v1141 = vpop.permute.xlu0 %1140
      %1143 = vst.msk [vmem:[#allocation2] sm:$0xf] %vm595, %v1141
      %1144 = vrot.lane.b32.xlu0 %v905, 104
      %v1145 = vpop.permute.xlu0 %1144
      %1146 = vrot.lane.b32.xlu0 %v791, 72
      %v1147 = vpop.permute.xlu0 %1146
      %v1149 = vsel %vm240, %v1145, 0
      %v1152 = vsel %vm240, %v1147, 0
      %1154 = vmatprep.subr.bf16.mxu0 0
      %1155 = vmatpush1.bf16.xpose.msra.mxu0 %v1152
      %1156 = vmatprep.subr.bf16.mxu0 0
      %1157 = vmatpush1.bf16.xpose.msra.mxu0 0
      %1158 = vmatprep.subr.bf16.mxu0 0
      %1159 = vmatpush1.bf16.xpose.msra.mxu0 0
      %1160 = vmatprep.subr.bf16.mxu0 0
      %1161 = vmatpush1.bf16.xpose.msra.mxu0 0
      %1162 = vmatprep.subr.bf16.mxu0 0
      %1163 = vmatpush1.bf16.xpose.msra.mxu0 0
      %1164 = vmatprep.subr.bf16.mxu0 0
      %1165 = vmatpush1.bf16.xpose.msra.mxu0 0
      %1166 = vmatprep.subr.bf16.mxu0 0
      %1167 = vmatpush1.bf16.xpose.msra.mxu0 0
      %1168 = vmatprep.subr.bf16.mxu0 0
      %1169 = vmatpush1.bf16.xpose.msra.mxu0 0
      %1170 = vmatprep.subr.bf16.mxu0 0
      %1171 = vmatpush1.bf16.xpose.msra.mxu0 0
      %1172 = vmatprep.subr.bf16.mxu0 0
      %1173 = vmatpush1.bf16.xpose.msra.mxu0 0
      %1174 = vmatprep.subr.bf16.mxu0 0
      %1175 = vmatpush1.bf16.xpose.msra.mxu0 0
      %1176 = vmatprep.subr.bf16.mxu0 0
      %1177 = vmatpush1.bf16.xpose.msra.mxu0 0
      %1178 = vmatprep.subr.bf16.mxu0 0
      %1179 = vmatpush1.bf16.xpose.msra.mxu0 0
      %1180 = vmatprep.subr.bf16.mxu0 0
      %1181 = vmatpush1.bf16.xpose.msra.mxu0 0
      %1182 = vmatprep.subr.bf16.mxu0 0
      %1183 = vmatpush1.bf16.xpose.msra.mxu0 0
      %1184 = vmatprep.subr.bf16.mxu0 0
      %1185 = vmatpush1.bf16.xpose.msra.mxu0 0
      %1186 = vmatprep.mubr.bf16.mxu0 0
      %1187 = vmatmul.mubr.bf16.gmra.mrb[0].mxu0 %v1149
      %v1188 = vpop.f32.mrb[0].mxu0
      %v1189 = vadd.f32 0.0, %v1188
      %v1190 = vpop.f32.mrb[0].mxu0
      %v1191 = vpop.f32.mrb[0].mxu0
      %v1192 = vpop.f32.mrb[0].mxu0
      %1193 = vdwg.mxu0
      %v1194 = vsel %vm288, %v1189, -1e+30
      %v1195 = vsel %vm240, %v1194, -inf
      %1196 = vmax.xlane.f32.xlu0 %v1195
      %v1197 = vpop.xlane.xlu0 %1196
      %v1198 = vsub.f32 %v1194, %v1197
      %v1199 = vmul.f32 %v1198, 1.442695
      %v1200 = vpow.pop %v1199
      %v1201 = vsel %vm240, %v1200, 0.0
      %1202 = vadd.xlane.f32.xlu0 %v1201
      %v1203 = vpop.xlane.xlu0 %1202
      %v1204 = vpack.c.bf16 %v1200, %v1200
      %1205 = vrot.lane.b32.xlu0 %v791, 40
      %v1206 = vpop.permute.xlu0 %1205
      %v1208 = vsel %vm240, %v1204, 0
      %v1211 = vsel %vm305, %v1206, 0
      %1213 = vmatprep.subr.bf16.mxu0 0
      %1214 = vmatpush1.bf16.msra.mxu0 %v1211
      %1215 = vmatprep.subr.bf16.mxu0 0
      %1216 = vmatpush1.bf16.msra.mxu0 0
      %1217 = vmatprep.subr.bf16.mxu0 0
      %1218 = vmatpush1.bf16.msra.mxu0 0
      %1219 = vmatprep.subr.bf16.mxu0 0
      %1220 = vmatpush1.bf16.msra.mxu0 0
      %1221 = vmatprep.subr.bf16.mxu0 0
      %1222 = vmatpush1.bf16.msra.mxu0 0
      %1223 = vmatprep.subr.bf16.mxu0 0
      %1224 = vmatpush1.bf16.msra.mxu0 0
      %1225 = vmatprep.subr.bf16.mxu0 0
      %1226 = vmatpush1.bf16.msra.mxu0 0
      %1227 = vmatprep.subr.bf16.mxu0 0
      %1228 = vmatpush1.bf16.msra.mxu0 0
      %1229 = vmatprep.subr.bf16.mxu0 0
      %1230 = vmatpush1.bf16.msra.mxu0 0
      %1231 = vmatprep.subr.bf16.mxu0 0
      %1232 = vmatpush1.bf16.msra.mxu0 0
      %1233 = vmatprep.subr.bf16.mxu0 0
      %1234 = vmatpush1.bf16.msra.mxu0 0
      %1235 = vmatprep.subr.bf16.mxu0 0
      %1236 = vmatpush1.bf16.msra.mxu0 0
      %1237 = vmatprep.subr.bf16.mxu0 0
      %1238 = vmatpush1.bf16.msra.mxu0 0
      %1239 = vmatprep.subr.bf16.mxu0 0
      %1240 = vmatpush1.bf16.msra.mxu0 0
      %1241 = vmatprep.subr.bf16.mxu0 0
      %1242 = vmatpush1.bf16.msra.mxu0 0
      %1243 = vmatprep.subr.bf16.mxu0 0
      %1244 = vmatpush1.bf16.msra.mxu0 0
      %1245 = vmatprep.mubr.bf16.mxu0 0
      %1246 = vmatmul.mubr.bf16.gmra.mrb[0].mxu0 %v1208
      %v1247 = vpop.f32.mrb[0].mxu0
      %v1248 = vadd.f32 0.0, %v1247
      %v1249 = vpop.f32.mrb[0].mxu0
      %v1250 = vpop.f32.mrb[0].mxu0
      %v1251 = vpop.f32.mrb[0].mxu0
      %1252 = vdwg.mxu0
      %v1253 = vrcp.pop %v1203
      %v1254 = vmul.f32 %v1248, %v1253
      %v1255 = vpack.c.bf16 %v1254, %v1254
      %v1257 = vunpack.c.l.b16 %v1255
      %v1258 = vpack.c.b16 %v1257, %v1257
      %1259 = vrot.lane.b32.xlu0 %v1258, 24
      %v1260 = vpop.permute.xlu0 %1259
      %1262 = vst.msk [vmem:[#allocation2] sm:$0xf] %vm715, %v1260
      %v1263 = vld [vmem:[#allocation2] sm:$0xf]
      %v1265 = vsel %vm736, %v1263, 0
      %1267 = vmatprep.subr.bf16.mxu0 0
      %1268 = vmatpush1.bf16.msra.mxu0 %v732
      %1269 = vmatprep.subr.bf16.mxu0 0
      %1270 = vmatpush1.bf16.msra.mxu0 %v733
      %1271 = vmatprep.subr.bf16.mxu0 0
      %1272 = vmatpush1.bf16.msra.mxu0 0
      %1273 = vmatprep.subr.bf16.mxu0 0
      %1274 = vmatpush1.bf16.msra.mxu0 0
      %1275 = vmatprep.subr.bf16.mxu0 0
      %1276 = vmatpush1.bf16.msra.mxu0 0
      %1277 = vmatprep.subr.bf16.mxu0 0
      %1278 = vmatpush1.bf16.msra.mxu0 0
      %1279 = vmatprep.subr.bf16.mxu0 0
      %1280 = vmatpush1.bf16.msra.mxu0 0
      %1281 = vmatprep.subr.bf16.mxu0 0
      %1282 = vmatpush1.bf16.msra.mxu0 0
      %1283 = vmatprep.subr.bf16.mxu0 0
      %1284 = vmatpush1.bf16.msra.mxu0 0
      %1285 = vmatprep.subr.bf16.mxu0 0
      %1286 = vmatpush1.bf16.msra.mxu0 0
      %1287 = vmatprep.subr.bf16.mxu0 0
      %1288 = vmatpush1.bf16.msra.mxu0 0
      %1289 = vmatprep.subr.bf16.mxu0 0
      %1290 = vmatpush1.bf16.msra.mxu0 0
      %1291 = vmatprep.subr.bf16.mxu0 0
      %1292 = vmatpush1.bf16.msra.mxu0 0
      %1293 = vmatprep.subr.bf16.mxu0 0
      %1294 = vmatpush1.bf16.msra.mxu0 0
      %1295 = vmatprep.subr.bf16.mxu0 0
      %1296 = vmatpush1.bf16.msra.mxu0 0
      %1297 = vmatprep.subr.bf16.mxu0 0
      %1298 = vmatpush1.bf16.msra.mxu0 0
      %1299 = vmatprep.mubr.bf16.mxu0 0
      %1300 = vmatmul.mubr.bf16.gmra.mrb[0].mxu0 %v1265
      %v1301 = vpop.f32.mrb[0].mxu0
      %v1302 = vadd.f32 %v722, %v1301
      %v1303 = vpop.f32.mrb[0].mxu0
      %v1304 = vpop.f32.mrb[0].mxu0
      %v1305 = vpop.f32.mrb[0].mxu0
      %1306 = vdwg.mxu0
      %s1307 = scalar_lea.vmem %s215, 4
      %v1308 = vld [vmem:[%s1307] sm:$0xf]
      %v1309 = vunpack.c.l.bf16 %v1308
      %v1310 = vadd.f32 %v1302, %v1309
      %v1311 = vpack.c.bf16 %v1310, %v1310
      %s1312 = scalar_lea.vmem %s221, 4
      %1313 = vst.msk [vmem:[%s1312] sm:$0xf] %vm784, %v1311
      %s1314 = smul.u32 2, %s15
      %p1315 = scmp.lt.s32.totalorder %s1314, 3
      %s1316 = scalar_select %p1315, %s1314, 3
      %s1317 = smul.addr %s1316, 4
      %s1318 = scalar_lea.vmem %s4, %s1317
      // Predicated region
      $region37: #{vit_forward.12} parent=35 // pred_check
        %p1319 = pneg %p127
      $region38: #{vit_forward.12} parent=35 // pred_check_branch
        %1321 = sbr.rel (%p1319) target = $region40
      $region39: #{vit_forward.12} parent=35 // pred_region
        %s1322 = smul.u32 2, %s15
      $region40: #{vit_forward.12} parent=35 // pred_fallthru
        _
    $region36: #{vit_forward.12} parent=5 // pred_fallthru
      _
    %p1323 = scmp.le.s32.totalorder 2, %s10
    // Predicated region
    $region41: #{vit_forward.12} parent=5 // pred_check
      %p1324 = pneg %p1323
    $region42: #{vit_forward.12} parent=5 // pred_check_branch
      %1326 = sbr.rel (%p1324) target = $region44
    $region43: #{vit_forward.12} parent=5 // pred_region
      %s1327 = ssub.s32 %s10, 2
      // Predicated region
      $region45: #{vit_forward.12} parent=43 // pred_check
        %p1328 = pneg %p133
      $region46: #{vit_forward.12} parent=43 // pred_check_branch
        %1330 = sbr.rel (%p1328) target = $region48
      $region47: #{vit_forward.12} parent=43 // pred_region
        %s1331 = smul.u32 2, %s16
        %p1332 = scmp.lt.s32.totalorder %s1331, 3
        %s1333 = scalar_select %p1332, %s1331, 3
        %s1334 = smul.addr %s1333, 4
        %s1335 = scalar_lea.vmem %s4, %s1334
      $region48: #{vit_forward.12} parent=43 // pred_fallthru
        _
    $region44: #{vit_forward.12} parent=5 // pred_fallthru
      _
  $region6: #{vit_forward.12} parent=0 // loop_footer
    %s14 = sadd.s32 1, %s10
  $region7: #{vit_forward.12} parent=0 // loop_footer_branch
    %9 = sbr.rel target = $region3
  $region8: #{vit_forward.12} parent=0 // loop_exit
    _

// kernel: vit_forward.13
$region0: #{vit_forward.13}
  #allocation0 [shape = 'u32[]', space=smem, size = 0x4, offset = 0x4, fixed_abs, tag = 'smem constant byte address 0x4 - core index']
  #allocation1 [shape = 'u32[144,128]{1,0:T(1,128)}', space=vmem, size = 0x12000, scoped, tag = 'internal scratch']
  #allocation2 [shape = 'bf16[32,32]{1,0:T(16,128)(2,1)}', space=vmem, size = 0x2000, scoped, tag = 'scratch operand']
  %s0 = inlined_call_operand.vmem [shape: bf16[32,32], index: 0, kind: input, shape index: {}]
  %s1 = inlined_call_operand.vmem [shape: f32[1,32], index: 1, kind: input, shape index: {}]
  %s2 = inlined_call_operand.vmem [shape: f32[1,32], index: 2, kind: input, shape index: {}]
  %s3 = inlined_call_operand.vmem [shape: bf16[32,128], index: 3, kind: input, shape index: {}]
  %s4 = inlined_call_operand.vmem [shape: f32[1,128], index: 4, kind: input, shape index: {}]
  %s5 = inlined_call_operand.vmem [shape: bf16[32,128], index: 5, kind: output, shape index: {}]
  %s6 = sld [smem:[#allocation0]]
  $region34: #{vit_forward.13} parent=0
    _
  %s8 = ssub.s32 1, %s6
  %s9 = scalar_select 0, %s8, %s6
  // Predicated region
  $region2: #{vit_forward.13} parent=0 // pred_check
    _
  $region3: #{vit_forward.13} parent=0 // pred_check_branch
    %11 = sbr.rel (0) target = $region5
  $region4: #{vit_forward.13} parent=0 // pred_region
    _
  $region5: #{vit_forward.13} parent=0 // pred_fallthru
    _
  // Predicated region
  $region6: #{vit_forward.13} parent=0 // pred_check
    _
  $region7: #{vit_forward.13} parent=0 // pred_check_branch
    %13 = sbr.rel (0) target = $region9
  $region8: #{vit_forward.13} parent=0 // pred_region
    _
  $region9: #{vit_forward.13} parent=0 // pred_fallthru
    _
  // Predicated region
  $region10: #{vit_forward.13} parent=0 // pred_check
    _
  $region11: #{vit_forward.13} parent=0 // pred_check_branch
    %15 = sbr.rel (0) target = $region13
  $region12: #{vit_forward.13} parent=0 // pred_region
    _
  $region13: #{vit_forward.13} parent=0 // pred_fallthru
    _
  // Predicated region
  $region14: #{vit_forward.13} parent=0 // pred_check
    _
  $region15: #{vit_forward.13} parent=0 // pred_check_branch
    %17 = sbr.rel (0) target = $region17
  $region16: #{vit_forward.13} parent=0 // pred_region
    _
  $region17: #{vit_forward.13} parent=0 // pred_fallthru
    _
  // Predicated region
  $region18: #{vit_forward.13} parent=0 // pred_check
    _
  $region19: #{vit_forward.13} parent=0 // pred_check_branch
    %19 = sbr.rel (0) target = $region21
  $region20: #{vit_forward.13} parent=0 // pred_region
    _
  $region21: #{vit_forward.13} parent=0 // pred_fallthru
    _
  %p21 = scmp.eq.s32.totalorder 0, 0
  // Predicated region
  $region22: #{vit_forward.13} parent=0 // pred_check
    %p22 = pneg %p21
  $region23: #{vit_forward.13} parent=0 // pred_check_branch
    %24 = sbr.rel (%p22) target = $region25
  $region24: #{vit_forward.13} parent=0 // pred_region
    %v25 = vld [vmem:[%s0] sm:$0xf]
    %v26 = vld [vmem:[%s0 + $0x4] sm:$0xf]
    %v27 = vld [vmem:[%s0 + $0x8] sm:$0xf]
    %v28 = vld [vmem:[%s0 + $0xc] sm:$0xf]
    %v29 = vunpack.c.l.bf16 %v25
    %v30 = vunpack.c.l.bf16 %v26
    %v31 = vunpack.c.l.bf16 %v27
    %v32 = vunpack.c.l.bf16 %v28
    %vm33 = vcmask 261120
    %v34 = vsel %vm33, %v29, 0.0
    %35 = vadd.xlane.f32.xlu0 %v34
    %v36 = vpop.xlane.xlu0 %35
    %v37 = vsel %vm33, %v30, 0.0
    %38 = vadd.xlane.f32.xlu0 %v37
    %v39 = vpop.xlane.xlu0 %38
    %v40 = vsel %vm33, %v31, 0.0
    %41 = vadd.xlane.f32.xlu0 %v40
    %v42 = vpop.xlane.xlu0 %41
    %v43 = vsel %vm33, %v32, 0.0
    %44 = vadd.xlane.f32.xlu0 %v43
    %v45 = vpop.xlane.xlu0 %44
    %v46 = vrcp.pop 32.0
    %v47 = vmul.f32 %v36, %v46
    %v48 = vmul.f32 %v39, %v46
    %v49 = vmul.f32 %v42, %v46
    %v50 = vmul.f32 %v45, %v46
    %v51 = vsub.f32 %v29, %v47
    %v52 = vsub.f32 %v30, %v48
    %v53 = vsub.f32 %v31, %v49
    %v54 = vsub.f32 %v32, %v50
    %v55 = vmul.f32 %v51, %v51
    %v56 = vmul.f32 %v52, %v52
    %v57 = vmul.f32 %v53, %v53
    %v58 = vmul.f32 %v54, %v54
    %v59 = vsel %vm33, %v55, 0.0
    %60 = vadd.xlane.f32.xlu0 %v59
    %v61 = vpop.xlane.xlu0 %60
    %v62 = vsel %vm33, %v56, 0.0
    %63 = vadd.xlane.f32.xlu0 %v62
    %v64 = vpop.xlane.xlu0 %63
    %v65 = vsel %vm33, %v57, 0.0
    %66 = vadd.xlane.f32.xlu0 %v65
    %v67 = vpop.xlane.xlu0 %66
    %v68 = vsel %vm33, %v58, 0.0
    %69 = vadd.xlane.f32.xlu0 %v68
    %v70 = vpop.xlane.xlu0 %69
    %v71 = vmul.f32 %v61, %v46
    %v72 = vmul.f32 %v64, %v46
    %v73 = vmul.f32 %v67, %v46
    %v74 = vmul.f32 %v70, %v46
    %v75 = vadd.f32 %v71, 1e-06
    %v76 = vadd.f32 %v72, 1e-06
    %v77 = vadd.f32 %v73, 1e-06
    %v78 = vadd.f32 %v74, 1e-06
    %v79 = vrsqrt.pop %v75
    %v80 = vrsqrt.pop %v76
    %v81 = vrsqrt.pop %v77
    %v82 = vrsqrt.pop %v78
    %v83 = vmul.f32 %v51, %v79
    %v84 = vmul.f32 %v52, %v80
    %v85 = vmul.f32 %v53, %v81
    %v86 = vmul.f32 %v54, %v82
    %v87 = vld [vmem:[%s1] sm:$0x1]
    %v89 = vlaneseq
    %v90 = vshrl.u32 %v89, 7
    %v91 = vsub.s32 0, %v90
    %v92 = vrot.slane %v87, %v91
    %v94 = vmul.f32 %v83, %v92
    %v95 = vmul.f32 %v84, %v92
    %v96 = vmul.f32 %v85, %v92
    %v97 = vmul.f32 %v86, %v92
    %v98 = vld [vmem:[%s2] sm:$0x1]
    %v100 = vlaneseq
    %v101 = vshrl.u32 %v100, 7
    %v102 = vsub.s32 0, %v101
    %v103 = vrot.slane %v98, %v102
    %v105 = vadd.f32 %v94, %v103
    %v106 = vadd.f32 %v95, %v103
    %v107 = vadd.f32 %v96, %v103
    %v108 = vadd.f32 %v97, %v103
    %v109 = vpack.c.bf16 %v106, %v105
    %v110 = vpack.c.bf16 %v108, %v107
    %111 = vst.msk [vmem:[#allocation2] sm:$0xff] %vm33, %v109
    %112 = vst.msk [vmem:[#allocation2 + $0x8] sm:$0xff] %vm33, %v110
  $region25: #{vit_forward.13} parent=0 // pred_fallthru
    _
  %v113 = vld [vmem:[#allocation2] sm:$0xff]
  %v114 = vld [vmem:[#allocation2 + $0x8] sm:$0xff]
  %v115 = vld [vmem:[%s3] sm:$0xf]
  %v116 = vld [vmem:[%s3 + $0x4] sm:$0xf]
  %v117 = vld [vmem:[%s3 + $0x8] sm:$0xf]
  %v118 = vld [vmem:[%s3 + $0xc] sm:$0xf]
  %v119 = vld [vmem:[%s4] sm:$0x1]
  %v121 = vlaneseq
  %v122 = vshrl.u32 %v121, 7
  %v123 = vsub.s32 0, %v122
  %v124 = vrot.slane %v119, %v123
  %v130 = vunpack.c.l.b16 %v115
  %v131 = vunpack.c.l.b16 %v116
  %v132 = vunpack.c.l.b16 %v117
  %v133 = vunpack.c.l.b16 %v118
  %v134 = vpack.c.b16 %v131, %v130
  %v135 = vpack.c.b16 %v133, %v132
  %vm138 = vcmask 261120
  %v140 = vsel %vm138, %v113, 0
  %v143 = vsel %vm138, %v114, 0
  %145 = vmatprep.subr.bf16.mxu0 0
  %146 = vmatpush1.bf16.msra.mxu0 %v134
  %147 = vmatprep.subr.bf16.mxu0 0
  %148 = vmatpush1.bf16.msra.mxu0 %v135
  %149 = vmatprep.subr.bf16.mxu0 0
  %150 = vmatpush1.bf16.msra.mxu0 0
  %151 = vmatprep.subr.bf16.mxu0 0
  %152 = vmatpush1.bf16.msra.mxu0 0
  %153 = vmatprep.subr.bf16.mxu0 0
  %154 = vmatpush1.bf16.msra.mxu0 0
  %155 = vmatprep.subr.bf16.mxu0 0
  %156 = vmatpush1.bf16.msra.mxu0 0
  %157 = vmatprep.subr.bf16.mxu0 0
  %158 = vmatpush1.bf16.msra.mxu0 0
  %159 = vmatprep.subr.bf16.mxu0 0
  %160 = vmatpush1.bf16.msra.mxu0 0
  %161 = vmatprep.subr.bf16.mxu0 0
  %162 = vmatpush1.bf16.msra.mxu0 0
  %163 = vmatprep.subr.bf16.mxu0 0
  %164 = vmatpush1.bf16.msra.mxu0 0
  %165 = vmatprep.subr.bf16.mxu0 0
  %166 = vmatpush1.bf16.msra.mxu0 0
  %167 = vmatprep.subr.bf16.mxu0 0
  %168 = vmatpush1.bf16.msra.mxu0 0
  %169 = vmatprep.subr.bf16.mxu0 0
  %170 = vmatpush1.bf16.msra.mxu0 0
  %171 = vmatprep.subr.bf16.mxu0 0
  %172 = vmatpush1.bf16.msra.mxu0 0
  %173 = vmatprep.subr.bf16.mxu0 0
  %174 = vmatpush1.bf16.msra.mxu0 0
  %175 = vmatprep.subr.bf16.mxu0 0
  %176 = vmatpush1.bf16.msra.mxu0 0
  %177 = vmatprep.mubr.bf16.mxu0 0
  %178 = vmatmul.mubr.bf16.gmra.mrb[0].mxu0 %v140
  %v179 = vpop.f32.mrb[0].mxu0
  %v180 = vadd.f32 %v124, %v179
  %v181 = vpop.f32.mrb[0].mxu0
  %v182 = vpop.f32.mrb[0].mxu0
  %v183 = vadd.f32 %v124, %v182
  %v184 = vpop.f32.mrb[0].mxu0
  %185 = vmatprep.mubr.bf16.mxu0 0
  %186 = vmatmul.mubr.bf16.gmra.mrb[0].mxu0 %v143
  %v187 = vpop.f32.mrb[0].mxu0
  %v188 = vadd.f32 %v124, %v187
  %v189 = vpop.f32.mrb[0].mxu0
  %v190 = vpop.f32.mrb[0].mxu0
  %v191 = vadd.f32 %v124, %v190
  %v192 = vpop.f32.mrb[0].mxu0
  %193 = vdwg.mxu0
  %v194 = vmul.f32 %v180, %v180
  %v195 = vmul.f32 %v183, %v183
  %v196 = vmul.f32 %v188, %v188
  %v197 = vmul.f32 %v191, %v191
  %v198 = vmul.f32 %v180, %v194
  %v199 = vmul.f32 %v183, %v195
  %v200 = vmul.f32 %v188, %v196
  %v201 = vmul.f32 %v191, %v197
  %v202 = vmul.f32 %v198, 0.044715
  %v203 = vmul.f32 %v199, 0.044715
  %v204 = vmul.f32 %v200, 0.044715
  %v205 = vmul.f32 %v201, 0.044715
  %v206 = vadd.f32 %v180, %v202
  %v207 = vadd.f32 %v183, %v203
  %v208 = vadd.f32 %v188, %v204
  %v209 = vadd.f32 %v191, %v205
  %v210 = vmul.f32 %v206, 0.7978846
  %v211 = vmul.f32 %v207, 0.7978846
  %v212 = vmul.f32 %v208, 0.7978846
  %v213 = vmul.f32 %v209, 0.7978846
  %v214 = vtanh.pop %v210
  %v215 = vtanh.pop %v211
  %v216 = vtanh.pop %v212
  %v217 = vtanh.pop %v213
  %v218 = vadd.f32 %v214, 1.0
  %v219 = vadd.f32 %v215, 1.0
  %v220 = vadd.f32 %v216, 1.0
  %v221 = vadd.f32 %v217, 1.0
  %v222 = vmul.f32 %v218, 0.5
  %v223 = vmul.f32 %v219, 0.5
  %v224 = vmul.f32 %v220, 0.5
  %v225 = vmul.f32 %v221, 0.5
  %v226 = vmul.f32 %v180, %v222
  %v227 = vmul.f32 %v183, %v223
  %v228 = vmul.f32 %v188, %v224
  %v229 = vmul.f32 %v191, %v225
  %v230 = vpack.c.bf16 %v227, %v226
  %v231 = vpack.c.bf16 %v229, %v228
  %v234 = vunpack.c.l.b16 %v230
  %v235 = vunpack.c.h.b16 %v230
  %v236 = vunpack.c.l.b16 %v231
  %v237 = vunpack.c.h.b16 %v231
  %v238 = vpack.c.b16 %v234, %v234
  %v239 = vpack.c.b16 %v235, %v235
  %v240 = vpack.c.b16 %v236, %v236
  %v241 = vpack.c.b16 %v237, %v237
  %246 = vst [vmem:[%s5] sm:$0xf] %v238
  %247 = vst [vmem:[%s5 + $0x4] sm:$0xf] %v239
  %248 = vst [vmem:[%s5 + $0x8] sm:$0xf] %v240
  %249 = vst [vmem:[%s5 + $0xc] sm:$0xf] %v241
  // Predicated region
  $region26: #{vit_forward.13} parent=0 // pred_check
    _
  $region27: #{vit_forward.13} parent=0 // pred_check_branch
    %251 = sbr.rel (0) target = $region29
  $region28: #{vit_forward.13} parent=0 // pred_region
    _
  $region29: #{vit_forward.13} parent=0 // pred_fallthru
    _
  // Predicated region
  $region30: #{vit_forward.13} parent=0 // pred_check
    _
  $region31: #{vit_forward.13} parent=0 // pred_check_branch
    %253 = sbr.rel (0) target = $region33
  $region32: #{vit_forward.13} parent=0 // pred_region
    _
  $region33: #{vit_forward.13} parent=0 // pred_fallthru
    _

// kernel: vit_forward.14
$region0: #{vit_forward.14}
  #allocation0 [shape = 'u32[]', space=smem, size = 0x4, offset = 0x4, fixed_abs, tag = 'smem constant byte address 0x4 - core index']
  #allocation1 [shape = 'u32[144,128]{1,0:T(1,128)}', space=vmem, size = 0x12000, scoped, tag = 'internal scratch']
  #allocation2 [shape = 'f32[32,32]{1,0:T(8,128)}', space=vmem, size = 0x4000, scoped, tag = 'scratch operand']
  %s0 = inlined_call_operand.vmem [shape: bf16[32,128], index: 0, kind: input, shape index: {}]
  %s1 = inlined_call_operand.vmem [shape: bf16[128,32], index: 1, kind: input, shape index: {}]
  %s2 = inlined_call_operand.vmem [shape: f32[1,32], index: 2, kind: input, shape index: {}]
  %s3 = inlined_call_operand.vmem [shape: bf16[32,32], index: 3, kind: input, shape index: {}]
  %s4 = inlined_call_operand.vmem [shape: bf16[32,32], index: 4, kind: output, shape index: {}]
  %s5 = sld [smem:[#allocation0]]
  $region34: #{vit_forward.14} parent=0
    _
  %s7 = ssub.s32 1, %s5
  %s8 = scalar_select 0, %s7, %s5
  // Predicated region
  $region2: #{vit_forward.14} parent=0 // pred_check
    _
  $region3: #{vit_forward.14} parent=0 // pred_check_branch
    %10 = sbr.rel (0) target = $region5
  $region4: #{vit_forward.14} parent=0 // pred_region
    _
  $region5: #{vit_forward.14} parent=0 // pred_fallthru
    _
  // Predicated region
  $region6: #{vit_forward.14} parent=0 // pred_check
    _
  $region7: #{vit_forward.14} parent=0 // pred_check_branch
    %12 = sbr.rel (0) target = $region9
  $region8: #{vit_forward.14} parent=0 // pred_region
    _
  $region9: #{vit_forward.14} parent=0 // pred_fallthru
    _
  // Predicated region
  $region10: #{vit_forward.14} parent=0 // pred_check
    _
  $region11: #{vit_forward.14} parent=0 // pred_check_branch
    %14 = sbr.rel (0) target = $region13
  $region12: #{vit_forward.14} parent=0 // pred_region
    _
  $region13: #{vit_forward.14} parent=0 // pred_fallthru
    _
  // Predicated region
  $region14: #{vit_forward.14} parent=0 // pred_check
    _
  $region15: #{vit_forward.14} parent=0 // pred_check_branch
    %16 = sbr.rel (0) target = $region17
  $region16: #{vit_forward.14} parent=0 // pred_region
    _
  $region17: #{vit_forward.14} parent=0 // pred_fallthru
    _
  %p18 = scmp.eq.s32.totalorder 0, 0
  // Predicated region
  $region18: #{vit_forward.14} parent=0 // pred_check
    %p19 = pneg %p18
  $region19: #{vit_forward.14} parent=0 // pred_check_branch
    %21 = sbr.rel (%p19) target = $region21
  $region20: #{vit_forward.14} parent=0 // pred_region
    %vm22 = vcmask 261120
    %23 = vst.msk [vmem:[#allocation2] sm:$0xff] %vm22, 0.0
    %24 = vst.msk [vmem:[#allocation2 + $0x8] sm:$0xff] %vm22, 0.0
    %25 = vst.msk [vmem:[#allocation2 + $0x10] sm:$0xff] %vm22, 0.0
    %26 = vst.msk [vmem:[#allocation2 + $0x18] sm:$0xff] %vm22, 0.0
  $region21: #{vit_forward.14} parent=0 // pred_fallthru
    _
  %v27 = vld [vmem:[#allocation2] sm:$0xff]
  %v28 = vld [vmem:[#allocation2 + $0x8] sm:$0xff]
  %v29 = vld [vmem:[#allocation2 + $0x10] sm:$0xff]
  %v30 = vld [vmem:[#allocation2 + $0x18] sm:$0xff]
  %v31 = vld [vmem:[%s0] sm:$0xf]
  %v32 = vld [vmem:[%s0 + $0x4] sm:$0xf]
  %v33 = vld [vmem:[%s0 + $0x8] sm:$0xf]
  %v34 = vld [vmem:[%s0 + $0xc] sm:$0xf]
  %v35 = vld [vmem:[%s1] sm:$0xf]
  %v36 = vld [vmem:[%s1 + $0x4] sm:$0xf]
  %v37 = vld [vmem:[%s1 + $0x8] sm:$0xf]
  %v38 = vld [vmem:[%s1 + $0xc] sm:$0xf]
  %v39 = vld [vmem:[%s1 + $0x10] sm:$0xf]
  %v40 = vld [vmem:[%s1 + $0x14] sm:$0xf]
  %v41 = vld [vmem:[%s1 + $0x18] sm:$0xf]
  %v42 = vld [vmem:[%s1 + $0x1c] sm:$0xf]
  %v43 = vld [vmem:[%s1 + $0x20] sm:$0xf]
  %v44 = vld [vmem:[%s1 + $0x24] sm:$0xf]
  %v45 = vld [vmem:[%s1 + $0x28] sm:$0xf]
  %v46 = vld [vmem:[%s1 + $0x2c] sm:$0xf]
  %v47 = vld [vmem:[%s1 + $0x30] sm:$0xf]
  %v48 = vld [vmem:[%s1 + $0x34] sm:$0xf]
  %v49 = vld [vmem:[%s1 + $0x38] sm:$0xf]
  %v50 = vld [vmem:[%s1 + $0x3c] sm:$0xf]
  %v55 = vunpack.c.l.b16 %v31
  %v56 = vunpack.c.l.b16 %v32
  %v57 = vunpack.c.l.b16 %v33
  %v58 = vunpack.c.l.b16 %v34
  %v59 = vpack.c.b16 %v56, %v55
  %v60 = vpack.c.b16 %v58, %v57
  %v79 = vunpack.c.l.b16 %v35
  %v80 = vunpack.c.l.b16 %v36
  %v81 = vunpack.c.l.b16 %v37
  %v82 = vunpack.c.l.b16 %v38
  %v83 = vunpack.c.l.b16 %v39
  %v84 = vunpack.c.l.b16 %v40
  %v85 = vunpack.c.l.b16 %v41
  %v86 = vunpack.c.l.b16 %v42
  %v87 = vunpack.c.l.b16 %v43
  %v88 = vunpack.c.l.b16 %v44
  %v89 = vunpack.c.l.b16 %v45
  %v90 = vunpack.c.l.b16 %v46
  %v91 = vunpack.c.l.b16 %v47
  %v92 = vunpack.c.l.b16 %v48
  %v93 = vunpack.c.l.b16 %v49
  %v94 = vunpack.c.l.b16 %v50
  %v95 = vpack.c.b16 %v80, %v79
  %v96 = vpack.c.b16 %v82, %v81
  %v97 = vpack.c.b16 %v84, %v83
  %v98 = vpack.c.b16 %v86, %v85
  %v99 = vpack.c.b16 %v88, %v87
  %v100 = vpack.c.b16 %v90, %v89
  %v101 = vpack.c.b16 %v92, %v91
  %v102 = vpack.c.b16 %v94, %v93
  %111 = vmatprep.subr.bf16.mxu0 0
  %112 = vmatpush1.bf16.msra.mxu0 %v95
  %113 = vmatprep.subr.bf16.mxu0 0
  %114 = vmatpush1.bf16.msra.mxu0 %v96
  %115 = vmatprep.subr.bf16.mxu0 0
  %116 = vmatpush1.bf16.msra.mxu0 %v97
  %117 = vmatprep.subr.bf16.mxu0 0
  %118 = vmatpush1.bf16.msra.mxu0 %v98
  %119 = vmatprep.subr.bf16.mxu0 0
  %120 = vmatpush1.bf16.msra.mxu0 %v99
  %121 = vmatprep.subr.bf16.mxu0 0
  %122 = vmatpush1.bf16.msra.mxu0 %v100
  %123 = vmatprep.subr.bf16.mxu0 0
  %124 = vmatpush1.bf16.msra.mxu0 %v101
  %125 = vmatprep.subr.bf16.mxu0 0
  %126 = vmatpush1.bf16.msra.mxu0 %v102
  %127 = vmatprep.subr.bf16.mxu0 0
  %128 = vmatpush1.bf16.msra.mxu0 0
  %129 = vmatprep.subr.bf16.mxu0 0
  %130 = vmatpush1.bf16.msra.mxu0 0
  %131 = vmatprep.subr.bf16.mxu0 0
  %132 = vmatpush1.bf16.msra.mxu0 0
  %133 = vmatprep.subr.bf16.mxu0 0
  %134 = vmatpush1.bf16.msra.mxu0 0
  %135 = vmatprep.subr.bf16.mxu0 0
  %136 = vmatpush1.bf16.msra.mxu0 0
  %137 = vmatprep.subr.bf16.mxu0 0
  %138 = vmatpush1.bf16.msra.mxu0 0
  %139 = vmatprep.subr.bf16.mxu0 0
  %140 = vmatpush1.bf16.msra.mxu0 0
  %141 = vmatprep.subr.bf16.mxu0 0
  %142 = vmatpush1.bf16.msra.mxu0 0
  %143 = vmatprep.mubr.bf16.mxu0 0
  %144 = vmatmul.mubr.bf16.gmra.mrb[0].mxu0 %v59
  %v145 = vpop.f32.mrb[0].mxu0
  %v146 = vadd.f32 0.0, %v145
  %v147 = vpop.f32.mrb[0].mxu0
  %v148 = vpop.f32.mrb[0].mxu0
  %v149 = vadd.f32 0.0, %v148
  %v150 = vpop.f32.mrb[0].mxu0
  %151 = vmatprep.mubr.bf16.mxu0 0
  %152 = vmatmul.mubr.bf16.gmra.mrb[0].mxu0 %v60
  %v153 = vpop.f32.mrb[0].mxu0
  %v154 = vadd.f32 0.0, %v153
  %v155 = vpop.f32.mrb[0].mxu0
  %v156 = vpop.f32.mrb[0].mxu0
  %v157 = vadd.f32 0.0, %v156
  %v158 = vpop.f32.mrb[0].mxu0
  %159 = vdwg.mxu0
  %v160 = vadd.f32 %v27, %v146
  %v161 = vadd.f32 %v28, %v149
  %v162 = vadd.f32 %v29, %v154
  %v163 = vadd.f32 %v30, %v157
  %vm164 = vcmask 261120
  %165 = vst.msk [vmem:[#allocation2] sm:$0xff] %vm164, %v160
  %166 = vst.msk [vmem:[#allocation2 + $0x8] sm:$0xff] %vm164, %v161
  %167 = vst.msk [vmem:[#allocation2 + $0x10] sm:$0xff] %vm164, %v162
  %168 = vst.msk [vmem:[#allocation2 + $0x18] sm:$0xff] %vm164, %v163
  // Predicated region
  $region22: #{vit_forward.14} parent=0 // pred_check
    %p169 = pneg %p18
  $region23: #{vit_forward.14} parent=0 // pred_check_branch
    %171 = sbr.rel (%p169) target = $region25
  $region24: #{vit_forward.14} parent=0 // pred_region
    %v172 = vld [vmem:[#allocation2] sm:$0xff]
    %v173 = vld [vmem:[#allocation2 + $0x8] sm:$0xff]
    %v174 = vld [vmem:[#allocation2 + $0x10] sm:$0xff]
    %v175 = vld [vmem:[#allocation2 + $0x18] sm:$0xff]
    %v176 = vld [vmem:[%s2] sm:$0x1]
    %v178 = vlaneseq
    %v179 = vshrl.u32 %v178, 7
    %v180 = vsub.s32 0, %v179
    %v181 = vrot.slane %v176, %v180
    %v183 = vadd.f32 %v172, %v181
    %v184 = vadd.f32 %v173, %v181
    %v185 = vadd.f32 %v174, %v181
    %v186 = vadd.f32 %v175, %v181
    %v187 = vld [vmem:[%s3] sm:$0xf]
    %v188 = vld [vmem:[%s3 + $0x4] sm:$0xf]
    %v189 = vld [vmem:[%s3 + $0x8] sm:$0xf]
    %v190 = vld [vmem:[%s3 + $0xc] sm:$0xf]
    %v191 = vunpack.c.l.bf16 %v187
    %v192 = vunpack.c.l.bf16 %v188
    %v193 = vunpack.c.l.bf16 %v189
    %v194 = vunpack.c.l.bf16 %v190
    %v195 = vadd.f32 %v183, %v191
    %v196 = vadd.f32 %v184, %v192
    %v197 = vadd.f32 %v185, %v193
    %v198 = vadd.f32 %v186, %v194
    %v199 = vpack.c.bf16 %v196, %v195
    %v200 = vpack.c.bf16 %v198, %v197
    %v203 = vunpack.c.l.b16 %v199
    %v204 = vunpack.c.h.b16 %v199
    %v205 = vunpack.c.l.b16 %v200
    %v206 = vunpack.c.h.b16 %v200
    %v207 = vpack.c.b16 %v203, %v203
    %v208 = vpack.c.b16 %v204, %v204
    %v209 = vpack.c.b16 %v205, %v205
    %v210 = vpack.c.b16 %v206, %v206
    %vm215 = vcmask 257024
    %216 = vst.msk [vmem:[%s4] sm:$0xf] %vm215, %v207
    %217 = vst.msk [vmem:[%s4 + $0x4] sm:$0xf] %vm215, %v208
    %218 = vst.msk [vmem:[%s4 + $0x8] sm:$0xf] %vm215, %v209
    %219 = vst.msk [vmem:[%s4 + $0xc] sm:$0xf] %vm215, %v210
  $region25: #{vit_forward.14} parent=0 // pred_fallthru
    _
  // Predicated region
  $region26: #{vit_forward.14} parent=0 // pred_check
    _
  $region27: #{vit_forward.14} parent=0 // pred_check_branch
    %221 = sbr.rel (0) target = $region29
  $region28: #{vit_forward.14} parent=0 // pred_region
    _
  $region29: #{vit_forward.14} parent=0 // pred_fallthru
    _
  // Predicated region
  $region30: #{vit_forward.14} parent=0 // pred_check
    _
  $region31: #{vit_forward.14} parent=0 // pred_check_branch
    %223 = sbr.rel (0) target = $region33
  $region32: #{vit_forward.14} parent=0 // pred_region
    _
  $region33: #{vit_forward.14} parent=0 // pred_fallthru
    _

// kernel: vit_forward.19
$region0: #{vit_forward.19}
  #allocation0 [shape = 'u32[]', space=smem, size = 0x4, offset = 0x4, fixed_abs, tag = 'smem constant byte address 0x4 - core index']
  #allocation1 [shape = 'u32[144,128]{1,0:T(1,128)}', space=vmem, size = 0x12000, scoped, tag = 'internal scratch']
  %s0 = inlined_call_operand.vmem [shape: bf16[32,32], index: 0, kind: input, shape index: {}]
  %s1 = inlined_call_operand.vmem [shape: f32[1,32], index: 1, kind: input, shape index: {}]
  %s2 = inlined_call_operand.vmem [shape: f32[1,32], index: 2, kind: input, shape index: {}]
  %s3 = inlined_call_operand.vmem [shape: bf16[32,32], index: 3, kind: output, shape index: {}]
  %s4 = sld [smem:[#allocation0]]
  $region22: #{vit_forward.19} parent=0
    _
  %s6 = ssub.s32 1, %s4
  %s7 = scalar_select 0, %s6, %s4
  // Predicated region
  $region2: #{vit_forward.19} parent=0 // pred_check
    _
  $region3: #{vit_forward.19} parent=0 // pred_check_branch
    %9 = sbr.rel (0) target = $region5
  $region4: #{vit_forward.19} parent=0 // pred_region
    _
  $region5: #{vit_forward.19} parent=0 // pred_fallthru
    _
  // Predicated region
  $region6: #{vit_forward.19} parent=0 // pred_check
    _
  $region7: #{vit_forward.19} parent=0 // pred_check_branch
    %11 = sbr.rel (0) target = $region9
  $region8: #{vit_forward.19} parent=0 // pred_region
    _
  $region9: #{vit_forward.19} parent=0 // pred_fallthru
    _
  // Predicated region
  $region10: #{vit_forward.19} parent=0 // pred_check
    _
  $region11: #{vit_forward.19} parent=0 // pred_check_branch
    %13 = sbr.rel (0) target = $region13
  $region12: #{vit_forward.19} parent=0 // pred_region
    _
  $region13: #{vit_forward.19} parent=0 // pred_fallthru
    _
  %v14 = vld [vmem:[%s0] sm:$0xf]
  %v15 = vld [vmem:[%s0 + $0x4] sm:$0xf]
  %v16 = vld [vmem:[%s0 + $0x8] sm:$0xf]
  %v17 = vld [vmem:[%s0 + $0xc] sm:$0xf]
  %v18 = vunpack.c.l.bf16 %v14
  %v19 = vunpack.c.l.bf16 %v15
  %v20 = vunpack.c.l.bf16 %v16
  %v21 = vunpack.c.l.bf16 %v17
  %vm22 = vcmask 261120
  %v23 = vsel %vm22, %v18, 0.0
  %24 = vadd.xlane.f32.xlu0 %v23
  %v25 = vpop.xlane.xlu0 %24
  %v26 = vsel %vm22, %v19, 0.0
  %27 = vadd.xlane.f32.xlu0 %v26
  %v28 = vpop.xlane.xlu0 %27
  %v29 = vsel %vm22, %v20, 0.0
  %30 = vadd.xlane.f32.xlu0 %v29
  %v31 = vpop.xlane.xlu0 %30
  %v32 = vsel %vm22, %v21, 0.0
  %33 = vadd.xlane.f32.xlu0 %v32
  %v34 = vpop.xlane.xlu0 %33
  %v35 = vrcp.pop 32.0
  %v36 = vmul.f32 %v25, %v35
  %v37 = vmul.f32 %v28, %v35
  %v38 = vmul.f32 %v31, %v35
  %v39 = vmul.f32 %v34, %v35
  %v40 = vsub.f32 %v18, %v36
  %v41 = vsub.f32 %v19, %v37
  %v42 = vsub.f32 %v20, %v38
  %v43 = vsub.f32 %v21, %v39
  %v44 = vmul.f32 %v40, %v40
  %v45 = vmul.f32 %v41, %v41
  %v46 = vmul.f32 %v42, %v42
  %v47 = vmul.f32 %v43, %v43
  %v48 = vsel %vm22, %v44, 0.0
  %49 = vadd.xlane.f32.xlu0 %v48
  %v50 = vpop.xlane.xlu0 %49
  %v51 = vsel %vm22, %v45, 0.0
  %52 = vadd.xlane.f32.xlu0 %v51
  %v53 = vpop.xlane.xlu0 %52
  %v54 = vsel %vm22, %v46, 0.0
  %55 = vadd.xlane.f32.xlu0 %v54
  %v56 = vpop.xlane.xlu0 %55
  %v57 = vsel %vm22, %v47, 0.0
  %58 = vadd.xlane.f32.xlu0 %v57
  %v59 = vpop.xlane.xlu0 %58
  %v60 = vmul.f32 %v50, %v35
  %v61 = vmul.f32 %v53, %v35
  %v62 = vmul.f32 %v56, %v35
  %v63 = vmul.f32 %v59, %v35
  %v64 = vadd.f32 %v60, 1e-06
  %v65 = vadd.f32 %v61, 1e-06
  %v66 = vadd.f32 %v62, 1e-06
  %v67 = vadd.f32 %v63, 1e-06
  %v68 = vrsqrt.pop %v64
  %v69 = vrsqrt.pop %v65
  %v70 = vrsqrt.pop %v66
  %v71 = vrsqrt.pop %v67
  %v72 = vmul.f32 %v40, %v68
  %v73 = vmul.f32 %v41, %v69
  %v74 = vmul.f32 %v42, %v70
  %v75 = vmul.f32 %v43, %v71
  %v76 = vld [vmem:[%s1] sm:$0x1]
  %v78 = vlaneseq
  %v79 = vshrl.u32 %v78, 7
  %v80 = vsub.s32 0, %v79
  %v81 = vrot.slane %v76, %v80
  %v83 = vmul.f32 %v72, %v81
  %v84 = vmul.f32 %v73, %v81
  %v85 = vmul.f32 %v74, %v81
  %v86 = vmul.f32 %v75, %v81
  %v87 = vld [vmem:[%s2] sm:$0x1]
  %v89 = vlaneseq
  %v90 = vshrl.u32 %v89, 7
  %v91 = vsub.s32 0, %v90
  %v92 = vrot.slane %v87, %v91
  %v94 = vadd.f32 %v83, %v92
  %v95 = vadd.f32 %v84, %v92
  %v96 = vadd.f32 %v85, %v92
  %v97 = vadd.f32 %v86, %v92
  %v98 = vpack.c.bf16 %v95, %v94
  %v99 = vpack.c.bf16 %v97, %v96
  %v102 = vunpack.c.l.b16 %v98
  %v103 = vunpack.c.h.b16 %v98
  %v104 = vunpack.c.l.b16 %v99
  %v105 = vunpack.c.h.b16 %v99
  %v106 = vpack.c.b16 %v102, %v102
  %v107 = vpack.c.b16 %v103, %v103
  %v108 = vpack.c.b16 %v104, %v104
  %v109 = vpack.c.b16 %v105, %v105
  %vm114 = vcmask 257024
  %115 = vst.msk [vmem:[%s3] sm:$0xf] %vm114, %v106
  %116 = vst.msk [vmem:[%s3 + $0x4] sm:$0xf] %vm114, %v107
  %117 = vst.msk [vmem:[%s3 + $0x8] sm:$0xf] %vm114, %v108
  %118 = vst.msk [vmem:[%s3 + $0xc] sm:$0xf] %vm114, %v109
  // Predicated region
  $region14: #{vit_forward.19} parent=0 // pred_check
    _
  $region15: #{vit_forward.19} parent=0 // pred_check_branch
    %120 = sbr.rel (0) target = $region17
  $region16: #{vit_forward.19} parent=0 // pred_region
    _
  $region17: #{vit_forward.19} parent=0 // pred_fallthru
    _
  // Predicated region
  $region18: #{vit_forward.19} parent=0 // pred_check
    _
  $region19: #{vit_forward.19} parent=0 // pred_check_branch
    %122 = sbr.rel (0) target = $region21
  $region20: #{vit_forward.19} parent=0 // pred_region
    _
  $region21: #{vit_forward.19} parent=0 // pred_fallthru
    _

</llo_original>
